<compile_context>
chip_gen: v7x
topology: tpu7x:2x2x1
jax: 0.10.0
libtpu: 0.0.40
codegen_flags: <defaults>
</compile_context>

<pallas_src>
import numpy as np
import jax
import jax.numpy as jnp
from jax import lax
from jax.experimental import pallas as pl
from jax.experimental.pallas import tpu as pltpu

SIG_LEN    = 440                  # signal length implied by the hardcoded slice 1:440//2+1
N_FREQ     = SIG_LEN // 2         # 220 amplitude bins (indices 1..220)
N_FREQ_PAD = 256                  # 220 -> 256, lane aligned
D_LSTM     = 64                   # d_lstm_size
H_PAD      = 128                  # hidden padded so each LSTM gate owns a full 128-lane block
D_OUT      = 256                  # output_size
N_CLS      = 40
N_CLS_PAD  = 128                  # classifier lanes padded 40 -> 128 (sliced back on host)
MXU_BF16   = True                 # bf16 operands / f32 accumulate for the MXU matmuls


# --------------------------------------------------------------------------------------------
# Kernel
# --------------------------------------------------------------------------------------------
def _conv_freq_encoder_kernel(x_ref, dft_ref, wih_ref, whh_ref, b_ref,
                              wout_ref, bout_ref, wcls_ref, bcls_ref,
                              cls_ref, xa_ref, gih_ref):
    """One batch tile.

    x_ref   : (Bt*T, SIG_LEN)   raw signals, batch-major rows (row = b*T + t), MXU dtype
    dft_ref : (SIG_LEN, 2*NFp)  fused [cos | -sin] DFT basis, zero-padded to 2*256 lanes
    wih_ref : (NFp, 4*Hp)       input->gates  (gate g occupies lanes [g*128, g*128+64))
    whh_ref : (Hp, 4*Hp)        hidden->gates (padded rows/lanes are zero), MXU dtype
    gih_ref : (T, Bt, 4*Hp)     VMEM scratch: time-major input-side gate pre-activations
    """
    Bt  = cls_ref.shape[0]
    T   = gih_ref.shape[0]
    NFp = wih_ref.shape[0]
    Hp  = whh_ref.shape[0]
    G   = whh_ref.shape[1]

    # ---- Phase 1 (off the serial path): DFT + input projection for ALL timesteps at once.
    x_flat = x_ref[...]                                                          # (Bt*T, 440)
    spec = jnp.dot(x_flat, dft_ref[...], preferred_element_type=jnp.float32)     # (Bt*T, 512)
    re, im = spec[:, :NFp], spec[:, NFp:]                                        # 128-aligned split
    amp = jnp.sqrt(re * re + im * im)                                            # |FFT| bins (+0 pad)

    # Single layout-aware regroup: batch-major rows (b, t) -> time-major (t, b), done on the
    # narrower 256-lane amp tensor so the following matmul writes gih_ref time-major directly.
    amp_tm = jnp.swapaxes(amp.reshape(Bt, T, NFp), 0, 1).reshape(T * Bt, NFp)
    gih = jnp.dot(amp_tm.astype(wih_ref.dtype), wih_ref[...],
                  preferred_element_type=jnp.float32) + b_ref[...]               # bias added ONCE
    gih_ref[...] = gih.reshape(T, Bt, G)

    # ---- Phase 2: tiny serial recurrence — only h @ w_hh (bf16 MXU) + one tanh pass per step.
    whh = whh_ref[...]

    # sigmoid(x) = 0.5 + 0.5*tanh(0.5*x); tanh gate (block 2) keeps (scale, offset) = (1, 0).
    lane = lax.broadcasted_iota(jnp.int32, (1, G), 1)
    is_g = (lane >= 2 * Hp) & (lane < 3 * Hp)
    g_s = jnp.where(is_g, 1.0, 0.5).astype(jnp.float32)     # hoisted out of the loop
    g_b = jnp.where(is_g, 0.0, 0.5).astype(jnp.float32)

    def step(t, carry):
        h, c = carry
        gates = gih_ref[t] + jnp.dot(h.astype(whh.dtype), whh,
                                     preferred_element_type=jnp.float32)         # (Bt, 512)
        act = g_s * jnp.tanh(gates * g_s) + g_b             # one EUP tanh pass over all gates
        i_g = act[:, 0 * Hp:1 * Hp]                          # all slices 128-lane aligned
        f_g = act[:, 1 * Hp:2 * Hp]
        g_g = act[:, 2 * Hp:3 * Hp]
        o_g = act[:, 3 * Hp:4 * Hp]
        c_new = f_g * c + i_g * g_g
        h_new = o_g * jnp.tanh(c_new)
        return (h_new, c_new)

    h0 = jnp.zeros((Bt, Hp), jnp.float32)
    c0 = jnp.zeros((Bt, Hp), jnp.float32)
    h_last, _ = lax.fori_loop(0, T, step, (h0, c0),
                              unroll=True if T <= 16 else 4)

    # ---- Head: xa = relu(Linear(64->256)); cls = Linear(256->40, padded to 128 lanes).
    xa = jnp.maximum(
        jnp.dot(h_last, wout_ref[...], preferred_element_type=jnp.float32) + bout_ref[...],
        0.0)
    cls = jnp.dot(xa, wcls_ref[...], preferred_element_type=jnp.float32) + bcls_ref[...]
    xa_ref[...] = xa
    cls_ref[...] = cls


# --------------------------------------------------------------------------------------------
# Generation-aware sizing
# --------------------------------------------------------------------------------------------
def _round_up(a, m):
    return ((a + m - 1) // m) * m


def _tpu_topology():
    """(physical VMEM bytes per TensorCore, TensorCores per chip) for the local backend."""
    kind = ""
    try:
        kind = (jax.devices()[0].device_kind or "").lower()
    except Exception:
        pass
    if "v7" in kind or "7x" in kind:
        return 64 << 20, 2            # v7x: 64 MiB per TC, 2 TCs per chip
    if "v4" in kind or "v5p" in kind or "v5 p" in kind:
        return 128 << 20, 2           # v4 / v5p megacore
    if "v2" in kind or "v3" in kind:
        return 16 << 20, 1
    if kind:
        return 128 << 20, 1           # v5e / v6e: single TC, 128 MiB
    return 64 << 20, 1                # unknown backend: be conservative


def _weight_bytes(x_bytes):
    big = (SIG_LEN * 2 * N_FREQ_PAD + N_FREQ_PAD * 4 * H_PAD + H_PAD * 4 * H_PAD) * x_bytes
    small = (4 * H_PAD + H_PAD * D_OUT + D_OUT + D_OUT * N_CLS_PAD + N_CLS_PAD) * 4
    return big + small


def _per_row_bytes(x_bytes):
    """VMEM bytes per (batch, time) row inside one grid step."""
    x_tile  = 2 * SIG_LEN * x_bytes                                  # double-buffered input
    gih_scr = 4 * H_PAD * 4                                          # time-major scratch
    temps   = (2 * N_FREQ_PAD + 2 * N_FREQ_PAD + 4 * H_PAD) * 4      # spec + amp/amp_tm + gih
    return x_tile + gih_scr + temps


def _pick_b_tile(B, T, n_cores, vmem_bytes, x_bytes):
    """Largest sublane-aligned batch tile that fits the VMEM budget; on multi-TensorCore chips
    split the batch so the grid has >= n_cores steps (engages the second v7x core)."""
    budget = int(0.55 * vmem_bytes) - _weight_bytes(x_bytes)
    max_bt = max(8, (budget // max(_per_row_bytes(x_bytes) * T, 1)) // 8 * 8)
    b_ceil = _round_up(max(B, 1), 8)
    if n_cores > 1 and B >= 16:
        want = _round_up(-(-b_ceil // n_cores), 8)
    else:
        want = b_ceil                 # single TC: keep the grid minimal (fewest serial replays)
    b_tile = max(8, min(want, max_bt))
    b_pad = _round_up(b_ceil, b_tile)
    return b_tile, b_pad


def _vmem_limit_bytes(b_tile, T, x_bytes, vmem_phys):
    rows = b_tile * T
    est = (rows * _per_row_bytes(x_bytes)
           + _weight_bytes(x_bytes)
           + 2 * 2 * b_tile * (N_CLS_PAD + D_OUT) * 4)               # double-buffered outputs
    cap = int(0.85 * vmem_phys)
    return int(min(max(int(1.25 * est), 16 << 20), cap))


# --------------------------------------------------------------------------------------------
# Host wrapper
# --------------------------------------------------------------------------------------------
def conv_freq_encoder(x, params):
    """x: (B, T, SIG_LEN) float. Returns (cls (B, 40) f32, xa (B, 256) f32)."""
    B, T, N = x.shape
    assert N == SIG_LEN
    vmem_phys, n_cores = _tpu_topology()
    x_dtype = params["dft"].dtype
    x_bytes = jnp.dtype(x_dtype).itemsize
    b_tile, b_pad = _pick_b_tile(B, T, n_cores, vmem_phys, x_bytes)

    # Host-side cast to the MXU dtype (halves the dominant x DMA) + sublane-granule batch pad.
    x = x.astype(x_dtype)
    if b_pad != B:
        x = jnp.pad(x, ((0, b_pad - B), (0, 0), (0, 0)))
    x2 = x.reshape(b_pad * T, N)          # free reshape: rows stay batch-major (b*T + t)

    grid = (b_pad // b_tile,)
    n_bt = b_tile * T

    def const_spec(a):                     # weights: constant block index -> single-buffered
        idx = lambda i: (0,) * a.ndim
        try:
            return pl.BlockSpec(a.shape, idx, pipeline_mode=pl.Buffered(1))
        except TypeError:                  # older BlockSpec signature without pipeline_mode
            return pl.BlockSpec(a.shape, idx)

    weight_names = ("dft", "w_ih", "w_hh", "b", "w_out", "b_out", "w_cls", "b_cls")
    in_specs = [pl.BlockSpec((n_bt, N), lambda i: (i, 0))] + \
               [const_spec(params[k]) for k in weight_names]

    cls_p, xa_p = pl.pallas_call(
        _conv_freq_encoder_kernel,
        out_shape=(jax.ShapeDtypeStruct((b_pad, N_CLS_PAD), jnp.float32),
                   jax.ShapeDtypeStruct((b_pad, D_OUT), jnp.float32)),
        grid_spec=pltpu.PrefetchScalarGridSpec(
            num_scalar_prefetch=0,
            grid=grid,
            in_specs=in_specs,
            out_specs=(pl.BlockSpec((b_tile, N_CLS_PAD), lambda i: (i, 0)),
                       pl.BlockSpec((b_tile, D_OUT), lambda i: (i, 0))),
            scratch_shapes=[pltpu.VMEM((T, b_tile, 4 * H_PAD), jnp.float32)]),
        compiler_params=pltpu.CompilerParams(
            dimension_semantics=("parallel",),               # batch tiles across v7x TCs
            vmem_limit_bytes=_vmem_limit_bytes(b_tile, T, x_bytes, vmem_phys)),
    )(x2, *(params[k] for k in weight_names))

    return cls_p[:B, :N_CLS], xa_p[:B]


# --------------------------------------------------------------------------------------------
# Parameters
# --------------------------------------------------------------------------------------------
def make_params(key):
    """Deterministic synthetic parameters (module __init__ shapes; encoder = 1-layer LSTM)."""
    ks = jax.random.split(key, 8)
    H, Hp, IN, INp, OUT, C, Cp = D_LSTM, H_PAD, N_FREQ, N_FREQ_PAD, D_OUT, N_CLS, N_CLS_PAD
    mxu_dtype = jnp.bfloat16 if MXU_BF16 else jnp.float32

    def unif(k, shape, fan_in):
        lim = 1.0 / np.sqrt(fan_in)
        return np.asarray(jax.random.uniform(k, shape, jnp.float32, -lim, lim))

    # Fused, lane-padded DFT basis: columns [cos(220) | 0(36) | -sin(220) | 0(36)]  (440, 512).
    n = np.arange(SIG_LEN)[:, None].astype(np.float64)
    kk = np.arange(1, N_FREQ + 1)[None, :].astype(np.float64)
    ang = 2.0 * np.pi * n * kk / SIG_LEN
    dft = np.zeros((SIG_LEN, 2 * INp), np.float32)
    dft[:, :N_FREQ] = np.cos(ang)
    dft[:, INp:INp + N_FREQ] = -np.sin(ang)

    # LSTM weights, PyTorch gate order (i, f, g, o), stored transposed and padded so that
    # gate g occupies lanes [g*128, g*128+64); all padded rows/lanes are zero (no leakage).
    w_ih = unif(ks[0], (IN, 4 * H), H)
    w_hh = unif(ks[1], (H, 4 * H), H)
    b    = unif(ks[2], (1, 4 * H), H) + unif(ks[3], (1, 4 * H), H)   # b_ih + b_hh

    def pad_gates(w, rows_pad):
        rows = w.shape[0]
        out = np.zeros((rows_pad, 4 * Hp), np.float32)
        for g in range(4):
            out[:rows, g * Hp:g * Hp + H] = w[:, g * H:(g + 1) * H]
        return out

    w_out = np.zeros((Hp, OUT), np.float32)
    w_out[:H] = unif(ks[4], (H, OUT), H)                 # self.output = nn.Linear(64, 256)
    w_cls = np.zeros((OUT, Cp), np.float32)
    w_cls[:, :C] = unif(ks[6], (OUT, C), OUT)            # self.classifier = nn.Linear(256, 40)
    b_cls = np.zeros((1, Cp), np.float32)
    b_cls[:, :C] = unif(ks[7], (1, C), OUT)

    params = {
        "dft":   jnp.asarray(dft, mxu_dtype),
        "w_ih":  jnp.asarray(pad_gates(w_ih, INp), mxu_dtype),   # (256, 512)
        "w_hh":  jnp.asarray(pad_gates(w_hh, Hp), mxu_dtype),    # (128, 512) bf16 (serial path)
        "b":     jnp.asarray(pad_gates(b, 1), jnp.float32),      # (1, 512)
        "w_out": jnp.asarray(w_out, jnp.float32),
        "b_out": jnp.asarray(unif(ks[5], (1, OUT), H), jnp.float32),
        "w_cls": jnp.asarray(w_cls, jnp.float32),
        "b_cls": jnp.asarray(b_cls, jnp.float32),
    }
    return params
    # TODO(synk): e_lstm_model / d_lstm_model are externally supplied in the original module;
    # here the encoder is a deterministic single-layer LSTM and the decoder branch is omitted.


if __name__ == "__main__":
    key = jax.random.PRNGKey(0)
    k_x, k_p = jax.random.split(key)

    B, T = 2, 8
    x = jax.random.normal(k_x, (B, T, SIG_LEN), jnp.float32)
    params = make_params(k_p)

    cls, xa = conv_freq_encoder(x, params)
    cls, xa = jax.block_until_ready(cls), jax.block_until_ready(xa)

    assert cls.shape == (B, N_CLS) and xa.shape == (B, D_OUT)
    assert bool(jnp.all(jnp.isfinite(cls))) and bool(jnp.all(jnp.isfinite(xa)))
    assert bool(jnp.all(xa >= 0.0))  # ReLU output
    print("KERNEL_OK")
</pallas_src>

<mosaic_0001>
module attributes {stable_mosaic.version = 11 : i64} {
  func.func @_conv_freq_encoder_kernel(%arg0: i32, %arg1: memref<64x440xbf16, #tpu.memory_space<vmem>>, %arg2: memref<440x512xbf16, #tpu.memory_space<vmem>>, %arg3: memref<256x512xbf16, #tpu.memory_space<vmem>>, %arg4: memref<128x512xbf16, #tpu.memory_space<vmem>>, %arg5: memref<1x512xf32, #tpu.memory_space<vmem>>, %arg6: memref<128x256xf32, #tpu.memory_space<vmem>>, %arg7: memref<1x256xf32, #tpu.memory_space<vmem>>, %arg8: memref<256x128xf32, #tpu.memory_space<vmem>>, %arg9: memref<1x128xf32, #tpu.memory_space<vmem>>, %arg10: memref<8x128xf32, #tpu.memory_space<vmem>>, %arg11: memref<8x256xf32, #tpu.memory_space<vmem>>, %arg12: memref<8x8x512xf32, #tpu.memory_space<vmem>>) attributes {dimension_semantics = [#tpu.dimension_semantics<parallel>], iteration_bounds = array<i64: 1>, scalar_prefetch = 0 : i64, scratch_operands = 1 : i64, tpu.core_type = #tpu.core_type<tc>, window_params = [{transform_indices = @transform_0, window_bounds = array<i64: 64, 440>}, {pipeline_mode = #tpu.pipeline_mode<synchronous>, transform_indices = @transform_1, window_bounds = array<i64: 440, 512>}, {pipeline_mode = #tpu.pipeline_mode<synchronous>, transform_indices = @transform_2, window_bounds = array<i64: 256, 512>}, {pipeline_mode = #tpu.pipeline_mode<synchronous>, transform_indices = @transform_3, window_bounds = array<i64: 128, 512>}, {pipeline_mode = #tpu.pipeline_mode<synchronous>, transform_indices = @transform_4, window_bounds = array<i64: 1, 512>}, {pipeline_mode = #tpu.pipeline_mode<synchronous>, transform_indices = @transform_5, window_bounds = array<i64: 128, 256>}, {pipeline_mode = #tpu.pipeline_mode<synchronous>, transform_indices = @transform_6, window_bounds = array<i64: 1, 256>}, {pipeline_mode = #tpu.pipeline_mode<synchronous>, transform_indices = @transform_7, window_bounds = array<i64: 256, 128>}, {pipeline_mode = #tpu.pipeline_mode<synchronous>, transform_indices = @transform_8, window_bounds = array<i64: 1, 128>}, {transform_indices = @transform_9, window_bounds = array<i64: 8, 128>}, {transform_indices = @transform_10, window_bounds = array<i64: 8, 256>}]} {
    %c0 = arith.constant 0 : index
    %c0_0 = arith.constant 0 : index
    %0 = vector.load %arg1[%c0, %c0_0] : memref<64x440xbf16, #tpu.memory_space<vmem>>, vector<64x440xbf16>
    %c0_1 = arith.constant 0 : index
    %c0_2 = arith.constant 0 : index
    %1 = vector.load %arg2[%c0_1, %c0_2] : memref<440x512xbf16, #tpu.memory_space<vmem>>, vector<440x512xbf16>
    %cst = arith.constant dense<0.000000e+00> : vector<64x512xf32>
    %2 = tpu.matmul %0, %1, %cst {dimension_numbers = #tpu.dot_dimension_numbers<[1], [0], [0], [1], [0, 0, 1, 1], [], []>} : vector<64x440xbf16>, vector<440x512xbf16>, vector<64x512xf32> -> vector<64x512xf32>
    %3 = vector.extract_strided_slice %2 {offsets = [0, 0], sizes = [64, 256], strides = [1, 1]} : vector<64x512xf32> to vector<64x256xf32>
    %4 = vector.extract_strided_slice %2 {offsets = [0, 256], sizes = [64, 256], strides = [1, 1]} : vector<64x512xf32> to vector<64x256xf32>
    %5 = arith.mulf %3, %3 : vector<64x256xf32>
    %6 = arith.mulf %4, %4 : vector<64x256xf32>
    %7 = arith.addf %5, %6 : vector<64x256xf32>
    %8 = math.sqrt %7 : vector<64x256xf32>
    %9 = vector.shape_cast %8 : vector<64x256xf32> to vector<8x8x256xf32>
    %10 = tpu.transpose %9, [1, 0, 2] : vector<8x8x256xf32> -> vector<8x8x256xf32>
    %11 = vector.shape_cast %10 : vector<8x8x256xf32> to vector<64x256xf32>
    %12 = arith.truncf %11 : vector<64x256xf32> to vector<64x256xbf16>
    %c0_3 = arith.constant 0 : index
    %c0_4 = arith.constant 0 : index
    %13 = vector.load %arg3[%c0_3, %c0_4] : memref<256x512xbf16, #tpu.memory_space<vmem>>, vector<256x512xbf16>
    %cst_5 = arith.constant dense<0.000000e+00> : vector<64x512xf32>
    %14 = tpu.matmul %12, %13, %cst_5 {dimension_numbers = #tpu.dot_dimension_numbers<[1], [0], [0], [1], [0, 0, 1, 1], [], []>} : vector<64x256xbf16>, vector<256x512xbf16>, vector<64x512xf32> -> vector<64x512xf32>
    %c0_6 = arith.constant 0 : index
    %c0_7 = arith.constant 0 : index
    %15 = vector.load %arg5[%c0_6, %c0_7] : memref<1x512xf32, #tpu.memory_space<vmem>>, vector<1x512xf32>
    %16 = vector.broadcast %15 : vector<1x512xf32> to vector<64x512xf32>
    %17 = arith.addf %14, %16 : vector<64x512xf32>
    %18 = vector.shape_cast %17 : vector<64x512xf32> to vector<8x8x512xf32>
    %c0_8 = arith.constant 0 : index
    %c0_9 = arith.constant 0 : index
    %c0_10 = arith.constant 0 : index
    %19 = vector.load %arg12[%c0_8, %c0_9, %c0_10] : memref<8x8x512xf32, #tpu.memory_space<vmem>>, vector<8x8x512xf32>
    tpu.vector_store %arg12[%c0_8, %c0_9, %c0_10], %18 {strides = array<i32>} : memref<8x8x512xf32, #tpu.memory_space<vmem>>, vector<8x8x512xf32>,
    %c0_11 = arith.constant 0 : index
    %c0_12 = arith.constant 0 : index
    %20 = vector.load %arg4[%c0_11, %c0_12] : memref<128x512xbf16, #tpu.memory_space<vmem>>, vector<128x512xbf16>
    %21 = tpu.iota {dimensions = array<i32: 1>} : vector<1x512xi32>
    %c256_i32 = arith.constant 256 : i32
    %22 = vector.broadcast %c256_i32 : i32 to vector<1x512xi32>
    %23 = arith.cmpi sge, %21, %22 : vector<1x512xi32>
    %c384_i32 = arith.constant 384 : i32
    %24 = vector.broadcast %c384_i32 : i32 to vector<1x512xi32>
    %25 = arith.cmpi slt, %21, %24 : vector<1x512xi32>
    %26 = arith.andi %23, %25 : vector<1x512xi1>
    %cst_13 = arith.constant 1.000000e+00 : f32
    %cst_14 = arith.constant 5.000000e-01 : f32
    %27 = vector.broadcast %cst_13 : f32 to vector<1x512xf32>
    %28 = vector.broadcast %cst_14 : f32 to vector<1x512xf32>
    %29 = arith.select %26, %27, %28 : vector<1x512xi1>, vector<1x512xf32>
    %cst_15 = arith.constant 0.000000e+00 : f32
    %cst_16 = arith.constant 5.000000e-01 : f32
    %30 = vector.broadcast %cst_15 : f32 to vector<1x512xf32>
    %31 = vector.broadcast %cst_16 : f32 to vector<1x512xf32>
    %32 = arith.select %26, %30, %31 : vector<1x512xi1>, vector<1x512xf32>
    %cst_17 = arith.constant 0.000000e+00 : f32
    %33 = vector.broadcast %cst_17 : f32 to vector<8x128xf32>
    %cst_18 = arith.constant 0.000000e+00 : f32
    %34 = vector.broadcast %cst_18 : f32 to vector<8x128xf32>
    %c0_i32 = arith.constant 0 : i32
    %35 = arith.index_cast %c0_i32 : i32 to index
    %c0_19 = arith.constant 0 : index
    %c0_20 = arith.constant 0 : index
    %36 = vector.load %arg12[%35, %c0_19, %c0_20] : memref<8x8x512xf32, #tpu.memory_space<vmem>>, vector<1x8x512xf32>
    %37 = vector.shape_cast %36 : vector<1x8x512xf32> to vector<8x512xf32>
    %38 = arith.truncf %33 : vector<8x128xf32> to vector<8x128xbf16>
    %cst_21 = arith.constant dense<0.000000e+00> : vector<8x512xf32>
    %39 = tpu.matmul %38, %20, %cst_21 {dimension_numbers = #tpu.dot_dimension_numbers<[1], [0], [0], [1], [0, 0, 1, 1], [], []>} : vector<8x128xbf16>, vector<128x512xbf16>, vector<8x512xf32> -> vector<8x512xf32>
    %40 = arith.addf %37, %39 : vector<8x512xf32>
    %41 = vector.broadcast %29 : vector<1x512xf32> to vector<8x512xf32>
    %42 = arith.mulf %40, %41 : vector<8x512xf32>
    %43 = math.tanh %42 : vector<8x512xf32>
    %44 = vector.broadcast %29 : vector<1x512xf32> to vector<8x512xf32>
    %45 = arith.mulf %44, %43 : vector<8x512xf32>
    %46 = vector.broadcast %32 : vector<1x512xf32> to vector<8x512xf32>
    %47 = arith.addf %45, %46 : vector<8x512xf32>
    %48 = vector.extract_strided_slice %47 {offsets = [0, 0], sizes = [8, 128], strides = [1, 1]} : vector<8x512xf32> to vector<8x128xf32>
    %49 = vector.extract_strided_slice %47 {offsets = [0, 128], sizes = [8, 128], strides = [1, 1]} : vector<8x512xf32> to vector<8x128xf32>
    %50 = vector.extract_strided_slice %47 {offsets = [0, 256], sizes = [8, 128], strides = [1, 1]} : vector<8x512xf32> to vector<8x128xf32>
    %51 = vector.extract_strided_slice %47 {offsets = [0, 384], sizes = [8, 128], strides = [1, 1]} : vector<8x512xf32> to vector<8x128xf32>
    %52 = arith.mulf %49, %34 : vector<8x128xf32>
    %53 = arith.mulf %48, %50 : vector<8x128xf32>
    %54 = arith.addf %52, %53 : vector<8x128xf32>
    %55 = math.tanh %54 : vector<8x128xf32>
    %56 = arith.mulf %51, %55 : vector<8x128xf32>
    %c1_i32 = arith.constant 1 : i32
    %57 = arith.index_cast %c1_i32 : i32 to index
    %c0_22 = arith.constant 0 : index
    %c0_23 = arith.constant 0 : index
    %58 = vector.load %arg12[%57, %c0_22, %c0_23] : memref<8x8x512xf32, #tpu.memory_space<vmem>>, vector<1x8x512xf32>
    %59 = vector.shape_cast %58 : vector<1x8x512xf32> to vector<8x512xf32>
    %60 = arith.truncf %56 : vector<8x128xf32> to vector<8x128xbf16>
    %cst_24 = arith.constant dense<0.000000e+00> : vector<8x512xf32>
    %61 = tpu.matmul %60, %20, %cst_24 {dimension_numbers = #tpu.dot_dimension_numbers<[1], [0], [0], [1], [0, 0, 1, 1], [], []>} : vector<8x128xbf16>, vector<128x512xbf16>, vector<8x512xf32> -> vector<8x512xf32>
    %62 = arith.addf %59, %61 : vector<8x512xf32>
    %63 = vector.broadcast %29 : vector<1x512xf32> to vector<8x512xf32>
    %64 = arith.mulf %62, %63 : vector<8x512xf32>
    %65 = math.tanh %64 : vector<8x512xf32>
    %66 = vector.broadcast %29 : vector<1x512xf32> to vector<8x512xf32>
    %67 = arith.mulf %66, %65 : vector<8x512xf32>
    %68 = vector.broadcast %32 : vector<1x512xf32> to vector<8x512xf32>
    %69 = arith.addf %67, %68 : vector<8x512xf32>
    %70 = vector.extract_strided_slice %69 {offsets = [0, 0], sizes = [8, 128], strides = [1, 1]} : vector<8x512xf32> to vector<8x128xf32>
    %71 = vector.extract_strided_slice %69 {offsets = [0, 128], sizes = [8, 128], strides = [1, 1]} : vector<8x512xf32> to vector<8x128xf32>
    %72 = vector.extract_strided_slice %69 {offsets = [0, 256], sizes = [8, 128], strides = [1, 1]} : vector<8x512xf32> to vector<8x128xf32>
    %73 = vector.extract_strided_slice %69 {offsets = [0, 384], sizes = [8, 128], strides = [1, 1]} : vector<8x512xf32> to vector<8x128xf32>
    %74 = arith.mulf %71, %54 : vector<8x128xf32>
    %75 = arith.mulf %70, %72 : vector<8x128xf32>
    %76 = arith.addf %74, %75 : vector<8x128xf32>
    %77 = math.tanh %76 : vector<8x128xf32>
    %78 = arith.mulf %73, %77 : vector<8x128xf32>
    %c2_i32 = arith.constant 2 : i32
    %79 = arith.index_cast %c2_i32 : i32 to index
    %c0_25 = arith.constant 0 : index
    %c0_26 = arith.constant 0 : index
    %80 = vector.load %arg12[%79, %c0_25, %c0_26] : memref<8x8x512xf32, #tpu.memory_space<vmem>>, vector<1x8x512xf32>
    %81 = vector.shape_cast %80 : vector<1x8x512xf32> to vector<8x512xf32>
    %82 = arith.truncf %78 : vector<8x128xf32> to vector<8x128xbf16>
    %cst_27 = arith.constant dense<0.000000e+00> : vector<8x512xf32>
    %83 = tpu.matmul %82, %20, %cst_27 {dimension_numbers = #tpu.dot_dimension_numbers<[1], [0], [0], [1], [0, 0, 1, 1], [], []>} : vector<8x128xbf16>, vector<128x512xbf16>, vector<8x512xf32> -> vector<8x512xf32>
    %84 = arith.addf %81, %83 : vector<8x512xf32>
    %85 = vector.broadcast %29 : vector<1x512xf32> to vector<8x512xf32>
    %86 = arith.mulf %84, %85 : vector<8x512xf32>
    %87 = math.tanh %86 : vector<8x512xf32>
    %88 = vector.broadcast %29 : vector<1x512xf32> to vector<8x512xf32>
    %89 = arith.mulf %88, %87 : vector<8x512xf32>
    %90 = vector.broadcast %32 : vector<1x512xf32> to vector<8x512xf32>
    %91 = arith.addf %89, %90 : vector<8x512xf32>
    %92 = vector.extract_strided_slice %91 {offsets = [0, 0], sizes = [8, 128], strides = [1, 1]} : vector<8x512xf32> to vector<8x128xf32>
    %93 = vector.extract_strided_slice %91 {offsets = [0, 128], sizes = [8, 128], strides = [1, 1]} : vector<8x512xf32> to vector<8x128xf32>
    %94 = vector.extract_strided_slice %91 {offsets = [0, 256], sizes = [8, 128], strides = [1, 1]} : vector<8x512xf32> to vector<8x128xf32>
    %95 = vector.extract_strided_slice %91 {offsets = [0, 384], sizes = [8, 128], strides = [1, 1]} : vector<8x512xf32> to vector<8x128xf32>
    %96 = arith.mulf %93, %76 : vector<8x128xf32>
    %97 = arith.mulf %92, %94 : vector<8x128xf32>
    %98 = arith.addf %96, %97 : vector<8x128xf32>
    %99 = math.tanh %98 : vector<8x128xf32>
    %100 = arith.mulf %95, %99 : vector<8x128xf32>
    %c3_i32 = arith.constant 3 : i32
    %101 = arith.index_cast %c3_i32 : i32 to index
    %c0_28 = arith.constant 0 : index
    %c0_29 = arith.constant 0 : index
    %102 = vector.load %arg12[%101, %c0_28, %c0_29] : memref<8x8x512xf32, #tpu.memory_space<vmem>>, vector<1x8x512xf32>
    %103 = vector.shape_cast %102 : vector<1x8x512xf32> to vector<8x512xf32>
    %104 = arith.truncf %100 : vector<8x128xf32> to vector<8x128xbf16>
    %cst_30 = arith.constant dense<0.000000e+00> : vector<8x512xf32>
    %105 = tpu.matmul %104, %20, %cst_30 {dimension_numbers = #tpu.dot_dimension_numbers<[1], [0], [0], [1], [0, 0, 1, 1], [], []>} : vector<8x128xbf16>, vector<128x512xbf16>, vector<8x512xf32> -> vector<8x512xf32>
    %106 = arith.addf %103, %105 : vector<8x512xf32>
    %107 = vector.broadcast %29 : vector<1x512xf32> to vector<8x512xf32>
    %108 = arith.mulf %106, %107 : vector<8x512xf32>
    %109 = math.tanh %108 : vector<8x512xf32>
    %110 = vector.broadcast %29 : vector<1x512xf32> to vector<8x512xf32>
    %111 = arith.mulf %110, %109 : vector<8x512xf32>
    %112 = vector.broadcast %32 : vector<1x512xf32> to vector<8x512xf32>
    %113 = arith.addf %111, %112 : vector<8x512xf32>
    %114 = vector.extract_strided_slice %113 {offsets = [0, 0], sizes = [8, 128], strides = [1, 1]} : vector<8x512xf32> to vector<8x128xf32>
    %115 = vector.extract_strided_slice %113 {offsets = [0, 128], sizes = [8, 128], strides = [1, 1]} : vector<8x512xf32> to vector<8x128xf32>
    %116 = vector.extract_strided_slice %113 {offsets = [0, 256], sizes = [8, 128], strides = [1, 1]} : vector<8x512xf32> to vector<8x128xf32>
    %117 = vector.extract_strided_slice %113 {offsets = [0, 384], sizes = [8, 128], strides = [1, 1]} : vector<8x512xf32> to vector<8x128xf32>
    %118 = arith.mulf %115, %98 : vector<8x128xf32>
    %119 = arith.mulf %114, %116 : vector<8x128xf32>
    %120 = arith.addf %118, %119 : vector<8x128xf32>
    %121 = math.tanh %120 : vector<8x128xf32>
    %122 = arith.mulf %117, %121 : vector<8x128xf32>
    %c4_i32 = arith.constant 4 : i32
    %123 = arith.index_cast %c4_i32 : i32 to index
    %c0_31 = arith.constant 0 : index
    %c0_32 = arith.constant 0 : index
    %124 = vector.load %arg12[%123, %c0_31, %c0_32] : memref<8x8x512xf32, #tpu.memory_space<vmem>>, vector<1x8x512xf32>
    %125 = vector.shape_cast %124 : vector<1x8x512xf32> to vector<8x512xf32>
    %126 = arith.truncf %122 : vector<8x128xf32> to vector<8x128xbf16>
    %cst_33 = arith.constant dense<0.000000e+00> : vector<8x512xf32>
    %127 = tpu.matmul %126, %20, %cst_33 {dimension_numbers = #tpu.dot_dimension_numbers<[1], [0], [0], [1], [0, 0, 1, 1], [], []>} : vector<8x128xbf16>, vector<128x512xbf16>, vector<8x512xf32> -> vector<8x512xf32>
    %128 = arith.addf %125, %127 : vector<8x512xf32>
    %129 = vector.broadcast %29 : vector<1x512xf32> to vector<8x512xf32>
    %130 = arith.mulf %128, %129 : vector<8x512xf32>
    %131 = math.tanh %130 : vector<8x512xf32>
    %132 = vector.broadcast %29 : vector<1x512xf32> to vector<8x512xf32>
    %133 = arith.mulf %132, %131 : vector<8x512xf32>
    %134 = vector.broadcast %32 : vector<1x512xf32> to vector<8x512xf32>
    %135 = arith.addf %133, %134 : vector<8x512xf32>
    %136 = vector.extract_strided_slice %135 {offsets = [0, 0], sizes = [8, 128], strides = [1, 1]} : vector<8x512xf32> to vector<8x128xf32>
    %137 = vector.extract_strided_slice %135 {offsets = [0, 128], sizes = [8, 128], strides = [1, 1]} : vector<8x512xf32> to vector<8x128xf32>
    %138 = vector.extract_strided_slice %135 {offsets = [0, 256], sizes = [8, 128], strides = [1, 1]} : vector<8x512xf32> to vector<8x128xf32>
    %139 = vector.extract_strided_slice %135 {offsets = [0, 384], sizes = [8, 128], strides = [1, 1]} : vector<8x512xf32> to vector<8x128xf32>
    %140 = arith.mulf %137, %120 : vector<8x128xf32>
    %141 = arith.mulf %136, %138 : vector<8x128xf32>
    %142 = arith.addf %140, %141 : vector<8x128xf32>
    %143 = math.tanh %142 : vector<8x128xf32>
    %144 = arith.mulf %139, %143 : vector<8x128xf32>
    %c5_i32 = arith.constant 5 : i32
    %145 = arith.index_cast %c5_i32 : i32 to index
    %c0_34 = arith.constant 0 : index
    %c0_35 = arith.constant 0 : index
    %146 = vector.load %arg12[%145, %c0_34, %c0_35] : memref<8x8x512xf32, #tpu.memory_space<vmem>>, vector<1x8x512xf32>
    %147 = vector.shape_cast %146 : vector<1x8x512xf32> to vector<8x512xf32>
    %148 = arith.truncf %144 : vector<8x128xf32> to vector<8x128xbf16>
    %cst_36 = arith.constant dense<0.000000e+00> : vector<8x512xf32>
    %149 = tpu.matmul %148, %20, %cst_36 {dimension_numbers = #tpu.dot_dimension_numbers<[1], [0], [0], [1], [0, 0, 1, 1], [], []>} : vector<8x128xbf16>, vector<128x512xbf16>, vector<8x512xf32> -> vector<8x512xf32>
    %150 = arith.addf %147, %149 : vector<8x512xf32>
    %151 = vector.broadcast %29 : vector<1x512xf32> to vector<8x512xf32>
    %152 = arith.mulf %150, %151 : vector<8x512xf32>
    %153 = math.tanh %152 : vector<8x512xf32>
    %154 = vector.broadcast %29 : vector<1x512xf32> to vector<8x512xf32>
    %155 = arith.mulf %154, %153 : vector<8x512xf32>
    %156 = vector.broadcast %32 : vector<1x512xf32> to vector<8x512xf32>
    %157 = arith.addf %155, %156 : vector<8x512xf32>
    %158 = vector.extract_strided_slice %157 {offsets = [0, 0], sizes = [8, 128], strides = [1, 1]} : vector<8x512xf32> to vector<8x128xf32>
    %159 = vector.extract_strided_slice %157 {offsets = [0, 128], sizes = [8, 128], strides = [1, 1]} : vector<8x512xf32> to vector<8x128xf32>
    %160 = vector.extract_strided_slice %157 {offsets = [0, 256], sizes = [8, 128], strides = [1, 1]} : vector<8x512xf32> to vector<8x128xf32>
    %161 = vector.extract_strided_slice %157 {offsets = [0, 384], sizes = [8, 128], strides = [1, 1]} : vector<8x512xf32> to vector<8x128xf32>
    %162 = arith.mulf %159, %142 : vector<8x128xf32>
    %163 = arith.mulf %158, %160 : vector<8x128xf32>
    %164 = arith.addf %162, %163 : vector<8x128xf32>
    %165 = math.tanh %164 : vector<8x128xf32>
    %166 = arith.mulf %161, %165 : vector<8x128xf32>
    %c6_i32 = arith.constant 6 : i32
    %167 = arith.index_cast %c6_i32 : i32 to index
    %c0_37 = arith.constant 0 : index
    %c0_38 = arith.constant 0 : index
    %168 = vector.load %arg12[%167, %c0_37, %c0_38] : memref<8x8x512xf32, #tpu.memory_space<vmem>>, vector<1x8x512xf32>
    %169 = vector.shape_cast %168 : vector<1x8x512xf32> to vector<8x512xf32>
    %170 = arith.truncf %166 : vector<8x128xf32> to vector<8x128xbf16>
    %cst_39 = arith.constant dense<0.000000e+00> : vector<8x512xf32>
    %171 = tpu.matmul %170, %20, %cst_39 {dimension_numbers = #tpu.dot_dimension_numbers<[1], [0], [0], [1], [0, 0, 1, 1], [], []>} : vector<8x128xbf16>, vector<128x512xbf16>, vector<8x512xf32> -> vector<8x512xf32>
    %172 = arith.addf %169, %171 : vector<8x512xf32>
    %173 = vector.broadcast %29 : vector<1x512xf32> to vector<8x512xf32>
    %174 = arith.mulf %172, %173 : vector<8x512xf32>
    %175 = math.tanh %174 : vector<8x512xf32>
    %176 = vector.broadcast %29 : vector<1x512xf32> to vector<8x512xf32>
    %177 = arith.mulf %176, %175 : vector<8x512xf32>
    %178 = vector.broadcast %32 : vector<1x512xf32> to vector<8x512xf32>
    %179 = arith.addf %177, %178 : vector<8x512xf32>
    %180 = vector.extract_strided_slice %179 {offsets = [0, 0], sizes = [8, 128], strides = [1, 1]} : vector<8x512xf32> to vector<8x128xf32>
    %181 = vector.extract_strided_slice %179 {offsets = [0, 128], sizes = [8, 128], strides = [1, 1]} : vector<8x512xf32> to vector<8x128xf32>
    %182 = vector.extract_strided_slice %179 {offsets = [0, 256], sizes = [8, 128], strides = [1, 1]} : vector<8x512xf32> to vector<8x128xf32>
    %183 = vector.extract_strided_slice %179 {offsets = [0, 384], sizes = [8, 128], strides = [1, 1]} : vector<8x512xf32> to vector<8x128xf32>
    %184 = arith.mulf %181, %164 : vector<8x128xf32>
    %185 = arith.mulf %180, %182 : vector<8x128xf32>
    %186 = arith.addf %184, %185 : vector<8x128xf32>
    %187 = math.tanh %186 : vector<8x128xf32>
    %188 = arith.mulf %183, %187 : vector<8x128xf32>
    %c7_i32 = arith.constant 7 : i32
    %189 = arith.index_cast %c7_i32 : i32 to index
    %c0_40 = arith.constant 0 : index
    %c0_41 = arith.constant 0 : index
    %190 = vector.load %arg12[%189, %c0_40, %c0_41] : memref<8x8x512xf32, #tpu.memory_space<vmem>>, vector<1x8x512xf32>
    %191 = vector.shape_cast %190 : vector<1x8x512xf32> to vector<8x512xf32>
    %192 = arith.truncf %188 : vector<8x128xf32> to vector<8x128xbf16>
    %cst_42 = arith.constant dense<0.000000e+00> : vector<8x512xf32>
    %193 = tpu.matmul %192, %20, %cst_42 {dimension_numbers = #tpu.dot_dimension_numbers<[1], [0], [0], [1], [0, 0, 1, 1], [], []>} : vector<8x128xbf16>, vector<128x512xbf16>, vector<8x512xf32> -> vector<8x512xf32>
    %194 = arith.addf %191, %193 : vector<8x512xf32>
    %195 = vector.broadcast %29 : vector<1x512xf32> to vector<8x512xf32>
    %196 = arith.mulf %194, %195 : vector<8x512xf32>
    %197 = math.tanh %196 : vector<8x512xf32>
    %198 = vector.broadcast %29 : vector<1x512xf32> to vector<8x512xf32>
    %199 = arith.mulf %198, %197 : vector<8x512xf32>
    %200 = vector.broadcast %32 : vector<1x512xf32> to vector<8x512xf32>
    %201 = arith.addf %199, %200 : vector<8x512xf32>
    %202 = vector.extract_strided_slice %201 {offsets = [0, 0], sizes = [8, 128], strides = [1, 1]} : vector<8x512xf32> to vector<8x128xf32>
    %203 = vector.extract_strided_slice %201 {offsets = [0, 128], sizes = [8, 128], strides = [1, 1]} : vector<8x512xf32> to vector<8x128xf32>
    %204 = vector.extract_strided_slice %201 {offsets = [0, 256], sizes = [8, 128], strides = [1, 1]} : vector<8x512xf32> to vector<8x128xf32>
    %205 = vector.extract_strided_slice %201 {offsets = [0, 384], sizes = [8, 128], strides = [1, 1]} : vector<8x512xf32> to vector<8x128xf32>
    %206 = arith.mulf %203, %186 : vector<8x128xf32>
    %207 = arith.mulf %202, %204 : vector<8x128xf32>
    %208 = arith.addf %206, %207 : vector<8x128xf32>
    %209 = math.tanh %208 : vector<8x128xf32>
    %210 = arith.mulf %205, %209 : vector<8x128xf32>
    %c8_i32 = arith.constant 8 : i32
    %c0_43 = arith.constant 0 : index
    %c0_44 = arith.constant 0 : index
    %211 = vector.load %arg6[%c0_43, %c0_44] : memref<128x256xf32, #tpu.memory_space<vmem>>, vector<128x256xf32>
    %cst_45 = arith.constant dense<0.000000e+00> : vector<8x256xf32>
    %212 = tpu.matmul %210, %211, %cst_45 {dimension_numbers = #tpu.dot_dimension_numbers<[1], [0], [0], [1], [0, 0, 1, 1], [], []>} : vector<8x128xf32>, vector<128x256xf32>, vector<8x256xf32> -> vector<8x256xf32>
    %c0_46 = arith.constant 0 : index
    %c0_47 = arith.constant 0 : index
    %213 = vector.load %arg7[%c0_46, %c0_47] : memref<1x256xf32, #tpu.memory_space<vmem>>, vector<1x256xf32>
    %214 = vector.broadcast %213 : vector<1x256xf32> to vector<8x256xf32>
    %215 = arith.addf %212, %214 : vector<8x256xf32>
    %cst_48 = arith.constant 0.000000e+00 : f32
    %216 = vector.broadcast %cst_48 : f32 to vector<8x256xf32>
    %217 = arith.maximumf %215, %216 : vector<8x256xf32>
    %c0_49 = arith.constant 0 : index
    %c0_50 = arith.constant 0 : index
    %218 = vector.load %arg8[%c0_49, %c0_50] : memref<256x128xf32, #tpu.memory_space<vmem>>, vector<256x128xf32>
    %cst_51 = arith.constant dense<0.000000e+00> : vector<8x128xf32>
    %219 = tpu.matmul %217, %218, %cst_51 {dimension_numbers = #tpu.dot_dimension_numbers<[1], [0], [0], [1], [0, 0, 1, 1], [], []>} : vector<8x256xf32>, vector<256x128xf32>, vector<8x128xf32> -> vector<8x128xf32>
    %c0_52 = arith.constant 0 : index
    %c0_53 = arith.constant 0 : index
    %220 = vector.load %arg9[%c0_52, %c0_53] : memref<1x128xf32, #tpu.memory_space<vmem>>, vector<1x128xf32>
    %221 = vector.broadcast %220 : vector<1x128xf32> to vector<8x128xf32>
    %222 = arith.addf %219, %221 : vector<8x128xf32>
    %c0_54 = arith.constant 0 : index
    %c0_55 = arith.constant 0 : index
    %223 = vector.load %arg11[%c0_54, %c0_55] : memref<8x256xf32, #tpu.memory_space<vmem>>, vector<8x256xf32>
    tpu.vector_store %arg11[%c0_54, %c0_55], %217 {strides = array<i32>} : memref<8x256xf32, #tpu.memory_space<vmem>>, vector<8x256xf32>,
    %c0_56 = arith.constant 0 : index
    %c0_57 = arith.constant 0 : index
    %224 = vector.load %arg10[%c0_56, %c0_57] : memref<8x128xf32, #tpu.memory_space<vmem>>, vector<8x128xf32>
    tpu.vector_store %arg10[%c0_56, %c0_57], %222 {strides = array<i32>} : memref<8x128xf32, #tpu.memory_space<vmem>>, vector<8x128xf32>,
    return
  }
  func.func @transform_0(%arg0: i32) -> (i32, i32) {
    %c0_i32 = arith.constant 0 : i32
    %c0_i32_0 = arith.constant 0 : i32
    return %arg0, %c0_i32 : i32, i32
  }
  func.func @transform_1(%arg0: i32) -> (i32, i32) {
    %c0_i32 = arith.constant 0 : i32
    %c0_i32_0 = arith.constant 0 : i32
    %c0_i32_1 = arith.constant 0 : i32
    return %c0_i32, %c0_i32_0 : i32, i32
  }
  func.func @transform_2(%arg0: i32) -> (i32, i32) {
    %c0_i32 = arith.constant 0 : i32
    %c0_i32_0 = arith.constant 0 : i32
    %c0_i32_1 = arith.constant 0 : i32
    return %c0_i32, %c0_i32_0 : i32, i32
  }
  func.func @transform_3(%arg0: i32) -> (i32, i32) {
    %c0_i32 = arith.constant 0 : i32
    %c0_i32_0 = arith.constant 0 : i32
    %c0_i32_1 = arith.constant 0 : i32
    return %c0_i32, %c0_i32_0 : i32, i32
  }
  func.func @transform_4(%arg0: i32) -> (i32, i32) {
    %c0_i32 = arith.constant 0 : i32
    %c0_i32_0 = arith.constant 0 : i32
    %c0_i32_1 = arith.constant 0 : i32
    return %c0_i32, %c0_i32_0 : i32, i32
  }
  func.func @transform_5(%arg0: i32) -> (i32, i32) {
    %c0_i32 = arith.constant 0 : i32
    %c0_i32_0 = arith.constant 0 : i32
    %c0_i32_1 = arith.constant 0 : i32
    return %c0_i32, %c0_i32_0 : i32, i32
  }
  func.func @transform_6(%arg0: i32) -> (i32, i32) {
    %c0_i32 = arith.constant 0 : i32
    %c0_i32_0 = arith.constant 0 : i32
    %c0_i32_1 = arith.constant 0 : i32
    return %c0_i32, %c0_i32_0 : i32, i32
  }
  func.func @transform_7(%arg0: i32) -> (i32, i32) {
    %c0_i32 = arith.constant 0 : i32
    %c0_i32_0 = arith.constant 0 : i32
    %c0_i32_1 = arith.constant 0 : i32
    return %c0_i32, %c0_i32_0 : i32, i32
  }
  func.func @transform_8(%arg0: i32) -> (i32, i32) {
    %c0_i32 = arith.constant 0 : i32
    %c0_i32_0 = arith.constant 0 : i32
    %c0_i32_1 = arith.constant 0 : i32
    return %c0_i32, %c0_i32_0 : i32, i32
  }
  func.func @transform_9(%arg0: i32) -> (i32, i32) {
    %c0_i32 = arith.constant 0 : i32
    %c0_i32_0 = arith.constant 0 : i32
    return %arg0, %c0_i32 : i32, i32
  }
  func.func @transform_10(%arg0: i32) -> (i32, i32) {
    %c0_i32 = arith.constant 0 : i32
    %c0_i32_0 = arith.constant 0 : i32
    return %arg0, %c0_i32 : i32, i32
  }
}

</mosaic_0001>

<llo_original>
// kernel: tpu_custom_call.1
$region0: #{tpu_custom_call.1}
  #allocation0 [shape = 'u32[]', space=smem, size = 0x4, offset = 0x4, fixed_abs, tag = 'smem constant byte address 0x4 - core index']
  #allocation1 [shape = 'u32[144,128]{1,0:T(1,128)}', space=vmem, size = 0x12000, scoped, tag = 'internal scratch']
  #allocation2 [shape = 'f32[8,8,512]{2,1,0:T(8,128)}', space=vmem, size = 0x20000, scoped, tag = 'scratch operand']
  %s0 = inlined_call_operand.hbm [shape: bf16[64,440], index: 0, kind: input, shape index: {}]
  %s1 = inlined_call_operand.hbm [shape: bf16[440,512], index: 1, kind: input, shape index: {}]
  %s2 = inlined_call_operand.hbm [shape: bf16[256,512], index: 2, kind: input, shape index: {}]
  %s3 = inlined_call_operand.hbm [shape: bf16[128,512], index: 3, kind: input, shape index: {}]
  %s4 = inlined_call_operand.vmem [shape: f32[1,512], index: 4, kind: input, shape index: {}]
  %s5 = inlined_call_operand.hbm [shape: f32[128,256], index: 5, kind: input, shape index: {}]
  %s6 = inlined_call_operand.vmem [shape: f32[1,256], index: 6, kind: input, shape index: {}]
  %s7 = inlined_call_operand.hbm [shape: f32[256,128], index: 7, kind: input, shape index: {}]
  %s8 = inlined_call_operand.vmem [shape: f32[1,128], index: 8, kind: input, shape index: {}]
  %s9 = inlined_call_operand.hbm [shape: f32[8,128], index: 9, kind: output, shape index: {0}]
  %s10 = inlined_call_operand.hbm [shape: f32[8,256], index: 10, kind: output, shape index: {1}]
  %11 = xla_tuple %s9, %s10
  %s12 = sld [smem:[#allocation0]]
  $region78: #{tpu_custom_call.1} parent=0
    _
  %s14 = ssub.s32 1, %s12
  %s15 = scalar_select 0, %s14, %s12
  $region1: #{tpu_custom_call.1} parent=0
    #allocation3 [shape = 'u8[65536]{0}', space=vmem, size = 0x10000, scoped, tag = 'input window, operand 0, single buffered']
    #allocation4 [shape = 's32[1]{0}', space=sflag, size = 0x4, scoped, tag = 'scoped memory for tpu_custom_call.1']
    #allocation5 [shape = 's32[1]{0}', space=sflag, size = 0x4, scoped, tag = 'scoped memory for tpu_custom_call.1']
    #allocation6 [shape = 'u8[450560]{0}', space=vmem, size = 0x6e000, scoped, tag = 'input window, operand 1, single buffered']
    #allocation7 [shape = 's32[1]{0}', space=sflag, size = 0x4, scoped, tag = 'scoped memory for tpu_custom_call.1']
    #allocation8 [shape = 'u8[262144]{0}', space=vmem, size = 0x40000, scoped, tag = 'input window, operand 2, single buffered']
    #allocation9 [shape = 'u8[131072]{0}', space=vmem, size = 0x20000, scoped, tag = 'input window, operand 3, single buffered']
    #allocation10 [shape = 's32[1]{0}', space=sflag, size = 0x4, scoped, tag = 'scoped memory for tpu_custom_call.1']
    #allocation11 [shape = 'u8[131072]{0}', space=vmem, size = 0x20000, scoped, tag = 'input window, operand 5, single buffered']
    #allocation12 [shape = 'u8[131072]{0}', space=vmem, size = 0x20000, scoped, tag = 'input window, operand 7, single buffered']
    #allocation13 [shape = 's32[1]{0}', space=sflag, size = 0x4, scoped, tag = 'scoped memory for tpu_custom_call.1']
    #allocation14 [shape = 'u8[4096]{0}', space=vmem, size = 0x1000, scoped, tag = 'output window, operand 0, single buffered']
    #allocation15 [shape = 'u8[8192]{0}', space=vmem, size = 0x2000, scoped, tag = 'output window, operand 1, single buffered']
    #allocation16 [shape = 's32[1]{0}', space=sflag, size = 0x4, scoped, tag = 'scoped memory for tpu_custom_call.1']
    %16 = vsyncpa [#allocation4], 0
    %17 = vsyncpa [#allocation7], 0
    %18 = vsyncpa [#allocation10], 0
    %19 = vsyncpa [#allocation13], 0
    %20 = vsyncpa [#allocation5], 0
    %21 = vsyncpa [#allocation16], 0
    // Predicated region
    $region2: #{tpu_custom_call.1} parent=1 // pred_check
      _
    $region3: #{tpu_custom_call.1} parent=1 // pred_check_branch
      %23 = sbr.rel (0) target = $region5
    $region4: #{tpu_custom_call.1} parent=1 // pred_region
      %s25 = ssub.s32 2048, 2048
      %26 = vsyncadd [#allocation4], %s25
      %s27 = sshll.u32 [#allocation3], 4
      %s28 = int_to_ptr.vmem [resolvable:$true] %s27
      %33 = dma.hbm_to_vmem [thread:$0]  %s0, 2048, %s28, [#allocation4], 256, 256, 16
    $region5: #{tpu_custom_call.1} parent=1 // pred_fallthru
      _
    // Predicated region
    $region6: #{tpu_custom_call.1} parent=1 // pred_check
      _
    $region7: #{tpu_custom_call.1} parent=1 // pred_check_branch
      %35 = sbr.rel (0) target = $region9
    $region8: #{tpu_custom_call.1} parent=1 // pred_region
      %s37 = ssub.s32 14080, 14080
      %38 = vsyncadd [#allocation7], %s37
      %s39 = sshll.u32 [#allocation6], 4
      %s40 = int_to_ptr.vmem [resolvable:$true] %s39
      %45 = dma.hbm_to_vmem [thread:$0]  %s1, 14080, %s40, [#allocation7], 256, 256, 16
    $region9: #{tpu_custom_call.1} parent=1 // pred_fallthru
      _
    // Predicated region
    $region10: #{tpu_custom_call.1} parent=1 // pred_check
      _
    $region11: #{tpu_custom_call.1} parent=1 // pred_check_branch
      %47 = sbr.rel (0) target = $region13
    $region12: #{tpu_custom_call.1} parent=1 // pred_region
      %s49 = ssub.s32 8192, 8192
      %50 = vsyncadd [#allocation7], %s49
      %s51 = sshll.u32 [#allocation8], 4
      %s52 = int_to_ptr.vmem [resolvable:$true] %s51
      %57 = dma.hbm_to_vmem [thread:$0]  %s2, 8192, %s52, [#allocation7], 256, 256, 16
    $region13: #{tpu_custom_call.1} parent=1 // pred_fallthru
      _
    // Predicated region
    $region14: #{tpu_custom_call.1} parent=1 // pred_check
      _
    $region15: #{tpu_custom_call.1} parent=1 // pred_check_branch
      %59 = sbr.rel (0) target = $region17
    $region16: #{tpu_custom_call.1} parent=1 // pred_region
      %s61 = ssub.s32 4096, 4096
      %62 = vsyncadd [#allocation10], %s61
      %s63 = sshll.u32 [#allocation9], 4
      %s64 = int_to_ptr.vmem [resolvable:$true] %s63
      %69 = dma.hbm_to_vmem [thread:$0]  %s3, 4096, %s64, [#allocation10], 256, 256, 16
    $region17: #{tpu_custom_call.1} parent=1 // pred_fallthru
      _
    // Predicated region
    $region18: #{tpu_custom_call.1} parent=1 // pred_check
      _
    $region19: #{tpu_custom_call.1} parent=1 // pred_check_branch
      %71 = sbr.rel (0) target = $region21
    $region20: #{tpu_custom_call.1} parent=1 // pred_region
      _
    $region21: #{tpu_custom_call.1} parent=1 // pred_fallthru
      _
    // Predicated region
    $region22: #{tpu_custom_call.1} parent=1 // pred_check
      _
    $region23: #{tpu_custom_call.1} parent=1 // pred_check_branch
      %73 = sbr.rel (0) target = $region25
    $region24: #{tpu_custom_call.1} parent=1 // pred_region
      %s75 = ssub.s32 4096, 4096
      %76 = vsyncadd [#allocation10], %s75
      %s77 = sshll.u32 [#allocation11], 4
      %s78 = int_to_ptr.vmem [resolvable:$true] %s77
      %83 = dma.hbm_to_vmem [thread:$0]  %s5, 4096, %s78, [#allocation10], 256, 256, 16
    $region25: #{tpu_custom_call.1} parent=1 // pred_fallthru
      _
    // Predicated region
    $region26: #{tpu_custom_call.1} parent=1 // pred_check
      _
    $region27: #{tpu_custom_call.1} parent=1 // pred_check_branch
      %85 = sbr.rel (0) target = $region29
    $region28: #{tpu_custom_call.1} parent=1 // pred_region
      _
    $region29: #{tpu_custom_call.1} parent=1 // pred_fallthru
      _
    // Predicated region
    $region30: #{tpu_custom_call.1} parent=1 // pred_check
      _
    $region31: #{tpu_custom_call.1} parent=1 // pred_check_branch
      %87 = sbr.rel (0) target = $region33
    $region32: #{tpu_custom_call.1} parent=1 // pred_region
      %s89 = ssub.s32 4096, 4096
      %90 = vsyncadd [#allocation13], %s89
      %s91 = sshll.u32 [#allocation12], 4
      %s92 = int_to_ptr.vmem [resolvable:$true] %s91
      %97 = dma.hbm_to_vmem [thread:$0]  %s7, 4096, %s92, [#allocation13], 128, 128, 8
    $region33: #{tpu_custom_call.1} parent=1 // pred_fallthru
      _
    // Predicated region
    $region34: #{tpu_custom_call.1} parent=1 // pred_check
      _
    $region35: #{tpu_custom_call.1} parent=1 // pred_check_branch
      %99 = sbr.rel (0) target = $region37
    $region36: #{tpu_custom_call.1} parent=1 // pred_region
      _
    $region37: #{tpu_custom_call.1} parent=1 // pred_fallthru
      _
    // Predicated region
    $region38: #{tpu_custom_call.1} parent=1 // pred_check
      _
    $region39: #{tpu_custom_call.1} parent=1 // pred_check_branch
      %101 = sbr.rel (0) target = $region41
    $region40: #{tpu_custom_call.1} parent=1 // pred_region
      %102 = dma.done [#allocation4], 2048
    $region41: #{tpu_custom_call.1} parent=1 // pred_fallthru
      _
    // Predicated region
    $region42: #{tpu_custom_call.1} parent=1 // pred_check
      _
    $region43: #{tpu_custom_call.1} parent=1 // pred_check_branch
      %104 = sbr.rel (0) target = $region45
    $region44: #{tpu_custom_call.1} parent=1 // pred_region
      %105 = dma.done [#allocation7], 14080
    $region45: #{tpu_custom_call.1} parent=1 // pred_fallthru
      _
    // Predicated region
    $region46: #{tpu_custom_call.1} parent=1 // pred_check
      _
    $region47: #{tpu_custom_call.1} parent=1 // pred_check_branch
      %107 = sbr.rel (0) target = $region49
    $region48: #{tpu_custom_call.1} parent=1 // pred_region
      %108 = dma.done [#allocation7], 8192
    $region49: #{tpu_custom_call.1} parent=1 // pred_fallthru
      _
    // Predicated region
    $region50: #{tpu_custom_call.1} parent=1 // pred_check
      _
    $region51: #{tpu_custom_call.1} parent=1 // pred_check_branch
      %110 = sbr.rel (0) target = $region53
    $region52: #{tpu_custom_call.1} parent=1 // pred_region
      %111 = dma.done [#allocation10], 4096
    $region53: #{tpu_custom_call.1} parent=1 // pred_fallthru
      _
    // Predicated region
    $region54: #{tpu_custom_call.1} parent=1 // pred_check
      _
    $region55: #{tpu_custom_call.1} parent=1 // pred_check_branch
      %113 = sbr.rel (0) target = $region57
    $region56: #{tpu_custom_call.1} parent=1 // pred_region
      %114 = dma.done [#allocation10], 4096
    $region57: #{tpu_custom_call.1} parent=1 // pred_fallthru
      _
    // Predicated region
    $region58: #{tpu_custom_call.1} parent=1 // pred_check
      _
    $region59: #{tpu_custom_call.1} parent=1 // pred_check_branch
      %116 = sbr.rel (0) target = $region61
    $region60: #{tpu_custom_call.1} parent=1 // pred_region
      %117 = dma.done [#allocation13], 4096
    $region61: #{tpu_custom_call.1} parent=1 // pred_fallthru
      _
    %v119 = vld [vmem:[#allocation3] sm:$0xff]
    %v120 = vld [vmem:[#allocation3 + $0x8] sm:$0xff]
    %v121 = vld [vmem:[#allocation3 + $0x10] sm:$0xff]
    %v122 = vld [vmem:[#allocation3 + $0x18] sm:$0xff]
    %v123 = vld [vmem:[#allocation3 + $0x20] sm:$0xff]
    %v124 = vld [vmem:[#allocation3 + $0x28] sm:$0xff]
    %v125 = vld [vmem:[#allocation3 + $0x30] sm:$0xff]
    %v126 = vld [vmem:[#allocation3 + $0x38] sm:$0xff]
    %v127 = vld [vmem:[#allocation3 + $0x40] sm:$0xff]
    %v128 = vld [vmem:[#allocation3 + $0x48] sm:$0xff]
    %v129 = vld [vmem:[#allocation3 + $0x50] sm:$0xff]
    %v130 = vld [vmem:[#allocation3 + $0x58] sm:$0xff]
    %v131 = vld [vmem:[#allocation3 + $0x60] sm:$0xff]
    %v132 = vld [vmem:[#allocation3 + $0x68] sm:$0xff]
    %v133 = vld [vmem:[#allocation3 + $0x70] sm:$0xff]
    %v134 = vld [vmem:[#allocation3 + $0x78] sm:$0xff]
    %v135 = vld [vmem:[#allocation6] sm:$0xff]
    %v136 = vld [vmem:[#allocation6 + $0x8] sm:$0xff]
    %v137 = vld [vmem:[#allocation6 + $0x10] sm:$0xff]
    %v138 = vld [vmem:[#allocation6 + $0x18] sm:$0xff]
    %v139 = vld [vmem:[#allocation6 + $0x20] sm:$0xff]
    %v140 = vld [vmem:[#allocation6 + $0x28] sm:$0xff]
    %v141 = vld [vmem:[#allocation6 + $0x30] sm:$0xff]
    %v142 = vld [vmem:[#allocation6 + $0x38] sm:$0xff]
    %v143 = vld [vmem:[#allocation6 + $0x40] sm:$0xff]
    %v144 = vld [vmem:[#allocation6 + $0x48] sm:$0xff]
    %v145 = vld [vmem:[#allocation6 + $0x50] sm:$0xff]
    %v146 = vld [vmem:[#allocation6 + $0x58] sm:$0xff]
    %v147 = vld [vmem:[#allocation6 + $0x60] sm:$0xff]
    %v148 = vld [vmem:[#allocation6 + $0x68] sm:$0xff]
    %v149 = vld [vmem:[#allocation6 + $0x70] sm:$0xff]
    %v150 = vld [vmem:[#allocation6 + $0x78] sm:$0xff]
    %v151 = vld [vmem:[#allocation6 + $0x80] sm:$0xff]
    %v152 = vld [vmem:[#allocation6 + $0x88] sm:$0xff]
    %v153 = vld [vmem:[#allocation6 + $0x90] sm:$0xff]
    %v154 = vld [vmem:[#allocation6 + $0x98] sm:$0xff]
    %v155 = vld [vmem:[#allocation6 + $0xa0] sm:$0xff]
    %v156 = vld [vmem:[#allocation6 + $0xa8] sm:$0xff]
    %v157 = vld [vmem:[#allocation6 + $0xb0] sm:$0xff]
    %v158 = vld [vmem:[#allocation6 + $0xb8] sm:$0xff]
    %v159 = vld [vmem:[#allocation6 + $0xc0] sm:$0xff]
    %v160 = vld [vmem:[#allocation6 + $0xc8] sm:$0xff]
    %v161 = vld [vmem:[#allocation6 + $0xd0] sm:$0xff]
    %v162 = vld [vmem:[#allocation6 + $0xd8] sm:$0xff]
    %v163 = vld [vmem:[#allocation6 + $0xe0] sm:$0xff]
    %v164 = vld [vmem:[#allocation6 + $0xe8] sm:$0xff]
    %v165 = vld [vmem:[#allocation6 + $0xf0] sm:$0xff]
    %v166 = vld [vmem:[#allocation6 + $0xf8] sm:$0xff]
    %v167 = vld [vmem:[#allocation6 + $0x100] sm:$0xff]
    %v168 = vld [vmem:[#allocation6 + $0x108] sm:$0xff]
    %v169 = vld [vmem:[#allocation6 + $0x110] sm:$0xff]
    %v170 = vld [vmem:[#allocation6 + $0x118] sm:$0xff]
    %v171 = vld [vmem:[#allocation6 + $0x120] sm:$0xff]
    %v172 = vld [vmem:[#allocation6 + $0x128] sm:$0xff]
    %v173 = vld [vmem:[#allocation6 + $0x130] sm:$0xff]
    %v174 = vld [vmem:[#allocation6 + $0x138] sm:$0xff]
    %v175 = vld [vmem:[#allocation6 + $0x140] sm:$0xff]
    %v176 = vld [vmem:[#allocation6 + $0x148] sm:$0xff]
    %v177 = vld [vmem:[#allocation6 + $0x150] sm:$0xff]
    %v178 = vld [vmem:[#allocation6 + $0x158] sm:$0xff]
    %v179 = vld [vmem:[#allocation6 + $0x160] sm:$0xff]
    %v180 = vld [vmem:[#allocation6 + $0x168] sm:$0xff]
    %v181 = vld [vmem:[#allocation6 + $0x170] sm:$0xff]
    %v182 = vld [vmem:[#allocation6 + $0x178] sm:$0xff]
    %v183 = vld [vmem:[#allocation6 + $0x180] sm:$0xff]
    %v184 = vld [vmem:[#allocation6 + $0x188] sm:$0xff]
    %v185 = vld [vmem:[#allocation6 + $0x190] sm:$0xff]
    %v186 = vld [vmem:[#allocation6 + $0x198] sm:$0xff]
    %v187 = vld [vmem:[#allocation6 + $0x1a0] sm:$0xff]
    %v188 = vld [vmem:[#allocation6 + $0x1a8] sm:$0xff]
    %v189 = vld [vmem:[#allocation6 + $0x1b0] sm:$0xff]
    %v190 = vld [vmem:[#allocation6 + $0x1b8] sm:$0xff]
    %v191 = vld [vmem:[#allocation6 + $0x1c0] sm:$0xff]
    %v192 = vld [vmem:[#allocation6 + $0x1c8] sm:$0xff]
    %v193 = vld [vmem:[#allocation6 + $0x1d0] sm:$0xff]
    %v194 = vld [vmem:[#allocation6 + $0x1d8] sm:$0xff]
    %v195 = vld [vmem:[#allocation6 + $0x1e0] sm:$0xff]
    %v196 = vld [vmem:[#allocation6 + $0x1e8] sm:$0xff]
    %v197 = vld [vmem:[#allocation6 + $0x1f0] sm:$0xff]
    %v198 = vld [vmem:[#allocation6 + $0x1f8] sm:$0xff]
    %v199 = vld [vmem:[#allocation6 + $0x200] sm:$0xff]
    %v200 = vld [vmem:[#allocation6 + $0x208] sm:$0xff]
    %v201 = vld [vmem:[#allocation6 + $0x210] sm:$0xff]
    %v202 = vld [vmem:[#allocation6 + $0x218] sm:$0xff]
    %v203 = vld [vmem:[#allocation6 + $0x220] sm:$0xff]
    %v204 = vld [vmem:[#allocation6 + $0x228] sm:$0xff]
    %v205 = vld [vmem:[#allocation6 + $0x230] sm:$0xff]
    %v206 = vld [vmem:[#allocation6 + $0x238] sm:$0xff]
    %v207 = vld [vmem:[#allocation6 + $0x240] sm:$0xff]
    %v208 = vld [vmem:[#allocation6 + $0x248] sm:$0xff]
    %v209 = vld [vmem:[#allocation6 + $0x250] sm:$0xff]
    %v210 = vld [vmem:[#allocation6 + $0x258] sm:$0xff]
    %v211 = vld [vmem:[#allocation6 + $0x260] sm:$0xff]
    %v212 = vld [vmem:[#allocation6 + $0x268] sm:$0xff]
    %v213 = vld [vmem:[#allocation6 + $0x270] sm:$0xff]
    %v214 = vld [vmem:[#allocation6 + $0x278] sm:$0xff]
    %v215 = vld [vmem:[#allocation6 + $0x280] sm:$0xff]
    %v216 = vld [vmem:[#allocation6 + $0x288] sm:$0xff]
    %v217 = vld [vmem:[#allocation6 + $0x290] sm:$0xff]
    %v218 = vld [vmem:[#allocation6 + $0x298] sm:$0xff]
    %v219 = vld [vmem:[#allocation6 + $0x2a0] sm:$0xff]
    %v220 = vld [vmem:[#allocation6 + $0x2a8] sm:$0xff]
    %v221 = vld [vmem:[#allocation6 + $0x2b0] sm:$0xff]
    %v222 = vld [vmem:[#allocation6 + $0x2b8] sm:$0xff]
    %v223 = vld [vmem:[#allocation6 + $0x2c0] sm:$0xff]
    %v224 = vld [vmem:[#allocation6 + $0x2c8] sm:$0xff]
    %v225 = vld [vmem:[#allocation6 + $0x2d0] sm:$0xff]
    %v226 = vld [vmem:[#allocation6 + $0x2d8] sm:$0xff]
    %v227 = vld [vmem:[#allocation6 + $0x2e0] sm:$0xff]
    %v228 = vld [vmem:[#allocation6 + $0x2e8] sm:$0xff]
    %v229 = vld [vmem:[#allocation6 + $0x2f0] sm:$0xff]
    %v230 = vld [vmem:[#allocation6 + $0x2f8] sm:$0xff]
    %v231 = vld [vmem:[#allocation6 + $0x300] sm:$0xff]
    %v232 = vld [vmem:[#allocation6 + $0x308] sm:$0xff]
    %v233 = vld [vmem:[#allocation6 + $0x310] sm:$0xff]
    %v234 = vld [vmem:[#allocation6 + $0x318] sm:$0xff]
    %v235 = vld [vmem:[#allocation6 + $0x320] sm:$0xff]
    %v236 = vld [vmem:[#allocation6 + $0x328] sm:$0xff]
    %v237 = vld [vmem:[#allocation6 + $0x330] sm:$0xff]
    %v238 = vld [vmem:[#allocation6 + $0x338] sm:$0xff]
    %v239 = vld [vmem:[#allocation6 + $0x340] sm:$0xff]
    %v240 = vld [vmem:[#allocation6 + $0x348] sm:$0xff]
    %v241 = vld [vmem:[#allocation6 + $0x350] sm:$0xff]
    %v242 = vld [vmem:[#allocation6 + $0x358] sm:$0xff]
    %v243 = vld [vmem:[#allocation6 + $0x360] sm:$0xff]
    %v244 = vld [vmem:[#allocation6 + $0x368] sm:$0xff]
    %v261 = vunpack.c.l.b16 %v119
    %v262 = vunpack.c.h.b16 %v119
    %v263 = vunpack.c.l.b16 %v120
    %v264 = vunpack.c.h.b16 %v120
    %v265 = vunpack.c.l.b16 %v121
    %v266 = vunpack.c.h.b16 %v121
    %v267 = vunpack.c.l.b16 %v122
    %v268 = vunpack.c.h.b16 %v122
    %v269 = vunpack.c.l.b16 %v123
    %v270 = vunpack.c.h.b16 %v123
    %v271 = vunpack.c.l.b16 %v124
    %v272 = vunpack.c.h.b16 %v124
    %v273 = vunpack.c.l.b16 %v125
    %v274 = vunpack.c.h.b16 %v125
    %v275 = vunpack.c.l.b16 %v126
    %v276 = vunpack.c.h.b16 %v126
    %v277 = vunpack.c.l.b16 %v127
    %v278 = vunpack.c.h.b16 %v127
    %v279 = vunpack.c.l.b16 %v128
    %v280 = vunpack.c.h.b16 %v128
    %v281 = vunpack.c.l.b16 %v129
    %v282 = vunpack.c.h.b16 %v129
    %v283 = vunpack.c.l.b16 %v130
    %v284 = vunpack.c.h.b16 %v130
    %v285 = vunpack.c.l.b16 %v131
    %v286 = vunpack.c.h.b16 %v131
    %v287 = vunpack.c.l.b16 %v132
    %v288 = vunpack.c.h.b16 %v132
    %v289 = vunpack.c.l.b16 %v133
    %v290 = vunpack.c.h.b16 %v133
    %v291 = vunpack.c.l.b16 %v134
    %v292 = vunpack.c.h.b16 %v134
    %v293 = vpack.c.b16 %v265, %v261
    %v294 = vpack.c.b16 %v266, %v262
    %v295 = vpack.c.b16 %v267, %v263
    %v296 = vpack.c.b16 %v268, %v264
    %v297 = vpack.c.b16 %v273, %v269
    %v298 = vpack.c.b16 %v274, %v270
    %v299 = vpack.c.b16 %v275, %v271
    %v300 = vpack.c.b16 %v276, %v272
    %v301 = vpack.c.b16 %v281, %v277
    %v302 = vpack.c.b16 %v282, %v278
    %v303 = vpack.c.b16 %v283, %v279
    %v304 = vpack.c.b16 %v284, %v280
    %v305 = vpack.c.b16 %v289, %v285
    %v306 = vpack.c.b16 %v290, %v286
    %v307 = vpack.c.b16 %v291, %v287
    %v308 = vpack.c.b16 %v292, %v288
    %v431 = vunpack.c.l.b16 %v135
    %v432 = vunpack.c.h.b16 %v135
    %v433 = vunpack.c.l.b16 %v136
    %v434 = vunpack.c.h.b16 %v136
    %v435 = vunpack.c.l.b16 %v137
    %v436 = vunpack.c.h.b16 %v137
    %v437 = vunpack.c.l.b16 %v138
    %v438 = vunpack.c.h.b16 %v138
    %v439 = vunpack.c.l.b16 %v139
    %v440 = vunpack.c.h.b16 %v139
    %v441 = vunpack.c.l.b16 %v140
    %v442 = vunpack.c.h.b16 %v140
    %v443 = vunpack.c.l.b16 %v141
    %v444 = vunpack.c.h.b16 %v141
    %v445 = vunpack.c.l.b16 %v142
    %v446 = vunpack.c.h.b16 %v142
    %v447 = vunpack.c.l.b16 %v143
    %v448 = vunpack.c.h.b16 %v143
    %v449 = vunpack.c.l.b16 %v144
    %v450 = vunpack.c.h.b16 %v144
    %v451 = vunpack.c.l.b16 %v145
    %v452 = vunpack.c.h.b16 %v145
    %v453 = vunpack.c.l.b16 %v146
    %v454 = vunpack.c.h.b16 %v146
    %v455 = vunpack.c.l.b16 %v147
    %v456 = vunpack.c.h.b16 %v147
    %v457 = vunpack.c.l.b16 %v148
    %v458 = vunpack.c.h.b16 %v148
    %v459 = vunpack.c.l.b16 %v149
    %v460 = vunpack.c.h.b16 %v149
    %v461 = vunpack.c.l.b16 %v150
    %v462 = vunpack.c.h.b16 %v150
    %v463 = vunpack.c.l.b16 %v151
    %v464 = vunpack.c.h.b16 %v151
    %v465 = vunpack.c.l.b16 %v152
    %v466 = vunpack.c.h.b16 %v152
    %v467 = vunpack.c.l.b16 %v153
    %v468 = vunpack.c.h.b16 %v153
    %v469 = vunpack.c.l.b16 %v154
    %v470 = vunpack.c.h.b16 %v154
    %v471 = vunpack.c.l.b16 %v155
    %v472 = vunpack.c.h.b16 %v155
    %v473 = vunpack.c.l.b16 %v156
    %v474 = vunpack.c.h.b16 %v156
    %v475 = vunpack.c.l.b16 %v157
    %v476 = vunpack.c.h.b16 %v157
    %v477 = vunpack.c.l.b16 %v158
    %v478 = vunpack.c.h.b16 %v158
    %v479 = vunpack.c.l.b16 %v159
    %v480 = vunpack.c.h.b16 %v159
    %v481 = vunpack.c.l.b16 %v160
    %v482 = vunpack.c.h.b16 %v160
    %v483 = vunpack.c.l.b16 %v161
    %v484 = vunpack.c.h.b16 %v161
    %v485 = vunpack.c.l.b16 %v162
    %v486 = vunpack.c.h.b16 %v162
    %v487 = vunpack.c.l.b16 %v163
    %v488 = vunpack.c.h.b16 %v163
    %v489 = vunpack.c.l.b16 %v164
    %v490 = vunpack.c.h.b16 %v164
    %v491 = vunpack.c.l.b16 %v165
    %v492 = vunpack.c.h.b16 %v165
    %v493 = vunpack.c.l.b16 %v166
    %v494 = vunpack.c.h.b16 %v166
    %v495 = vunpack.c.l.b16 %v167
    %v496 = vunpack.c.h.b16 %v167
    %v497 = vunpack.c.l.b16 %v168
    %v498 = vunpack.c.h.b16 %v168
    %v499 = vunpack.c.l.b16 %v169
    %v500 = vunpack.c.h.b16 %v169
    %v501 = vunpack.c.l.b16 %v170
    %v502 = vunpack.c.h.b16 %v170
    %v503 = vunpack.c.l.b16 %v171
    %v504 = vunpack.c.h.b16 %v171
    %v505 = vunpack.c.l.b16 %v172
    %v506 = vunpack.c.h.b16 %v172
    %v507 = vunpack.c.l.b16 %v173
    %v508 = vunpack.c.h.b16 %v173
    %v509 = vunpack.c.l.b16 %v174
    %v510 = vunpack.c.h.b16 %v174
    %v511 = vunpack.c.l.b16 %v175
    %v512 = vunpack.c.h.b16 %v175
    %v513 = vunpack.c.l.b16 %v176
    %v514 = vunpack.c.h.b16 %v176
    %v515 = vunpack.c.l.b16 %v177
    %v516 = vunpack.c.h.b16 %v177
    %v517 = vunpack.c.l.b16 %v178
    %v518 = vunpack.c.h.b16 %v178
    %v519 = vunpack.c.l.b16 %v179
    %v520 = vunpack.c.h.b16 %v179
    %v521 = vunpack.c.l.b16 %v180
    %v522 = vunpack.c.h.b16 %v180
    %v523 = vunpack.c.l.b16 %v181
    %v524 = vunpack.c.h.b16 %v181
    %v525 = vunpack.c.l.b16 %v182
    %v526 = vunpack.c.h.b16 %v182
    %v527 = vunpack.c.l.b16 %v183
    %v528 = vunpack.c.h.b16 %v183
    %v529 = vunpack.c.l.b16 %v184
    %v530 = vunpack.c.h.b16 %v184
    %v531 = vunpack.c.l.b16 %v185
    %v532 = vunpack.c.h.b16 %v185
    %v533 = vunpack.c.l.b16 %v186
    %v534 = vunpack.c.h.b16 %v186
    %v535 = vunpack.c.l.b16 %v187
    %v536 = vunpack.c.h.b16 %v187
    %v537 = vunpack.c.l.b16 %v188
    %v538 = vunpack.c.h.b16 %v188
    %v539 = vunpack.c.l.b16 %v189
    %v540 = vunpack.c.h.b16 %v189
    %v541 = vunpack.c.l.b16 %v190
    %v542 = vunpack.c.h.b16 %v190
    %v543 = vunpack.c.l.b16 %v191
    %v544 = vunpack.c.h.b16 %v191
    %v545 = vunpack.c.l.b16 %v192
    %v546 = vunpack.c.h.b16 %v192
    %v547 = vunpack.c.l.b16 %v193
    %v548 = vunpack.c.h.b16 %v193
    %v549 = vunpack.c.l.b16 %v194
    %v550 = vunpack.c.h.b16 %v194
    %v551 = vunpack.c.l.b16 %v195
    %v552 = vunpack.c.h.b16 %v195
    %v553 = vunpack.c.l.b16 %v196
    %v554 = vunpack.c.h.b16 %v196
    %v555 = vunpack.c.l.b16 %v197
    %v556 = vunpack.c.h.b16 %v197
    %v557 = vunpack.c.l.b16 %v198
    %v558 = vunpack.c.h.b16 %v198
    %v559 = vunpack.c.l.b16 %v199
    %v560 = vunpack.c.h.b16 %v199
    %v561 = vunpack.c.l.b16 %v200
    %v562 = vunpack.c.h.b16 %v200
    %v563 = vunpack.c.l.b16 %v201
    %v564 = vunpack.c.h.b16 %v201
    %v565 = vunpack.c.l.b16 %v202
    %v566 = vunpack.c.h.b16 %v202
    %v567 = vunpack.c.l.b16 %v203
    %v568 = vunpack.c.h.b16 %v203
    %v569 = vunpack.c.l.b16 %v204
    %v570 = vunpack.c.h.b16 %v204
    %v571 = vunpack.c.l.b16 %v205
    %v572 = vunpack.c.h.b16 %v205
    %v573 = vunpack.c.l.b16 %v206
    %v574 = vunpack.c.h.b16 %v206
    %v575 = vunpack.c.l.b16 %v207
    %v576 = vunpack.c.h.b16 %v207
    %v577 = vunpack.c.l.b16 %v208
    %v578 = vunpack.c.h.b16 %v208
    %v579 = vunpack.c.l.b16 %v209
    %v580 = vunpack.c.h.b16 %v209
    %v581 = vunpack.c.l.b16 %v210
    %v582 = vunpack.c.h.b16 %v210
    %v583 = vunpack.c.l.b16 %v211
    %v584 = vunpack.c.h.b16 %v211
    %v585 = vunpack.c.l.b16 %v212
    %v586 = vunpack.c.h.b16 %v212
    %v587 = vunpack.c.l.b16 %v213
    %v588 = vunpack.c.h.b16 %v213
    %v589 = vunpack.c.l.b16 %v214
    %v590 = vunpack.c.h.b16 %v214
    %v591 = vunpack.c.l.b16 %v215
    %v592 = vunpack.c.h.b16 %v215
    %v593 = vunpack.c.l.b16 %v216
    %v594 = vunpack.c.h.b16 %v216
    %v595 = vunpack.c.l.b16 %v217
    %v596 = vunpack.c.h.b16 %v217
    %v597 = vunpack.c.l.b16 %v218
    %v598 = vunpack.c.h.b16 %v218
    %v599 = vunpack.c.l.b16 %v219
    %v600 = vunpack.c.h.b16 %v219
    %v601 = vunpack.c.l.b16 %v220
    %v602 = vunpack.c.h.b16 %v220
    %v603 = vunpack.c.l.b16 %v221
    %v604 = vunpack.c.h.b16 %v221
    %v605 = vunpack.c.l.b16 %v222
    %v606 = vunpack.c.h.b16 %v222
    %v607 = vunpack.c.l.b16 %v223
    %v608 = vunpack.c.h.b16 %v223
    %v609 = vunpack.c.l.b16 %v224
    %v610 = vunpack.c.h.b16 %v224
    %v611 = vunpack.c.l.b16 %v225
    %v612 = vunpack.c.h.b16 %v225
    %v613 = vunpack.c.l.b16 %v226
    %v614 = vunpack.c.h.b16 %v226
    %v615 = vunpack.c.l.b16 %v227
    %v616 = vunpack.c.h.b16 %v227
    %v617 = vunpack.c.l.b16 %v228
    %v618 = vunpack.c.h.b16 %v228
    %v619 = vunpack.c.l.b16 %v229
    %v620 = vunpack.c.h.b16 %v229
    %v621 = vunpack.c.l.b16 %v230
    %v622 = vunpack.c.h.b16 %v230
    %v623 = vunpack.c.l.b16 %v231
    %v624 = vunpack.c.h.b16 %v231
    %v625 = vunpack.c.l.b16 %v232
    %v626 = vunpack.c.h.b16 %v232
    %v627 = vunpack.c.l.b16 %v233
    %v628 = vunpack.c.h.b16 %v233
    %v629 = vunpack.c.l.b16 %v234
    %v630 = vunpack.c.h.b16 %v234
    %v631 = vunpack.c.l.b16 %v235
    %v632 = vunpack.c.h.b16 %v235
    %v633 = vunpack.c.l.b16 %v236
    %v634 = vunpack.c.h.b16 %v236
    %v635 = vunpack.c.l.b16 %v237
    %v636 = vunpack.c.h.b16 %v237
    %v637 = vunpack.c.l.b16 %v238
    %v638 = vunpack.c.h.b16 %v238
    %v639 = vunpack.c.l.b16 %v239
    %v640 = vunpack.c.h.b16 %v239
    %v641 = vunpack.c.l.b16 %v240
    %v642 = vunpack.c.h.b16 %v240
    %v643 = vunpack.c.l.b16 %v241
    %v644 = vunpack.c.h.b16 %v241
    %v645 = vunpack.c.l.b16 %v242
    %v646 = vunpack.c.h.b16 %v242
    %v647 = vunpack.c.l.b16 %v243
    %v648 = vunpack.c.h.b16 %v243
    %v649 = vunpack.c.l.b16 %v244
    %v650 = vunpack.c.h.b16 %v244
    %v651 = vpack.c.b16 %v435, %v431
    %v652 = vpack.c.b16 %v436, %v432
    %v653 = vpack.c.b16 %v437, %v433
    %v654 = vpack.c.b16 %v438, %v434
    %v655 = vpack.c.b16 %v443, %v439
    %v656 = vpack.c.b16 %v444, %v440
    %v657 = vpack.c.b16 %v445, %v441
    %v658 = vpack.c.b16 %v446, %v442
    %v659 = vpack.c.b16 %v451, %v447
    %v660 = vpack.c.b16 %v452, %v448
    %v661 = vpack.c.b16 %v453, %v449
    %v662 = vpack.c.b16 %v454, %v450
    %v663 = vpack.c.b16 %v459, %v455
    %v664 = vpack.c.b16 %v460, %v456
    %v665 = vpack.c.b16 %v461, %v457
    %v666 = vpack.c.b16 %v462, %v458
    %v667 = vpack.c.b16 %v467, %v463
    %v668 = vpack.c.b16 %v468, %v464
    %v669 = vpack.c.b16 %v469, %v465
    %v670 = vpack.c.b16 %v470, %v466
    %v671 = vpack.c.b16 %v475, %v471
    %v672 = vpack.c.b16 %v476, %v472
    %v673 = vpack.c.b16 %v477, %v473
    %v674 = vpack.c.b16 %v478, %v474
    %v675 = vpack.c.b16 %v483, %v479
    %v676 = vpack.c.b16 %v484, %v480
    %v677 = vpack.c.b16 %v485, %v481
    %v678 = vpack.c.b16 %v486, %v482
    %v679 = vpack.c.b16 %v491, %v487
    %v680 = vpack.c.b16 %v492, %v488
    %v681 = vpack.c.b16 %v493, %v489
    %v682 = vpack.c.b16 %v494, %v490
    %v683 = vpack.c.b16 %v499, %v495
    %v684 = vpack.c.b16 %v500, %v496
    %v685 = vpack.c.b16 %v501, %v497
    %v686 = vpack.c.b16 %v502, %v498
    %v687 = vpack.c.b16 %v507, %v503
    %v688 = vpack.c.b16 %v508, %v504
    %v689 = vpack.c.b16 %v509, %v505
    %v690 = vpack.c.b16 %v510, %v506
    %v691 = vpack.c.b16 %v515, %v511
    %v692 = vpack.c.b16 %v516, %v512
    %v693 = vpack.c.b16 %v517, %v513
    %v694 = vpack.c.b16 %v518, %v514
    %v695 = vpack.c.b16 %v523, %v519
    %v696 = vpack.c.b16 %v524, %v520
    %v697 = vpack.c.b16 %v525, %v521
    %v698 = vpack.c.b16 %v526, %v522
    %v699 = vpack.c.b16 %v531, %v527
    %v700 = vpack.c.b16 %v532, %v528
    %v701 = vpack.c.b16 %v533, %v529
    %v702 = vpack.c.b16 %v534, %v530
    %v703 = vpack.c.b16 %v539, %v535
    %v704 = vpack.c.b16 %v540, %v536
    %v705 = vpack.c.b16 %v541, %v537
    %v706 = vpack.c.b16 %v542, %v538
    %v707 = vpack.c.b16 %v547, %v543
    %v708 = vpack.c.b16 %v548, %v544
    %v709 = vpack.c.b16 %v549, %v545
    %v710 = vpack.c.b16 %v550, %v546
    %v711 = vpack.c.b16 %v555, %v551
    %v712 = vpack.c.b16 %v556, %v552
    %v713 = vpack.c.b16 %v557, %v553
    %v714 = vpack.c.b16 %v558, %v554
    %v715 = vpack.c.b16 %v563, %v559
    %v716 = vpack.c.b16 %v564, %v560
    %v717 = vpack.c.b16 %v565, %v561
    %v718 = vpack.c.b16 %v566, %v562
    %v719 = vpack.c.b16 %v571, %v567
    %v720 = vpack.c.b16 %v572, %v568
    %v721 = vpack.c.b16 %v573, %v569
    %v722 = vpack.c.b16 %v574, %v570
    %v723 = vpack.c.b16 %v579, %v575
    %v724 = vpack.c.b16 %v580, %v576
    %v725 = vpack.c.b16 %v581, %v577
    %v726 = vpack.c.b16 %v582, %v578
    %v727 = vpack.c.b16 %v587, %v583
    %v728 = vpack.c.b16 %v588, %v584
    %v729 = vpack.c.b16 %v589, %v585
    %v730 = vpack.c.b16 %v590, %v586
    %v731 = vpack.c.b16 %v595, %v591
    %v732 = vpack.c.b16 %v596, %v592
    %v733 = vpack.c.b16 %v597, %v593
    %v734 = vpack.c.b16 %v598, %v594
    %v735 = vpack.c.b16 %v603, %v599
    %v736 = vpack.c.b16 %v604, %v600
    %v737 = vpack.c.b16 %v605, %v601
    %v738 = vpack.c.b16 %v606, %v602
    %v739 = vpack.c.b16 %v611, %v607
    %v740 = vpack.c.b16 %v612, %v608
    %v741 = vpack.c.b16 %v613, %v609
    %v742 = vpack.c.b16 %v614, %v610
    %v743 = vpack.c.b16 %v619, %v615
    %v744 = vpack.c.b16 %v620, %v616
    %v745 = vpack.c.b16 %v621, %v617
    %v746 = vpack.c.b16 %v622, %v618
    %v747 = vpack.c.b16 %v627, %v623
    %v748 = vpack.c.b16 %v628, %v624
    %v749 = vpack.c.b16 %v629, %v625
    %v750 = vpack.c.b16 %v630, %v626
    %v751 = vpack.c.b16 %v635, %v631
    %v752 = vpack.c.b16 %v636, %v632
    %v753 = vpack.c.b16 %v637, %v633
    %v754 = vpack.c.b16 %v638, %v634
    %v755 = vpack.c.b16 %v643, %v639
    %v756 = vpack.c.b16 %v644, %v640
    %v757 = vpack.c.b16 %v645, %v641
    %v758 = vpack.c.b16 %v646, %v642
    %v759 = vpack.c.b16 %v647, %v647
    %v760 = vpack.c.b16 %v648, %v648
    %v761 = vpack.c.b16 %v649, %v649
    %v762 = vpack.c.b16 %v650, %v650
    %vm871 = vcmask 457728
    %v873 = vsel %vm871, %v296, 0
    %v876 = vsel %vm871, %v300, 0
    %v879 = vsel %vm871, %v304, 0
    %v882 = vsel %vm871, %v308, 0
    %vm884 = vcmask 1043456
    %v886 = vsel %vm884, %v759, 0
    %v889 = vsel %vm884, %v760, 0
    %v892 = vsel %vm884, %v761, 0
    %v895 = vsel %vm884, %v762, 0
    %897 = vmatprep.subr.bf16.mxu0 %v652
    %898 = vmatpush1.bf16.msra.mxu0 %v651
    %899 = vmatprep.subr.bf16.mxu0 %v656
    %900 = vmatpush1.bf16.msra.mxu0 %v655
    %901 = vmatprep.subr.bf16.mxu0 %v660
    %902 = vmatpush1.bf16.msra.mxu0 %v659
    %903 = vmatprep.subr.bf16.mxu0 %v664
    %904 = vmatpush1.bf16.msra.mxu0 %v663
    %905 = vmatprep.subr.bf16.mxu0 %v668
    %906 = vmatpush1.bf16.msra.mxu0 %v667
    %907 = vmatprep.subr.bf16.mxu0 %v672
    %908 = vmatpush1.bf16.msra.mxu0 %v671
    %909 = vmatprep.subr.bf16.mxu0 %v676
    %910 = vmatpush1.bf16.msra.mxu0 %v675
    %911 = vmatprep.subr.bf16.mxu0 %v680
    %912 = vmatpush1.bf16.msra.mxu0 %v679
    %913 = vmatprep.subr.bf16.mxu0 %v684
    %914 = vmatpush1.bf16.msra.mxu0 %v683
    %915 = vmatprep.subr.bf16.mxu0 %v688
    %916 = vmatpush1.bf16.msra.mxu0 %v687
    %917 = vmatprep.subr.bf16.mxu0 %v692
    %918 = vmatpush1.bf16.msra.mxu0 %v691
    %919 = vmatprep.subr.bf16.mxu0 %v696
    %920 = vmatpush1.bf16.msra.mxu0 %v695
    %921 = vmatprep.subr.bf16.mxu0 %v700
    %922 = vmatpush1.bf16.msra.mxu0 %v699
    %923 = vmatprep.subr.bf16.mxu0 %v704
    %924 = vmatpush1.bf16.msra.mxu0 %v703
    %925 = vmatprep.subr.bf16.mxu0 %v708
    %926 = vmatpush1.bf16.msra.mxu0 %v707
    %927 = vmatprep.subr.bf16.mxu0 %v712
    %928 = vmatpush1.bf16.msra.mxu0 %v711
    %929 = vmatprep.mubr.bf16.mxu0 %v294
    %930 = vmatmul.mubr.bf16.gmra.mrb[0].mxu0 %v293
    %v931 = vpop.f32.mrb[0].mxu0
    %v932 = vadd.f32 0.0, %v931
    %v933 = vpop.f32.mrb[0].mxu0
    %v934 = vadd.f32 0.0, %v933
    %v935 = vpop.f32.mrb[0].mxu0
    %v936 = vadd.f32 0.0, %v935
    %v937 = vpop.f32.mrb[0].mxu0
    %v938 = vadd.f32 0.0, %v937
    %939 = vmatprep.mubr.bf16.mxu0 %v298
    %940 = vmatmul.mubr.bf16.gmra.mrb[0].mxu0 %v297
    %v941 = vpop.f32.mrb[0].mxu0
    %v942 = vadd.f32 0.0, %v941
    %v943 = vpop.f32.mrb[0].mxu0
    %v944 = vadd.f32 0.0, %v943
    %v945 = vpop.f32.mrb[0].mxu0
    %v946 = vadd.f32 0.0, %v945
    %v947 = vpop.f32.mrb[0].mxu0
    %v948 = vadd.f32 0.0, %v947
    %949 = vmatprep.mubr.bf16.mxu0 %v302
    %950 = vmatmul.mubr.bf16.gmra.mrb[0].mxu0 %v301
    %v951 = vpop.f32.mrb[0].mxu0
    %v952 = vadd.f32 0.0, %v951
    %v953 = vpop.f32.mrb[0].mxu0
    %v954 = vadd.f32 0.0, %v953
    %v955 = vpop.f32.mrb[0].mxu0
    %v956 = vadd.f32 0.0, %v955
    %v957 = vpop.f32.mrb[0].mxu0
    %v958 = vadd.f32 0.0, %v957
    %959 = vmatprep.mubr.bf16.mxu0 %v306
    %960 = vmatmul.mubr.bf16.gmra.mrb[0].mxu0 %v305
    %v961 = vpop.f32.mrb[0].mxu0
    %v962 = vadd.f32 0.0, %v961
    %v963 = vpop.f32.mrb[0].mxu0
    %v964 = vadd.f32 0.0, %v963
    %v965 = vpop.f32.mrb[0].mxu0
    %v966 = vadd.f32 0.0, %v965
    %v967 = vpop.f32.mrb[0].mxu0
    %v968 = vadd.f32 0.0, %v967
    %969 = vdwg.mxu0
    %970 = vmatprep.subr.bf16.mxu0 %v716
    %971 = vmatpush1.bf16.msra.mxu0 %v715
    %972 = vmatprep.subr.bf16.mxu0 %v720
    %973 = vmatpush1.bf16.msra.mxu0 %v719
    %974 = vmatprep.subr.bf16.mxu0 %v724
    %975 = vmatpush1.bf16.msra.mxu0 %v723
    %976 = vmatprep.subr.bf16.mxu0 %v728
    %977 = vmatpush1.bf16.msra.mxu0 %v727
    %978 = vmatprep.subr.bf16.mxu0 %v732
    %979 = vmatpush1.bf16.msra.mxu0 %v731
    %980 = vmatprep.subr.bf16.mxu0 %v736
    %981 = vmatpush1.bf16.msra.mxu0 %v735
    %982 = vmatprep.subr.bf16.mxu0 %v740
    %983 = vmatpush1.bf16.msra.mxu0 %v739
    %984 = vmatprep.subr.bf16.mxu0 %v744
    %985 = vmatpush1.bf16.msra.mxu0 %v743
    %986 = vmatprep.subr.bf16.mxu0 %v748
    %987 = vmatpush1.bf16.msra.mxu0 %v747
    %988 = vmatprep.subr.bf16.mxu0 %v752
    %989 = vmatpush1.bf16.msra.mxu0 %v751
    %990 = vmatprep.subr.bf16.mxu0 %v756
    %991 = vmatpush1.bf16.msra.mxu0 %v755
    %992 = vmatprep.subr.bf16.mxu0 %v889
    %993 = vmatpush1.bf16.msra.mxu0 %v886
    %994 = vmatprep.subr.bf16.mxu0 0
    %995 = vmatpush1.bf16.msra.mxu0 0
    %996 = vmatprep.subr.bf16.mxu0 0
    %997 = vmatpush1.bf16.msra.mxu0 0
    %998 = vmatprep.subr.bf16.mxu0 0
    %999 = vmatpush1.bf16.msra.mxu0 0
    %1000 = vmatprep.subr.bf16.mxu0 0
    %1001 = vmatpush1.bf16.msra.mxu0 0
    %1002 = vmatprep.mubr.bf16.mxu0 %v873
    %1003 = vmatmul.mubr.bf16.gmra.mrb[0].mxu0 %v295
    %v1004 = vpop.f32.mrb[0].mxu0
    %v1005 = vadd.f32 %v932, %v1004
    %v1006 = vpop.f32.mrb[0].mxu0
    %v1007 = vadd.f32 %v934, %v1006
    %v1008 = vpop.f32.mrb[0].mxu0
    %v1009 = vadd.f32 %v936, %v1008
    %v1010 = vpop.f32.mrb[0].mxu0
    %v1011 = vadd.f32 %v938, %v1010
    %1012 = vmatprep.mubr.bf16.mxu0 %v876
    %1013 = vmatmul.mubr.bf16.gmra.mrb[0].mxu0 %v299
    %v1014 = vpop.f32.mrb[0].mxu0
    %v1015 = vadd.f32 %v942, %v1014
    %v1016 = vpop.f32.mrb[0].mxu0
    %v1017 = vadd.f32 %v944, %v1016
    %v1018 = vpop.f32.mrb[0].mxu0
    %v1019 = vadd.f32 %v946, %v1018
    %v1020 = vpop.f32.mrb[0].mxu0
    %v1021 = vadd.f32 %v948, %v1020
    %1022 = vmatprep.mubr.bf16.mxu0 %v879
    %1023 = vmatmul.mubr.bf16.gmra.mrb[0].mxu0 %v303
    %v1024 = vpop.f32.mrb[0].mxu0
    %v1025 = vadd.f32 %v952, %v1024
    %v1026 = vpop.f32.mrb[0].mxu0
    %v1027 = vadd.f32 %v954, %v1026
    %v1028 = vpop.f32.mrb[0].mxu0
    %v1029 = vadd.f32 %v956, %v1028
    %v1030 = vpop.f32.mrb[0].mxu0
    %v1031 = vadd.f32 %v958, %v1030
    %1032 = vmatprep.mubr.bf16.mxu0 %v882
    %1033 = vmatmul.mubr.bf16.gmra.mrb[0].mxu0 %v307
    %v1034 = vpop.f32.mrb[0].mxu0
    %v1035 = vadd.f32 %v962, %v1034
    %v1036 = vpop.f32.mrb[0].mxu0
    %v1037 = vadd.f32 %v964, %v1036
    %v1038 = vpop.f32.mrb[0].mxu0
    %v1039 = vadd.f32 %v966, %v1038
    %v1040 = vpop.f32.mrb[0].mxu0
    %v1041 = vadd.f32 %v968, %v1040
    %1042 = vdwg.mxu0
    %1043 = vmatprep.subr.bf16.mxu0 %v654
    %1044 = vmatpush1.bf16.msra.mxu0 %v653
    %1045 = vmatprep.subr.bf16.mxu0 %v658
    %1046 = vmatpush1.bf16.msra.mxu0 %v657
    %1047 = vmatprep.subr.bf16.mxu0 %v662
    %1048 = vmatpush1.bf16.msra.mxu0 %v661
    %1049 = vmatprep.subr.bf16.mxu0 %v666
    %1050 = vmatpush1.bf16.msra.mxu0 %v665
    %1051 = vmatprep.subr.bf16.mxu0 %v670
    %1052 = vmatpush1.bf16.msra.mxu0 %v669
    %1053 = vmatprep.subr.bf16.mxu0 %v674
    %1054 = vmatpush1.bf16.msra.mxu0 %v673
    %1055 = vmatprep.subr.bf16.mxu0 %v678
    %1056 = vmatpush1.bf16.msra.mxu0 %v677
    %1057 = vmatprep.subr.bf16.mxu0 %v682
    %1058 = vmatpush1.bf16.msra.mxu0 %v681
    %1059 = vmatprep.subr.bf16.mxu0 %v686
    %1060 = vmatpush1.bf16.msra.mxu0 %v685
    %1061 = vmatprep.subr.bf16.mxu0 %v690
    %1062 = vmatpush1.bf16.msra.mxu0 %v689
    %1063 = vmatprep.subr.bf16.mxu0 %v694
    %1064 = vmatpush1.bf16.msra.mxu0 %v693
    %1065 = vmatprep.subr.bf16.mxu0 %v698
    %1066 = vmatpush1.bf16.msra.mxu0 %v697
    %1067 = vmatprep.subr.bf16.mxu0 %v702
    %1068 = vmatpush1.bf16.msra.mxu0 %v701
    %1069 = vmatprep.subr.bf16.mxu0 %v706
    %1070 = vmatpush1.bf16.msra.mxu0 %v705
    %1071 = vmatprep.subr.bf16.mxu0 %v710
    %1072 = vmatpush1.bf16.msra.mxu0 %v709
    %1073 = vmatprep.subr.bf16.mxu0 %v714
    %1074 = vmatpush1.bf16.msra.mxu0 %v713
    %1075 = vmatprep.mubr.bf16.mxu0 %v294
    %1076 = vmatmul.mubr.bf16.gmra.mrb[0].mxu0 %v293
    %v1077 = vpop.f32.mrb[0].mxu0
    %v1078 = vadd.f32 0.0, %v1077
    %v1079 = vpop.f32.mrb[0].mxu0
    %v1080 = vadd.f32 0.0, %v1079
    %v1081 = vpop.f32.mrb[0].mxu0
    %v1082 = vadd.f32 0.0, %v1081
    %v1083 = vpop.f32.mrb[0].mxu0
    %v1084 = vadd.f32 0.0, %v1083
    %1085 = vmatprep.mubr.bf16.mxu0 %v298
    %1086 = vmatmul.mubr.bf16.gmra.mrb[0].mxu0 %v297
    %v1087 = vpop.f32.mrb[0].mxu0
    %v1088 = vadd.f32 0.0, %v1087
    %v1089 = vpop.f32.mrb[0].mxu0
    %v1090 = vadd.f32 0.0, %v1089
    %v1091 = vpop.f32.mrb[0].mxu0
    %v1092 = vadd.f32 0.0, %v1091
    %v1093 = vpop.f32.mrb[0].mxu0
    %v1094 = vadd.f32 0.0, %v1093
    %1095 = vmatprep.mubr.bf16.mxu0 %v302
    %1096 = vmatmul.mubr.bf16.gmra.mrb[0].mxu0 %v301
    %v1097 = vpop.f32.mrb[0].mxu0
    %v1098 = vadd.f32 0.0, %v1097
    %v1099 = vpop.f32.mrb[0].mxu0
    %v1100 = vadd.f32 0.0, %v1099
    %v1101 = vpop.f32.mrb[0].mxu0
    %v1102 = vadd.f32 0.0, %v1101
    %v1103 = vpop.f32.mrb[0].mxu0
    %v1104 = vadd.f32 0.0, %v1103
    %1105 = vmatprep.mubr.bf16.mxu0 %v306
    %1106 = vmatmul.mubr.bf16.gmra.mrb[0].mxu0 %v305
    %v1107 = vpop.f32.mrb[0].mxu0
    %v1108 = vadd.f32 0.0, %v1107
    %v1109 = vpop.f32.mrb[0].mxu0
    %v1110 = vadd.f32 0.0, %v1109
    %v1111 = vpop.f32.mrb[0].mxu0
    %v1112 = vadd.f32 0.0, %v1111
    %v1113 = vpop.f32.mrb[0].mxu0
    %v1114 = vadd.f32 0.0, %v1113
    %1115 = vdwg.mxu0
    %1116 = vmatprep.subr.bf16.mxu0 %v718
    %1117 = vmatpush1.bf16.msra.mxu0 %v717
    %1118 = vmatprep.subr.bf16.mxu0 %v722
    %1119 = vmatpush1.bf16.msra.mxu0 %v721
    %1120 = vmatprep.subr.bf16.mxu0 %v726
    %1121 = vmatpush1.bf16.msra.mxu0 %v725
    %1122 = vmatprep.subr.bf16.mxu0 %v730
    %1123 = vmatpush1.bf16.msra.mxu0 %v729
    %1124 = vmatprep.subr.bf16.mxu0 %v734
    %1125 = vmatpush1.bf16.msra.mxu0 %v733
    %1126 = vmatprep.subr.bf16.mxu0 %v738
    %1127 = vmatpush1.bf16.msra.mxu0 %v737
    %1128 = vmatprep.subr.bf16.mxu0 %v742
    %1129 = vmatpush1.bf16.msra.mxu0 %v741
    %1130 = vmatprep.subr.bf16.mxu0 %v746
    %1131 = vmatpush1.bf16.msra.mxu0 %v745
    %1132 = vmatprep.subr.bf16.mxu0 %v750
    %1133 = vmatpush1.bf16.msra.mxu0 %v749
    %1134 = vmatprep.subr.bf16.mxu0 %v754
    %1135 = vmatpush1.bf16.msra.mxu0 %v753
    %1136 = vmatprep.subr.bf16.mxu0 %v758
    %1137 = vmatpush1.bf16.msra.mxu0 %v757
    %1138 = vmatprep.subr.bf16.mxu0 %v895
    %1139 = vmatpush1.bf16.msra.mxu0 %v892
    %1140 = vmatprep.subr.bf16.mxu0 0
    %1141 = vmatpush1.bf16.msra.mxu0 0
    %1142 = vmatprep.subr.bf16.mxu0 0
    %1143 = vmatpush1.bf16.msra.mxu0 0
    %1144 = vmatprep.subr.bf16.mxu0 0
    %1145 = vmatpush1.bf16.msra.mxu0 0
    %1146 = vmatprep.subr.bf16.mxu0 0
    %1147 = vmatpush1.bf16.msra.mxu0 0
    %1148 = vmatprep.mubr.bf16.mxu0 %v873
    %1149 = vmatmul.mubr.bf16.gmra.mrb[0].mxu0 %v295
    %v1150 = vpop.f32.mrb[0].mxu0
    %v1151 = vadd.f32 %v1078, %v1150
    %v1152 = vpop.f32.mrb[0].mxu0
    %v1153 = vadd.f32 %v1080, %v1152
    %v1154 = vpop.f32.mrb[0].mxu0
    %v1155 = vadd.f32 %v1082, %v1154
    %v1156 = vpop.f32.mrb[0].mxu0
    %v1157 = vadd.f32 %v1084, %v1156
    %1158 = vmatprep.mubr.bf16.mxu0 %v876
    %1159 = vmatmul.mubr.bf16.gmra.mrb[0].mxu0 %v299
    %v1160 = vpop.f32.mrb[0].mxu0
    %v1161 = vadd.f32 %v1088, %v1160
    %v1162 = vpop.f32.mrb[0].mxu0
    %v1163 = vadd.f32 %v1090, %v1162
    %v1164 = vpop.f32.mrb[0].mxu0
    %v1165 = vadd.f32 %v1092, %v1164
    %v1166 = vpop.f32.mrb[0].mxu0
    %v1167 = vadd.f32 %v1094, %v1166
    %1168 = vmatprep.mubr.bf16.mxu0 %v879
    %1169 = vmatmul.mubr.bf16.gmra.mrb[0].mxu0 %v303
    %v1170 = vpop.f32.mrb[0].mxu0
    %v1171 = vadd.f32 %v1098, %v1170
    %v1172 = vpop.f32.mrb[0].mxu0
    %v1173 = vadd.f32 %v1100, %v1172
    %v1174 = vpop.f32.mrb[0].mxu0
    %v1175 = vadd.f32 %v1102, %v1174
    %v1176 = vpop.f32.mrb[0].mxu0
    %v1177 = vadd.f32 %v1104, %v1176
    %1178 = vmatprep.mubr.bf16.mxu0 %v882
    %1179 = vmatmul.mubr.bf16.gmra.mrb[0].mxu0 %v307
    %v1180 = vpop.f32.mrb[0].mxu0
    %v1181 = vadd.f32 %v1108, %v1180
    %v1182 = vpop.f32.mrb[0].mxu0
    %v1183 = vadd.f32 %v1110, %v1182
    %v1184 = vpop.f32.mrb[0].mxu0
    %v1185 = vadd.f32 %v1112, %v1184
    %v1186 = vpop.f32.mrb[0].mxu0
    %v1187 = vadd.f32 %v1114, %v1186
    %1188 = vdwg.mxu0
    %v1189 = vmul.f32 %v1005, %v1005
    %v1190 = vmul.f32 %v1007, %v1007
    %v1191 = vmul.f32 %v1009, %v1009
    %v1192 = vmul.f32 %v1011, %v1011
    %v1193 = vmul.f32 %v1015, %v1015
    %v1194 = vmul.f32 %v1017, %v1017
    %v1195 = vmul.f32 %v1019, %v1019
    %v1196 = vmul.f32 %v1021, %v1021
    %v1197 = vmul.f32 %v1025, %v1025
    %v1198 = vmul.f32 %v1027, %v1027
    %v1199 = vmul.f32 %v1029, %v1029
    %v1200 = vmul.f32 %v1031, %v1031
    %v1201 = vmul.f32 %v1035, %v1035
    %v1202 = vmul.f32 %v1037, %v1037
    %v1203 = vmul.f32 %v1039, %v1039
    %v1204 = vmul.f32 %v1041, %v1041
    %v1205 = vmul.f32 %v1151, %v1151
    %v1206 = vmul.f32 %v1153, %v1153
    %v1207 = vmul.f32 %v1155, %v1155
    %v1208 = vmul.f32 %v1157, %v1157
    %v1209 = vmul.f32 %v1161, %v1161
    %v1210 = vmul.f32 %v1163, %v1163
    %v1211 = vmul.f32 %v1165, %v1165
    %v1212 = vmul.f32 %v1167, %v1167
    %v1213 = vmul.f32 %v1171, %v1171
    %v1214 = vmul.f32 %v1173, %v1173
    %v1215 = vmul.f32 %v1175, %v1175
    %v1216 = vmul.f32 %v1177, %v1177
    %v1217 = vmul.f32 %v1181, %v1181
    %v1218 = vmul.f32 %v1183, %v1183
    %v1219 = vmul.f32 %v1185, %v1185
    %v1220 = vmul.f32 %v1187, %v1187
    %v1221 = vadd.f32 %v1189, %v1205
    %v1222 = vadd.f32 %v1190, %v1206
    %v1223 = vadd.f32 %v1191, %v1207
    %v1224 = vadd.f32 %v1192, %v1208
    %v1225 = vadd.f32 %v1193, %v1209
    %v1226 = vadd.f32 %v1194, %v1210
    %v1227 = vadd.f32 %v1195, %v1211
    %v1228 = vadd.f32 %v1196, %v1212
    %v1229 = vadd.f32 %v1197, %v1213
    %v1230 = vadd.f32 %v1198, %v1214
    %v1231 = vadd.f32 %v1199, %v1215
    %v1232 = vadd.f32 %v1200, %v1216
    %v1233 = vadd.f32 %v1201, %v1217
    %v1234 = vadd.f32 %v1202, %v1218
    %v1235 = vadd.f32 %v1203, %v1219
    %v1236 = vadd.f32 %v1204, %v1220
    %v1237 = vrsqrt.pop %v1221
    %v1238 = vmul.f32 %v1221, %v1237
    %vm1239 = vcmp.eq.f32.partialorder %v1221, inf
    %v1240 = vsel %vm1239, %v1221, %v1238
    %vm1241 = vcmp.eq.f32.partialorder %v1221, 0.0
    %v1242 = vand.u32 %v1221, 2147483648
    %v1243 = vsel %vm1241, %v1242, %v1240
    %v1244 = vrsqrt.pop %v1222
    %v1245 = vmul.f32 %v1222, %v1244
    %vm1246 = vcmp.eq.f32.partialorder %v1222, inf
    %v1247 = vsel %vm1246, %v1222, %v1245
    %vm1248 = vcmp.eq.f32.partialorder %v1222, 0.0
    %v1249 = vand.u32 %v1222, 2147483648
    %v1250 = vsel %vm1248, %v1249, %v1247
    %v1251 = vrsqrt.pop %v1223
    %v1252 = vmul.f32 %v1223, %v1251
    %vm1253 = vcmp.eq.f32.partialorder %v1223, inf
    %v1254 = vsel %vm1253, %v1223, %v1252
    %vm1255 = vcmp.eq.f32.partialorder %v1223, 0.0
    %v1256 = vand.u32 %v1223, 2147483648
    %v1257 = vsel %vm1255, %v1256, %v1254
    %v1258 = vrsqrt.pop %v1224
    %v1259 = vmul.f32 %v1224, %v1258
    %vm1260 = vcmp.eq.f32.partialorder %v1224, inf
    %v1261 = vsel %vm1260, %v1224, %v1259
    %vm1262 = vcmp.eq.f32.partialorder %v1224, 0.0
    %v1263 = vand.u32 %v1224, 2147483648
    %v1264 = vsel %vm1262, %v1263, %v1261
    %v1265 = vrsqrt.pop %v1225
    %v1266 = vmul.f32 %v1225, %v1265
    %vm1267 = vcmp.eq.f32.partialorder %v1225, inf
    %v1268 = vsel %vm1267, %v1225, %v1266
    %vm1269 = vcmp.eq.f32.partialorder %v1225, 0.0
    %v1270 = vand.u32 %v1225, 2147483648
    %v1271 = vsel %vm1269, %v1270, %v1268
    %v1272 = vrsqrt.pop %v1226
    %v1273 = vmul.f32 %v1226, %v1272
    %vm1274 = vcmp.eq.f32.partialorder %v1226, inf
    %v1275 = vsel %vm1274, %v1226, %v1273
    %vm1276 = vcmp.eq.f32.partialorder %v1226, 0.0
    %v1277 = vand.u32 %v1226, 2147483648
    %v1278 = vsel %vm1276, %v1277, %v1275
    %v1279 = vrsqrt.pop %v1227
    %v1280 = vmul.f32 %v1227, %v1279
    %vm1281 = vcmp.eq.f32.partialorder %v1227, inf
    %v1282 = vsel %vm1281, %v1227, %v1280
    %vm1283 = vcmp.eq.f32.partialorder %v1227, 0.0
    %v1284 = vand.u32 %v1227, 2147483648
    %v1285 = vsel %vm1283, %v1284, %v1282
    %v1286 = vrsqrt.pop %v1228
    %v1287 = vmul.f32 %v1228, %v1286
    %vm1288 = vcmp.eq.f32.partialorder %v1228, inf
    %v1289 = vsel %vm1288, %v1228, %v1287
    %vm1290 = vcmp.eq.f32.partialorder %v1228, 0.0
    %v1291 = vand.u32 %v1228, 2147483648
    %v1292 = vsel %vm1290, %v1291, %v1289
    %v1293 = vrsqrt.pop %v1229
    %v1294 = vmul.f32 %v1229, %v1293
    %vm1295 = vcmp.eq.f32.partialorder %v1229, inf
    %v1296 = vsel %vm1295, %v1229, %v1294
    %vm1297 = vcmp.eq.f32.partialorder %v1229, 0.0
    %v1298 = vand.u32 %v1229, 2147483648
    %v1299 = vsel %vm1297, %v1298, %v1296
    %v1300 = vrsqrt.pop %v1230
    %v1301 = vmul.f32 %v1230, %v1300
    %vm1302 = vcmp.eq.f32.partialorder %v1230, inf
    %v1303 = vsel %vm1302, %v1230, %v1301
    %vm1304 = vcmp.eq.f32.partialorder %v1230, 0.0
    %v1305 = vand.u32 %v1230, 2147483648
    %v1306 = vsel %vm1304, %v1305, %v1303
    %v1307 = vrsqrt.pop %v1231
    %v1308 = vmul.f32 %v1231, %v1307
    %vm1309 = vcmp.eq.f32.partialorder %v1231, inf
    %v1310 = vsel %vm1309, %v1231, %v1308
    %vm1311 = vcmp.eq.f32.partialorder %v1231, 0.0
    %v1312 = vand.u32 %v1231, 2147483648
    %v1313 = vsel %vm1311, %v1312, %v1310
    %v1314 = vrsqrt.pop %v1232
    %v1315 = vmul.f32 %v1232, %v1314
    %vm1316 = vcmp.eq.f32.partialorder %v1232, inf
    %v1317 = vsel %vm1316, %v1232, %v1315
    %vm1318 = vcmp.eq.f32.partialorder %v1232, 0.0
    %v1319 = vand.u32 %v1232, 2147483648
    %v1320 = vsel %vm1318, %v1319, %v1317
    %v1321 = vrsqrt.pop %v1233
    %v1322 = vmul.f32 %v1233, %v1321
    %vm1323 = vcmp.eq.f32.partialorder %v1233, inf
    %v1324 = vsel %vm1323, %v1233, %v1322
    %vm1325 = vcmp.eq.f32.partialorder %v1233, 0.0
    %v1326 = vand.u32 %v1233, 2147483648
    %v1327 = vsel %vm1325, %v1326, %v1324
    %v1328 = vrsqrt.pop %v1234
    %v1329 = vmul.f32 %v1234, %v1328
    %vm1330 = vcmp.eq.f32.partialorder %v1234, inf
    %v1331 = vsel %vm1330, %v1234, %v1329
    %vm1332 = vcmp.eq.f32.partialorder %v1234, 0.0
    %v1333 = vand.u32 %v1234, 2147483648
    %v1334 = vsel %vm1332, %v1333, %v1331
    %v1335 = vrsqrt.pop %v1235
    %v1336 = vmul.f32 %v1235, %v1335
    %vm1337 = vcmp.eq.f32.partialorder %v1235, inf
    %v1338 = vsel %vm1337, %v1235, %v1336
    %vm1339 = vcmp.eq.f32.partialorder %v1235, 0.0
    %v1340 = vand.u32 %v1235, 2147483648
    %v1341 = vsel %vm1339, %v1340, %v1338
    %v1342 = vrsqrt.pop %v1236
    %v1343 = vmul.f32 %v1236, %v1342
    %vm1344 = vcmp.eq.f32.partialorder %v1236, inf
    %v1345 = vsel %vm1344, %v1236, %v1343
    %vm1346 = vcmp.eq.f32.partialorder %v1236, 0.0
    %v1347 = vand.u32 %v1236, 2147483648
    %v1348 = vsel %vm1346, %v1347, %v1345
    %v1349 = vcombine.low %v1243, %v1271
    %v1350 = vcombine.high %v1243, %v1271
    %v1352 = vunpack.c.l.s4 1983009808
    %v1353 = vunpack.c.0.s8 %v1352
    %v1354 = vlaneseq
    %v1355 = vshrl.u32 %v1354, 7
    %v1356 = vsub.s32 %v1353, %v1355
    %v1357 = vrot.slane %v1349, %v1356
    %v1359 = vunpack.c.l.s4 1983009808
    %v1360 = vunpack.c.0.s8 %v1359
    %v1361 = vlaneseq
    %v1362 = vshrl.u32 %v1361, 7
    %v1363 = vsub.s32 %v1360, %v1362
    %v1364 = vrot.slane %v1350, %v1363
    %v1365 = vcombine.low %v1257, %v1285
    %v1366 = vcombine.high %v1257, %v1285
    %v1368 = vunpack.c.l.s4 1983009808
    %v1369 = vunpack.c.0.s8 %v1368
    %v1370 = vlaneseq
    %v1371 = vshrl.u32 %v1370, 7
    %v1372 = vsub.s32 %v1369, %v1371
    %v1373 = vrot.slane %v1365, %v1372
    %v1375 = vunpack.c.l.s4 1983009808
    %v1376 = vunpack.c.0.s8 %v1375
    %v1377 = vlaneseq
    %v1378 = vshrl.u32 %v1377, 7
    %v1379 = vsub.s32 %v1376, %v1378
    %v1380 = vrot.slane %v1366, %v1379
    %v1381 = vcombine.low %v1299, %v1327
    %v1382 = vcombine.high %v1299, %v1327
    %v1384 = vunpack.c.l.s4 1983009808
    %v1385 = vunpack.c.0.s8 %v1384
    %v1386 = vlaneseq
    %v1387 = vshrl.u32 %v1386, 7
    %v1388 = vsub.s32 %v1385, %v1387
    %v1389 = vrot.slane %v1381, %v1388
    %v1391 = vunpack.c.l.s4 1983009808
    %v1392 = vunpack.c.0.s8 %v1391
    %v1393 = vlaneseq
    %v1394 = vshrl.u32 %v1393, 7
    %v1395 = vsub.s32 %v1392, %v1394
    %v1396 = vrot.slane %v1382, %v1395
    %v1397 = vcombine.low %v1313, %v1341
    %v1398 = vcombine.high %v1313, %v1341
    %v1400 = vunpack.c.l.s4 1983009808
    %v1401 = vunpack.c.0.s8 %v1400
    %v1402 = vlaneseq
    %v1403 = vshrl.u32 %v1402, 7
    %v1404 = vsub.s32 %v1401, %v1403
    %v1405 = vrot.slane %v1397, %v1404
    %v1407 = vunpack.c.l.s4 1983009808
    %v1408 = vunpack.c.0.s8 %v1407
    %v1409 = vlaneseq
    %v1410 = vshrl.u32 %v1409, 7
    %v1411 = vsub.s32 %v1408, %v1410
    %v1412 = vrot.slane %v1398, %v1411
    %v1413 = vcombine.low %v1357, %v1373
    %v1414 = vcombine.high %v1357, %v1373
    %v1416 = vunpack.c.l.s4 1934713408
    %v1417 = vunpack.c.0.s8 %v1416
    %v1418 = vlaneseq
    %v1419 = vshrl.u32 %v1418, 7
    %v1420 = vsub.s32 %v1417, %v1419
    %v1421 = vrot.slane %v1413, %v1420
    %v1423 = vunpack.c.l.s4 1934713408
    %v1424 = vunpack.c.0.s8 %v1423
    %v1425 = vlaneseq
    %v1426 = vshrl.u32 %v1425, 7
    %v1427 = vsub.s32 %v1424, %v1426
    %v1428 = vrot.slane %v1414, %v1427
    %v1429 = vcombine.low %v1364, %v1380
    %v1430 = vcombine.high %v1364, %v1380
    %v1432 = vunpack.c.l.s4 1934713408
    %v1433 = vunpack.c.0.s8 %v1432
    %v1434 = vlaneseq
    %v1435 = vshrl.u32 %v1434, 7
    %v1436 = vsub.s32 %v1433, %v1435
    %v1437 = vrot.slane %v1429, %v1436
    %v1439 = vunpack.c.l.s4 1934713408
    %v1440 = vunpack.c.0.s8 %v1439
    %v1441 = vlaneseq
    %v1442 = vshrl.u32 %v1441, 7
    %v1443 = vsub.s32 %v1440, %v1442
    %v1444 = vrot.slane %v1430, %v1443
    %v1445 = vcombine.low %v1389, %v1405
    %v1446 = vcombine.high %v1389, %v1405
    %v1448 = vunpack.c.l.s4 1934713408
    %v1449 = vunpack.c.0.s8 %v1448
    %v1450 = vlaneseq
    %v1451 = vshrl.u32 %v1450, 7
    %v1452 = vsub.s32 %v1449, %v1451
    %v1453 = vrot.slane %v1445, %v1452
    %v1455 = vunpack.c.l.s4 1934713408
    %v1456 = vunpack.c.0.s8 %v1455
    %v1457 = vlaneseq
    %v1458 = vshrl.u32 %v1457, 7
    %v1459 = vsub.s32 %v1456, %v1458
    %v1460 = vrot.slane %v1446, %v1459
    %v1461 = vcombine.low %v1396, %v1412
    %v1462 = vcombine.high %v1396, %v1412
    %v1464 = vunpack.c.l.s4 1934713408
    %v1465 = vunpack.c.0.s8 %v1464
    %v1466 = vlaneseq
    %v1467 = vshrl.u32 %v1466, 7
    %v1468 = vsub.s32 %v1465, %v1467
    %v1469 = vrot.slane %v1461, %v1468
    %v1471 = vunpack.c.l.s4 1934713408
    %v1472 = vunpack.c.0.s8 %v1471
    %v1473 = vlaneseq
    %v1474 = vshrl.u32 %v1473, 7
    %v1475 = vsub.s32 %v1472, %v1474
    %v1476 = vrot.slane %v1462, %v1475
    %v1477 = vcombine.low %v1421, %v1453
    %v1478 = vcombine.high %v1421, %v1453
    %v1479 = vcombine.low %v1428, %v1460
    %v1480 = vcombine.high %v1428, %v1460
    %v1481 = vcombine.low %v1437, %v1469
    %v1482 = vcombine.high %v1437, %v1469
    %v1483 = vcombine.low %v1444, %v1476
    %v1484 = vcombine.high %v1444, %v1476
    %v1485 = vcombine.low %v1250, %v1278
    %v1486 = vcombine.high %v1250, %v1278
    %v1488 = vunpack.c.l.s4 1983009808
    %v1489 = vunpack.c.0.s8 %v1488
    %v1490 = vlaneseq
    %v1491 = vshrl.u32 %v1490, 7
    %v1492 = vsub.s32 %v1489, %v1491
    %v1493 = vrot.slane %v1485, %v1492
    %v1495 = vunpack.c.l.s4 1983009808
    %v1496 = vunpack.c.0.s8 %v1495
    %v1497 = vlaneseq
    %v1498 = vshrl.u32 %v1497, 7
    %v1499 = vsub.s32 %v1496, %v1498
    %v1500 = vrot.slane %v1486, %v1499
    %v1501 = vcombine.low %v1264, %v1292
    %v1502 = vcombine.high %v1264, %v1292
    %v1504 = vunpack.c.l.s4 1983009808
    %v1505 = vunpack.c.0.s8 %v1504
    %v1506 = vlaneseq
    %v1507 = vshrl.u32 %v1506, 7
    %v1508 = vsub.s32 %v1505, %v1507
    %v1509 = vrot.slane %v1501, %v1508
    %v1511 = vunpack.c.l.s4 1983009808
    %v1512 = vunpack.c.0.s8 %v1511
    %v1513 = vlaneseq
    %v1514 = vshrl.u32 %v1513, 7
    %v1515 = vsub.s32 %v1512, %v1514
    %v1516 = vrot.slane %v1502, %v1515
    %v1517 = vcombine.low %v1306, %v1334
    %v1518 = vcombine.high %v1306, %v1334
    %v1520 = vunpack.c.l.s4 1983009808
    %v1521 = vunpack.c.0.s8 %v1520
    %v1522 = vlaneseq
    %v1523 = vshrl.u32 %v1522, 7
    %v1524 = vsub.s32 %v1521, %v1523
    %v1525 = vrot.slane %v1517, %v1524
    %v1527 = vunpack.c.l.s4 1983009808
    %v1528 = vunpack.c.0.s8 %v1527
    %v1529 = vlaneseq
    %v1530 = vshrl.u32 %v1529, 7
    %v1531 = vsub.s32 %v1528, %v1530
    %v1532 = vrot.slane %v1518, %v1531
    %v1533 = vcombine.low %v1320, %v1348
    %v1534 = vcombine.high %v1320, %v1348
    %v1536 = vunpack.c.l.s4 1983009808
    %v1537 = vunpack.c.0.s8 %v1536
    %v1538 = vlaneseq
    %v1539 = vshrl.u32 %v1538, 7
    %v1540 = vsub.s32 %v1537, %v1539
    %v1541 = vrot.slane %v1533, %v1540
    %v1543 = vunpack.c.l.s4 1983009808
    %v1544 = vunpack.c.0.s8 %v1543
    %v1545 = vlaneseq
    %v1546 = vshrl.u32 %v1545, 7
    %v1547 = vsub.s32 %v1544, %v1546
    %v1548 = vrot.slane %v1534, %v1547
    %v1549 = vcombine.low %v1493, %v1509
    %v1550 = vcombine.high %v1493, %v1509
    %v1552 = vunpack.c.l.s4 1934713408
    %v1553 = vunpack.c.0.s8 %v1552
    %v1554 = vlaneseq
    %v1555 = vshrl.u32 %v1554, 7
    %v1556 = vsub.s32 %v1553, %v1555
    %v1557 = vrot.slane %v1549, %v1556
    %v1559 = vunpack.c.l.s4 1934713408
    %v1560 = vunpack.c.0.s8 %v1559
    %v1561 = vlaneseq
    %v1562 = vshrl.u32 %v1561, 7
    %v1563 = vsub.s32 %v1560, %v1562
    %v1564 = vrot.slane %v1550, %v1563
    %v1565 = vcombine.low %v1500, %v1516
    %v1566 = vcombine.high %v1500, %v1516
    %v1568 = vunpack.c.l.s4 1934713408
    %v1569 = vunpack.c.0.s8 %v1568
    %v1570 = vlaneseq
    %v1571 = vshrl.u32 %v1570, 7
    %v1572 = vsub.s32 %v1569, %v1571
    %v1573 = vrot.slane %v1565, %v1572
    %v1575 = vunpack.c.l.s4 1934713408
    %v1576 = vunpack.c.0.s8 %v1575
    %v1577 = vlaneseq
    %v1578 = vshrl.u32 %v1577, 7
    %v1579 = vsub.s32 %v1576, %v1578
    %v1580 = vrot.slane %v1566, %v1579
    %v1581 = vcombine.low %v1525, %v1541
    %v1582 = vcombine.high %v1525, %v1541
    %v1584 = vunpack.c.l.s4 1934713408
    %v1585 = vunpack.c.0.s8 %v1584
    %v1586 = vlaneseq
    %v1587 = vshrl.u32 %v1586, 7
    %v1588 = vsub.s32 %v1585, %v1587
    %v1589 = vrot.slane %v1581, %v1588
    %v1591 = vunpack.c.l.s4 1934713408
    %v1592 = vunpack.c.0.s8 %v1591
    %v1593 = vlaneseq
    %v1594 = vshrl.u32 %v1593, 7
    %v1595 = vsub.s32 %v1592, %v1594
    %v1596 = vrot.slane %v1582, %v1595
    %v1597 = vcombine.low %v1532, %v1548
    %v1598 = vcombine.high %v1532, %v1548
    %v1600 = vunpack.c.l.s4 1934713408
    %v1601 = vunpack.c.0.s8 %v1600
    %v1602 = vlaneseq
    %v1603 = vshrl.u32 %v1602, 7
    %v1604 = vsub.s32 %v1601, %v1603
    %v1605 = vrot.slane %v1597, %v1604
    %v1607 = vunpack.c.l.s4 1934713408
    %v1608 = vunpack.c.0.s8 %v1607
    %v1609 = vlaneseq
    %v1610 = vshrl.u32 %v1609, 7
    %v1611 = vsub.s32 %v1608, %v1610
    %v1612 = vrot.slane %v1598, %v1611
    %v1613 = vcombine.low %v1557, %v1589
    %v1614 = vcombine.high %v1557, %v1589
    %v1615 = vcombine.low %v1564, %v1596
    %v1616 = vcombine.high %v1564, %v1596
    %v1617 = vcombine.low %v1573, %v1605
    %v1618 = vcombine.high %v1573, %v1605
    %v1619 = vcombine.low %v1580, %v1612
    %v1620 = vcombine.high %v1580, %v1612
    %v1621 = vpack.c.bf16 %v1478, %v1477
    %v1622 = vpack.c.bf16 %v1614, %v1613
    %v1623 = vpack.c.bf16 %v1480, %v1479
    %v1624 = vpack.c.bf16 %v1616, %v1615
    %v1625 = vpack.c.bf16 %v1482, %v1481
    %v1626 = vpack.c.bf16 %v1618, %v1617
    %v1627 = vpack.c.bf16 %v1484, %v1483
    %v1628 = vpack.c.bf16 %v1620, %v1619
    %v1629 = vld [vmem:[#allocation8] sm:$0xff]
    %v1630 = vld [vmem:[#allocation8 + $0x8] sm:$0xff]
    %v1631 = vld [vmem:[#allocation8 + $0x10] sm:$0xff]
    %v1632 = vld [vmem:[#allocation8 + $0x18] sm:$0xff]
    %v1633 = vld [vmem:[#allocation8 + $0x20] sm:$0xff]
    %v1634 = vld [vmem:[#allocation8 + $0x28] sm:$0xff]
    %v1635 = vld [vmem:[#allocation8 + $0x30] sm:$0xff]
    %v1636 = vld [vmem:[#allocation8 + $0x38] sm:$0xff]
    %v1637 = vld [vmem:[#allocation8 + $0x40] sm:$0xff]
    %v1638 = vld [vmem:[#allocation8 + $0x48] sm:$0xff]
    %v1639 = vld [vmem:[#allocation8 + $0x50] sm:$0xff]
    %v1640 = vld [vmem:[#allocation8 + $0x58] sm:$0xff]
    %v1641 = vld [vmem:[#allocation8 + $0x60] sm:$0xff]
    %v1642 = vld [vmem:[#allocation8 + $0x68] sm:$0xff]
    %v1643 = vld [vmem:[#allocation8 + $0x70] sm:$0xff]
    %v1644 = vld [vmem:[#allocation8 + $0x78] sm:$0xff]
    %v1645 = vld [vmem:[#allocation8 + $0x80] sm:$0xff]
    %v1646 = vld [vmem:[#allocation8 + $0x88] sm:$0xff]
    %v1647 = vld [vmem:[#allocation8 + $0x90] sm:$0xff]
    %v1648 = vld [vmem:[#allocation8 + $0x98] sm:$0xff]
    %v1649 = vld [vmem:[#allocation8 + $0xa0] sm:$0xff]
    %v1650 = vld [vmem:[#allocation8 + $0xa8] sm:$0xff]
    %v1651 = vld [vmem:[#allocation8 + $0xb0] sm:$0xff]
    %v1652 = vld [vmem:[#allocation8 + $0xb8] sm:$0xff]
    %v1653 = vld [vmem:[#allocation8 + $0xc0] sm:$0xff]
    %v1654 = vld [vmem:[#allocation8 + $0xc8] sm:$0xff]
    %v1655 = vld [vmem:[#allocation8 + $0xd0] sm:$0xff]
    %v1656 = vld [vmem:[#allocation8 + $0xd8] sm:$0xff]
    %v1657 = vld [vmem:[#allocation8 + $0xe0] sm:$0xff]
    %v1658 = vld [vmem:[#allocation8 + $0xe8] sm:$0xff]
    %v1659 = vld [vmem:[#allocation8 + $0xf0] sm:$0xff]
    %v1660 = vld [vmem:[#allocation8 + $0xf8] sm:$0xff]
    %v1661 = vld [vmem:[#allocation8 + $0x100] sm:$0xff]
    %v1662 = vld [vmem:[#allocation8 + $0x108] sm:$0xff]
    %v1663 = vld [vmem:[#allocation8 + $0x110] sm:$0xff]
    %v1664 = vld [vmem:[#allocation8 + $0x118] sm:$0xff]
    %v1665 = vld [vmem:[#allocation8 + $0x120] sm:$0xff]
    %v1666 = vld [vmem:[#allocation8 + $0x128] sm:$0xff]
    %v1667 = vld [vmem:[#allocation8 + $0x130] sm:$0xff]
    %v1668 = vld [vmem:[#allocation8 + $0x138] sm:$0xff]
    %v1669 = vld [vmem:[#allocation8 + $0x140] sm:$0xff]
    %v1670 = vld [vmem:[#allocation8 + $0x148] sm:$0xff]
    %v1671 = vld [vmem:[#allocation8 + $0x150] sm:$0xff]
    %v1672 = vld [vmem:[#allocation8 + $0x158] sm:$0xff]
    %v1673 = vld [vmem:[#allocation8 + $0x160] sm:$0xff]
    %v1674 = vld [vmem:[#allocation8 + $0x168] sm:$0xff]
    %v1675 = vld [vmem:[#allocation8 + $0x170] sm:$0xff]
    %v1676 = vld [vmem:[#allocation8 + $0x178] sm:$0xff]
    %v1677 = vld [vmem:[#allocation8 + $0x180] sm:$0xff]
    %v1678 = vld [vmem:[#allocation8 + $0x188] sm:$0xff]
    %v1679 = vld [vmem:[#allocation8 + $0x190] sm:$0xff]
    %v1680 = vld [vmem:[#allocation8 + $0x198] sm:$0xff]
    %v1681 = vld [vmem:[#allocation8 + $0x1a0] sm:$0xff]
    %v1682 = vld [vmem:[#allocation8 + $0x1a8] sm:$0xff]
    %v1683 = vld [vmem:[#allocation8 + $0x1b0] sm:$0xff]
    %v1684 = vld [vmem:[#allocation8 + $0x1b8] sm:$0xff]
    %v1685 = vld [vmem:[#allocation8 + $0x1c0] sm:$0xff]
    %v1686 = vld [vmem:[#allocation8 + $0x1c8] sm:$0xff]
    %v1687 = vld [vmem:[#allocation8 + $0x1d0] sm:$0xff]
    %v1688 = vld [vmem:[#allocation8 + $0x1d8] sm:$0xff]
    %v1689 = vld [vmem:[#allocation8 + $0x1e0] sm:$0xff]
    %v1690 = vld [vmem:[#allocation8 + $0x1e8] sm:$0xff]
    %v1691 = vld [vmem:[#allocation8 + $0x1f0] sm:$0xff]
    %v1692 = vld [vmem:[#allocation8 + $0x1f8] sm:$0xff]
    %v1693 = vld [vmem:[%s4] sm:$0xf]
    %v1695 = vlaneseq
    %v1696 = vshrl.u32 %v1695, 7
    %v1697 = vsub.s32 0, %v1696
    %v1698 = vrot.slane %v1693, %v1697
    %v1699 = vlaneseq
    %v1700 = vshrl.u32 %v1699, 7
    %v1701 = vsub.s32 1, %v1700
    %v1702 = vrot.slane %v1693, %v1701
    %v1703 = vlaneseq
    %v1704 = vshrl.u32 %v1703, 7
    %v1705 = vsub.s32 2, %v1704
    %v1706 = vrot.slane %v1693, %v1705
    %v1707 = vlaneseq
    %v1708 = vshrl.u32 %v1707, 7
    %v1709 = vsub.s32 3, %v1708
    %v1710 = vrot.slane %v1693, %v1709
    %v1779 = vunpack.c.l.b16 %v1629
    %v1780 = vunpack.c.h.b16 %v1629
    %v1781 = vunpack.c.l.b16 %v1630
    %v1782 = vunpack.c.h.b16 %v1630
    %v1783 = vunpack.c.l.b16 %v1631
    %v1784 = vunpack.c.h.b16 %v1631
    %v1785 = vunpack.c.l.b16 %v1632
    %v1786 = vunpack.c.h.b16 %v1632
    %v1787 = vunpack.c.l.b16 %v1633
    %v1788 = vunpack.c.h.b16 %v1633
    %v1789 = vunpack.c.l.b16 %v1634
    %v1790 = vunpack.c.h.b16 %v1634
    %v1791 = vunpack.c.l.b16 %v1635
    %v1792 = vunpack.c.h.b16 %v1635
    %v1793 = vunpack.c.l.b16 %v1636
    %v1794 = vunpack.c.h.b16 %v1636
    %v1795 = vunpack.c.l.b16 %v1637
    %v1796 = vunpack.c.h.b16 %v1637
    %v1797 = vunpack.c.l.b16 %v1638
    %v1798 = vunpack.c.h.b16 %v1638
    %v1799 = vunpack.c.l.b16 %v1639
    %v1800 = vunpack.c.h.b16 %v1639
    %v1801 = vunpack.c.l.b16 %v1640
    %v1802 = vunpack.c.h.b16 %v1640
    %v1803 = vunpack.c.l.b16 %v1641
    %v1804 = vunpack.c.h.b16 %v1641
    %v1805 = vunpack.c.l.b16 %v1642
    %v1806 = vunpack.c.h.b16 %v1642
    %v1807 = vunpack.c.l.b16 %v1643
    %v1808 = vunpack.c.h.b16 %v1643
    %v1809 = vunpack.c.l.b16 %v1644
    %v1810 = vunpack.c.h.b16 %v1644
    %v1811 = vunpack.c.l.b16 %v1645
    %v1812 = vunpack.c.h.b16 %v1645
    %v1813 = vunpack.c.l.b16 %v1646
    %v1814 = vunpack.c.h.b16 %v1646
    %v1815 = vunpack.c.l.b16 %v1647
    %v1816 = vunpack.c.h.b16 %v1647
    %v1817 = vunpack.c.l.b16 %v1648
    %v1818 = vunpack.c.h.b16 %v1648
    %v1819 = vunpack.c.l.b16 %v1649
    %v1820 = vunpack.c.h.b16 %v1649
    %v1821 = vunpack.c.l.b16 %v1650
    %v1822 = vunpack.c.h.b16 %v1650
    %v1823 = vunpack.c.l.b16 %v1651
    %v1824 = vunpack.c.h.b16 %v1651
    %v1825 = vunpack.c.l.b16 %v1652
    %v1826 = vunpack.c.h.b16 %v1652
    %v1827 = vunpack.c.l.b16 %v1653
    %v1828 = vunpack.c.h.b16 %v1653
    %v1829 = vunpack.c.l.b16 %v1654
    %v1830 = vunpack.c.h.b16 %v1654
    %v1831 = vunpack.c.l.b16 %v1655
    %v1832 = vunpack.c.h.b16 %v1655
    %v1833 = vunpack.c.l.b16 %v1656
    %v1834 = vunpack.c.h.b16 %v1656
    %v1835 = vunpack.c.l.b16 %v1657
    %v1836 = vunpack.c.h.b16 %v1657
    %v1837 = vunpack.c.l.b16 %v1658
    %v1838 = vunpack.c.h.b16 %v1658
    %v1839 = vunpack.c.l.b16 %v1659
    %v1840 = vunpack.c.h.b16 %v1659
    %v1841 = vunpack.c.l.b16 %v1660
    %v1842 = vunpack.c.h.b16 %v1660
    %v1843 = vunpack.c.l.b16 %v1661
    %v1844 = vunpack.c.h.b16 %v1661
    %v1845 = vunpack.c.l.b16 %v1662
    %v1846 = vunpack.c.h.b16 %v1662
    %v1847 = vunpack.c.l.b16 %v1663
    %v1848 = vunpack.c.h.b16 %v1663
    %v1849 = vunpack.c.l.b16 %v1664
    %v1850 = vunpack.c.h.b16 %v1664
    %v1851 = vunpack.c.l.b16 %v1665
    %v1852 = vunpack.c.h.b16 %v1665
    %v1853 = vunpack.c.l.b16 %v1666
    %v1854 = vunpack.c.h.b16 %v1666
    %v1855 = vunpack.c.l.b16 %v1667
    %v1856 = vunpack.c.h.b16 %v1667
    %v1857 = vunpack.c.l.b16 %v1668
    %v1858 = vunpack.c.h.b16 %v1668
    %v1859 = vunpack.c.l.b16 %v1669
    %v1860 = vunpack.c.h.b16 %v1669
    %v1861 = vunpack.c.l.b16 %v1670
    %v1862 = vunpack.c.h.b16 %v1670
    %v1863 = vunpack.c.l.b16 %v1671
    %v1864 = vunpack.c.h.b16 %v1671
    %v1865 = vunpack.c.l.b16 %v1672
    %v1866 = vunpack.c.h.b16 %v1672
    %v1867 = vunpack.c.l.b16 %v1673
    %v1868 = vunpack.c.h.b16 %v1673
    %v1869 = vunpack.c.l.b16 %v1674
    %v1870 = vunpack.c.h.b16 %v1674
    %v1871 = vunpack.c.l.b16 %v1675
    %v1872 = vunpack.c.h.b16 %v1675
    %v1873 = vunpack.c.l.b16 %v1676
    %v1874 = vunpack.c.h.b16 %v1676
    %v1875 = vunpack.c.l.b16 %v1677
    %v1876 = vunpack.c.h.b16 %v1677
    %v1877 = vunpack.c.l.b16 %v1678
    %v1878 = vunpack.c.h.b16 %v1678
    %v1879 = vunpack.c.l.b16 %v1679
    %v1880 = vunpack.c.h.b16 %v1679
    %v1881 = vunpack.c.l.b16 %v1680
    %v1882 = vunpack.c.h.b16 %v1680
    %v1883 = vunpack.c.l.b16 %v1681
    %v1884 = vunpack.c.h.b16 %v1681
    %v1885 = vunpack.c.l.b16 %v1682
    %v1886 = vunpack.c.h.b16 %v1682
    %v1887 = vunpack.c.l.b16 %v1683
    %v1888 = vunpack.c.h.b16 %v1683
    %v1889 = vunpack.c.l.b16 %v1684
    %v1890 = vunpack.c.h.b16 %v1684
    %v1891 = vunpack.c.l.b16 %v1685
    %v1892 = vunpack.c.h.b16 %v1685
    %v1893 = vunpack.c.l.b16 %v1686
    %v1894 = vunpack.c.h.b16 %v1686
    %v1895 = vunpack.c.l.b16 %v1687
    %v1896 = vunpack.c.h.b16 %v1687
    %v1897 = vunpack.c.l.b16 %v1688
    %v1898 = vunpack.c.h.b16 %v1688
    %v1899 = vunpack.c.l.b16 %v1689
    %v1900 = vunpack.c.h.b16 %v1689
    %v1901 = vunpack.c.l.b16 %v1690
    %v1902 = vunpack.c.h.b16 %v1690
    %v1903 = vunpack.c.l.b16 %v1691
    %v1904 = vunpack.c.h.b16 %v1691
    %v1905 = vunpack.c.l.b16 %v1692
    %v1906 = vunpack.c.h.b16 %v1692
    %v1907 = vpack.c.b16 %v1783, %v1779
    %v1908 = vpack.c.b16 %v1784, %v1780
    %v1909 = vpack.c.b16 %v1785, %v1781
    %v1910 = vpack.c.b16 %v1786, %v1782
    %v1911 = vpack.c.b16 %v1791, %v1787
    %v1912 = vpack.c.b16 %v1792, %v1788
    %v1913 = vpack.c.b16 %v1793, %v1789
    %v1914 = vpack.c.b16 %v1794, %v1790
    %v1915 = vpack.c.b16 %v1799, %v1795
    %v1916 = vpack.c.b16 %v1800, %v1796
    %v1917 = vpack.c.b16 %v1801, %v1797
    %v1918 = vpack.c.b16 %v1802, %v1798
    %v1919 = vpack.c.b16 %v1807, %v1803
    %v1920 = vpack.c.b16 %v1808, %v1804
    %v1921 = vpack.c.b16 %v1809, %v1805
    %v1922 = vpack.c.b16 %v1810, %v1806
    %v1923 = vpack.c.b16 %v1815, %v1811
    %v1924 = vpack.c.b16 %v1816, %v1812
    %v1925 = vpack.c.b16 %v1817, %v1813
    %v1926 = vpack.c.b16 %v1818, %v1814
    %v1927 = vpack.c.b16 %v1823, %v1819
    %v1928 = vpack.c.b16 %v1824, %v1820
    %v1929 = vpack.c.b16 %v1825, %v1821
    %v1930 = vpack.c.b16 %v1826, %v1822
    %v1931 = vpack.c.b16 %v1831, %v1827
    %v1932 = vpack.c.b16 %v1832, %v1828
    %v1933 = vpack.c.b16 %v1833, %v1829
    %v1934 = vpack.c.b16 %v1834, %v1830
    %v1935 = vpack.c.b16 %v1839, %v1835
    %v1936 = vpack.c.b16 %v1840, %v1836
    %v1937 = vpack.c.b16 %v1841, %v1837
    %v1938 = vpack.c.b16 %v1842, %v1838
    %v1939 = vpack.c.b16 %v1847, %v1843
    %v1940 = vpack.c.b16 %v1848, %v1844
    %v1941 = vpack.c.b16 %v1849, %v1845
    %v1942 = vpack.c.b16 %v1850, %v1846
    %v1943 = vpack.c.b16 %v1855, %v1851
    %v1944 = vpack.c.b16 %v1856, %v1852
    %v1945 = vpack.c.b16 %v1857, %v1853
    %v1946 = vpack.c.b16 %v1858, %v1854
    %v1947 = vpack.c.b16 %v1863, %v1859
    %v1948 = vpack.c.b16 %v1864, %v1860
    %v1949 = vpack.c.b16 %v1865, %v1861
    %v1950 = vpack.c.b16 %v1866, %v1862
    %v1951 = vpack.c.b16 %v1871, %v1867
    %v1952 = vpack.c.b16 %v1872, %v1868
    %v1953 = vpack.c.b16 %v1873, %v1869
    %v1954 = vpack.c.b16 %v1874, %v1870
    %v1955 = vpack.c.b16 %v1879, %v1875
    %v1956 = vpack.c.b16 %v1880, %v1876
    %v1957 = vpack.c.b16 %v1881, %v1877
    %v1958 = vpack.c.b16 %v1882, %v1878
    %v1959 = vpack.c.b16 %v1887, %v1883
    %v1960 = vpack.c.b16 %v1888, %v1884
    %v1961 = vpack.c.b16 %v1889, %v1885
    %v1962 = vpack.c.b16 %v1890, %v1886
    %v1963 = vpack.c.b16 %v1895, %v1891
    %v1964 = vpack.c.b16 %v1896, %v1892
    %v1965 = vpack.c.b16 %v1897, %v1893
    %v1966 = vpack.c.b16 %v1898, %v1894
    %v1967 = vpack.c.b16 %v1903, %v1899
    %v1968 = vpack.c.b16 %v1904, %v1900
    %v1969 = vpack.c.b16 %v1905, %v1901
    %v1970 = vpack.c.b16 %v1906, %v1902
    %2035 = vmatprep.subr.bf16.mxu0 %v1908
    %2036 = vmatpush1.bf16.msra.mxu0 %v1907
    %2037 = vmatprep.subr.bf16.mxu0 %v1912
    %2038 = vmatpush1.bf16.msra.mxu0 %v1911
    %2039 = vmatprep.subr.bf16.mxu0 %v1916
    %2040 = vmatpush1.bf16.msra.mxu0 %v1915
    %2041 = vmatprep.subr.bf16.mxu0 %v1920
    %2042 = vmatpush1.bf16.msra.mxu0 %v1919
    %2043 = vmatprep.subr.bf16.mxu0 %v1924
    %2044 = vmatpush1.bf16.msra.mxu0 %v1923
    %2045 = vmatprep.subr.bf16.mxu0 %v1928
    %2046 = vmatpush1.bf16.msra.mxu0 %v1927
    %2047 = vmatprep.subr.bf16.mxu0 %v1932
    %2048 = vmatpush1.bf16.msra.mxu0 %v1931
    %2049 = vmatprep.subr.bf16.mxu0 %v1936
    %2050 = vmatpush1.bf16.msra.mxu0 %v1935
    %2051 = vmatprep.subr.bf16.mxu0 %v1940
    %2052 = vmatpush1.bf16.msra.mxu0 %v1939
    %2053 = vmatprep.subr.bf16.mxu0 %v1944
    %2054 = vmatpush1.bf16.msra.mxu0 %v1943
    %2055 = vmatprep.subr.bf16.mxu0 %v1948
    %2056 = vmatpush1.bf16.msra.mxu0 %v1947
    %2057 = vmatprep.subr.bf16.mxu0 %v1952
    %2058 = vmatpush1.bf16.msra.mxu0 %v1951
    %2059 = vmatprep.subr.bf16.mxu0 %v1956
    %2060 = vmatpush1.bf16.msra.mxu0 %v1955
    %2061 = vmatprep.subr.bf16.mxu0 %v1960
    %2062 = vmatpush1.bf16.msra.mxu0 %v1959
    %2063 = vmatprep.subr.bf16.mxu0 %v1964
    %2064 = vmatpush1.bf16.msra.mxu0 %v1963
    %2065 = vmatprep.subr.bf16.mxu0 %v1968
    %2066 = vmatpush1.bf16.msra.mxu0 %v1967
    %2067 = vmatprep.mubr.bf16.mxu0 %v1622
    %2068 = vmatmul.mubr.bf16.gmra.mrb[0].mxu0 %v1621
    %v2069 = vpop.f32.mrb[0].mxu0
    %v2070 = vadd.f32 %v1698, %v2069
    %v2071 = vpop.f32.mrb[0].mxu0
    %v2072 = vadd.f32 %v1702, %v2071
    %v2073 = vpop.f32.mrb[0].mxu0
    %v2074 = vadd.f32 %v1698, %v2073
    %v2075 = vpop.f32.mrb[0].mxu0
    %v2076 = vadd.f32 %v1702, %v2075
    %2077 = vmatprep.mubr.bf16.mxu0 %v1624
    %2078 = vmatmul.mubr.bf16.gmra.mrb[0].mxu0 %v1623
    %v2079 = vpop.f32.mrb[0].mxu0
    %v2080 = vadd.f32 %v1698, %v2079
    %v2081 = vpop.f32.mrb[0].mxu0
    %v2082 = vadd.f32 %v1702, %v2081
    %v2083 = vpop.f32.mrb[0].mxu0
    %v2084 = vadd.f32 %v1698, %v2083
    %v2085 = vpop.f32.mrb[0].mxu0
    %v2086 = vadd.f32 %v1702, %v2085
    %2087 = vmatprep.mubr.bf16.mxu0 %v1626
    %2088 = vmatmul.mubr.bf16.gmra.mrb[0].mxu0 %v1625
    %v2089 = vpop.f32.mrb[0].mxu0
    %v2090 = vadd.f32 %v1698, %v2089
    %v2091 = vpop.f32.mrb[0].mxu0
    %v2092 = vadd.f32 %v1702, %v2091
    %v2093 = vpop.f32.mrb[0].mxu0
    %v2094 = vadd.f32 %v1698, %v2093
    %v2095 = vpop.f32.mrb[0].mxu0
    %v2096 = vadd.f32 %v1702, %v2095
    %2097 = vmatprep.mubr.bf16.mxu0 %v1628
    %2098 = vmatmul.mubr.bf16.gmra.mrb[0].mxu0 %v1627
    %v2099 = vpop.f32.mrb[0].mxu0
    %v2100 = vadd.f32 %v1698, %v2099
    %v2101 = vpop.f32.mrb[0].mxu0
    %v2102 = vadd.f32 %v1702, %v2101
    %v2103 = vpop.f32.mrb[0].mxu0
    %v2104 = vadd.f32 %v1698, %v2103
    %v2105 = vpop.f32.mrb[0].mxu0
    %v2106 = vadd.f32 %v1702, %v2105
    %2107 = vdwg.mxu0
    %2108 = vmatprep.subr.bf16.mxu0 %v1910
    %2109 = vmatpush1.bf16.msra.mxu0 %v1909
    %2110 = vmatprep.subr.bf16.mxu0 %v1914
    %2111 = vmatpush1.bf16.msra.mxu0 %v1913
    %2112 = vmatprep.subr.bf16.mxu0 %v1918
    %2113 = vmatpush1.bf16.msra.mxu0 %v1917
    %2114 = vmatprep.subr.bf16.mxu0 %v1922
    %2115 = vmatpush1.bf16.msra.mxu0 %v1921
    %2116 = vmatprep.subr.bf16.mxu0 %v1926
    %2117 = vmatpush1.bf16.msra.mxu0 %v1925
    %2118 = vmatprep.subr.bf16.mxu0 %v1930
    %2119 = vmatpush1.bf16.msra.mxu0 %v1929
    %2120 = vmatprep.subr.bf16.mxu0 %v1934
    %2121 = vmatpush1.bf16.msra.mxu0 %v1933
    %2122 = vmatprep.subr.bf16.mxu0 %v1938
    %2123 = vmatpush1.bf16.msra.mxu0 %v1937
    %2124 = vmatprep.subr.bf16.mxu0 %v1942
    %2125 = vmatpush1.bf16.msra.mxu0 %v1941
    %2126 = vmatprep.subr.bf16.mxu0 %v1946
    %2127 = vmatpush1.bf16.msra.mxu0 %v1945
    %2128 = vmatprep.subr.bf16.mxu0 %v1950
    %2129 = vmatpush1.bf16.msra.mxu0 %v1949
    %2130 = vmatprep.subr.bf16.mxu0 %v1954
    %2131 = vmatpush1.bf16.msra.mxu0 %v1953
    %2132 = vmatprep.subr.bf16.mxu0 %v1958
    %2133 = vmatpush1.bf16.msra.mxu0 %v1957
    %2134 = vmatprep.subr.bf16.mxu0 %v1962
    %2135 = vmatpush1.bf16.msra.mxu0 %v1961
    %2136 = vmatprep.subr.bf16.mxu0 %v1966
    %2137 = vmatpush1.bf16.msra.mxu0 %v1965
    %2138 = vmatprep.subr.bf16.mxu0 %v1970
    %2139 = vmatpush1.bf16.msra.mxu0 %v1969
    %2140 = vmatprep.mubr.bf16.mxu0 %v1622
    %2141 = vmatmul.mubr.bf16.gmra.mrb[0].mxu0 %v1621
    %v2142 = vpop.f32.mrb[0].mxu0
    %v2143 = vadd.f32 %v1706, %v2142
    %v2144 = vpop.f32.mrb[0].mxu0
    %v2145 = vadd.f32 %v1710, %v2144
    %v2146 = vpop.f32.mrb[0].mxu0
    %v2147 = vadd.f32 %v1706, %v2146
    %v2148 = vpop.f32.mrb[0].mxu0
    %v2149 = vadd.f32 %v1710, %v2148
    %2150 = vmatprep.mubr.bf16.mxu0 %v1624
    %2151 = vmatmul.mubr.bf16.gmra.mrb[0].mxu0 %v1623
    %v2152 = vpop.f32.mrb[0].mxu0
    %v2153 = vadd.f32 %v1706, %v2152
    %v2154 = vpop.f32.mrb[0].mxu0
    %v2155 = vadd.f32 %v1710, %v2154
    %v2156 = vpop.f32.mrb[0].mxu0
    %v2157 = vadd.f32 %v1706, %v2156
    %v2158 = vpop.f32.mrb[0].mxu0
    %v2159 = vadd.f32 %v1710, %v2158
    %2160 = vmatprep.mubr.bf16.mxu0 %v1626
    %2161 = vmatmul.mubr.bf16.gmra.mrb[0].mxu0 %v1625
    %v2162 = vpop.f32.mrb[0].mxu0
    %v2163 = vadd.f32 %v1706, %v2162
    %v2164 = vpop.f32.mrb[0].mxu0
    %v2165 = vadd.f32 %v1710, %v2164
    %v2166 = vpop.f32.mrb[0].mxu0
    %v2167 = vadd.f32 %v1706, %v2166
    %v2168 = vpop.f32.mrb[0].mxu0
    %v2169 = vadd.f32 %v1710, %v2168
    %2170 = vmatprep.mubr.bf16.mxu0 %v1628
    %2171 = vmatmul.mubr.bf16.gmra.mrb[0].mxu0 %v1627
    %v2172 = vpop.f32.mrb[0].mxu0
    %v2173 = vadd.f32 %v1706, %v2172
    %v2174 = vpop.f32.mrb[0].mxu0
    %v2175 = vadd.f32 %v1710, %v2174
    %v2176 = vpop.f32.mrb[0].mxu0
    %v2177 = vadd.f32 %v1706, %v2176
    %v2178 = vpop.f32.mrb[0].mxu0
    %v2179 = vadd.f32 %v1710, %v2178
    %2180 = vdwg.mxu0
    %2181 = vst [vmem:[#allocation2] sm:$0xff] %v2070
    %2182 = vst [vmem:[#allocation2 + $0x8] sm:$0xff] %v2072
    %2183 = vst [vmem:[#allocation2 + $0x10] sm:$0xff] %v2143
    %2184 = vst [vmem:[#allocation2 + $0x18] sm:$0xff] %v2145
    %2185 = vst [vmem:[#allocation2 + $0x20] sm:$0xff] %v2074
    %2186 = vst [vmem:[#allocation2 + $0x28] sm:$0xff] %v2076
    %2187 = vst [vmem:[#allocation2 + $0x30] sm:$0xff] %v2147
    %2188 = vst [vmem:[#allocation2 + $0x38] sm:$0xff] %v2149
    %2189 = vst [vmem:[#allocation2 + $0x40] sm:$0xff] %v2080
    %2190 = vst [vmem:[#allocation2 + $0x48] sm:$0xff] %v2082
    %2191 = vst [vmem:[#allocation2 + $0x50] sm:$0xff] %v2153
    %2192 = vst [vmem:[#allocation2 + $0x58] sm:$0xff] %v2155
    %2193 = vst [vmem:[#allocation2 + $0x60] sm:$0xff] %v2084
    %2194 = vst [vmem:[#allocation2 + $0x68] sm:$0xff] %v2086
    %2195 = vst [vmem:[#allocation2 + $0x70] sm:$0xff] %v2157
    %2196 = vst [vmem:[#allocation2 + $0x78] sm:$0xff] %v2159
    %2197 = vst [vmem:[#allocation2 + $0x80] sm:$0xff] %v2090
    %2198 = vst [vmem:[#allocation2 + $0x88] sm:$0xff] %v2092
    %2199 = vst [vmem:[#allocation2 + $0x90] sm:$0xff] %v2163
    %2200 = vst [vmem:[#allocation2 + $0x98] sm:$0xff] %v2165
    %2201 = vst [vmem:[#allocation2 + $0xa0] sm:$0xff] %v2094
    %2202 = vst [vmem:[#allocation2 + $0xa8] sm:$0xff] %v2096
    %2203 = vst [vmem:[#allocation2 + $0xb0] sm:$0xff] %v2167
    %2204 = vst [vmem:[#allocation2 + $0xb8] sm:$0xff] %v2169
    %2205 = vst [vmem:[#allocation2 + $0xc0] sm:$0xff] %v2100
    %2206 = vst [vmem:[#allocation2 + $0xc8] sm:$0xff] %v2102
    %2207 = vst [vmem:[#allocation2 + $0xd0] sm:$0xff] %v2173
    %2208 = vst [vmem:[#allocation2 + $0xd8] sm:$0xff] %v2175
    %2209 = vst [vmem:[#allocation2 + $0xe0] sm:$0xff] %v2104
    %2210 = vst [vmem:[#allocation2 + $0xe8] sm:$0xff] %v2106
    %2211 = vst [vmem:[#allocation2 + $0xf0] sm:$0xff] %v2177
    %2212 = vst [vmem:[#allocation2 + $0xf8] sm:$0xff] %v2179
    %v2213 = vld [vmem:[#allocation9] sm:$0xff]
    %v2214 = vld [vmem:[#allocation9 + $0x8] sm:$0xff]
    %v2215 = vld [vmem:[#allocation9 + $0x10] sm:$0xff]
    %v2216 = vld [vmem:[#allocation9 + $0x18] sm:$0xff]
    %v2217 = vld [vmem:[#allocation9 + $0x20] sm:$0xff]
    %v2218 = vld [vmem:[#allocation9 + $0x28] sm:$0xff]
    %v2219 = vld [vmem:[#allocation9 + $0x30] sm:$0xff]
    %v2220 = vld [vmem:[#allocation9 + $0x38] sm:$0xff]
    %v2221 = vld [vmem:[#allocation9 + $0x40] sm:$0xff]
    %v2222 = vld [vmem:[#allocation9 + $0x48] sm:$0xff]
    %v2223 = vld [vmem:[#allocation9 + $0x50] sm:$0xff]
    %v2224 = vld [vmem:[#allocation9 + $0x58] sm:$0xff]
    %v2225 = vld [vmem:[#allocation9 + $0x60] sm:$0xff]
    %v2226 = vld [vmem:[#allocation9 + $0x68] sm:$0xff]
    %v2227 = vld [vmem:[#allocation9 + $0x70] sm:$0xff]
    %v2228 = vld [vmem:[#allocation9 + $0x78] sm:$0xff]
    %v2229 = vld [vmem:[#allocation9 + $0x80] sm:$0xff]
    %v2230 = vld [vmem:[#allocation9 + $0x88] sm:$0xff]
    %v2231 = vld [vmem:[#allocation9 + $0x90] sm:$0xff]
    %v2232 = vld [vmem:[#allocation9 + $0x98] sm:$0xff]
    %v2233 = vld [vmem:[#allocation9 + $0xa0] sm:$0xff]
    %v2234 = vld [vmem:[#allocation9 + $0xa8] sm:$0xff]
    %v2235 = vld [vmem:[#allocation9 + $0xb0] sm:$0xff]
    %v2236 = vld [vmem:[#allocation9 + $0xb8] sm:$0xff]
    %v2237 = vld [vmem:[#allocation9 + $0xc0] sm:$0xff]
    %v2238 = vld [vmem:[#allocation9 + $0xc8] sm:$0xff]
    %v2239 = vld [vmem:[#allocation9 + $0xd0] sm:$0xff]
    %v2240 = vld [vmem:[#allocation9 + $0xd8] sm:$0xff]
    %v2241 = vld [vmem:[#allocation9 + $0xe0] sm:$0xff]
    %v2242 = vld [vmem:[#allocation9 + $0xe8] sm:$0xff]
    %v2243 = vld [vmem:[#allocation9 + $0xf0] sm:$0xff]
    %v2244 = vld [vmem:[#allocation9 + $0xf8] sm:$0xff]
    %v2245 = vlaneseq
    %v2246 = vand.u32 %v2245, 127
    %v2247 = vadd.s32 %v2246, 128
    %v2248 = vadd.s32 %v2246, 256
    %v2249 = vadd.s32 %v2246, 384
    %vm2250 = vcmp.ge.s32.totalorder %v2246, 256
    %vm2251 = vcmp.ge.s32.totalorder %v2247, 256
    %vm2252 = vcmp.ge.s32.totalorder %v2248, 256
    %vm2253 = vcmp.ge.s32.totalorder %v2249, 256
    %vm2254 = vcmp.lt.s32.totalorder %v2246, 384
    %vm2255 = vcmp.lt.s32.totalorder %v2247, 384
    %vm2256 = vcmp.lt.s32.totalorder %v2248, 384
    %vm2257 = vcmp.lt.s32.totalorder %v2249, 384
    %vm2258 = vmand %vm2250, %vm2254
    %vm2259 = vmand %vm2251, %vm2255
    %vm2260 = vmand %vm2252, %vm2256
    %vm2261 = vmand %vm2253, %vm2257
    %v2262 = vsel %vm2258, 1.0, 0.5
    %v2263 = vsel %vm2259, 1.0, 0.5
    %v2264 = vsel %vm2260, 1.0, 0.5
    %v2265 = vsel %vm2261, 1.0, 0.5
    %v2266 = vsel %vm2258, 0.0, 0.5
    %v2267 = vsel %vm2259, 0.0, 0.5
    %v2268 = vsel %vm2260, 0.0, 0.5
    %v2269 = vsel %vm2261, 0.0, 0.5
    %v2270 = vld [vmem:[#allocation2] sm:$0xff]
    %v2271 = vld [vmem:[#allocation2 + $0x8] sm:$0xff]
    %v2272 = vld [vmem:[#allocation2 + $0x10] sm:$0xff]
    %v2273 = vld [vmem:[#allocation2 + $0x18] sm:$0xff]
    %v2306 = vunpack.c.l.b16 %v2213
    %v2307 = vunpack.c.h.b16 %v2213
    %v2308 = vunpack.c.l.b16 %v2214
    %v2309 = vunpack.c.h.b16 %v2214
    %v2310 = vunpack.c.l.b16 %v2215
    %v2311 = vunpack.c.h.b16 %v2215
    %v2312 = vunpack.c.l.b16 %v2216
    %v2313 = vunpack.c.h.b16 %v2216
    %v2314 = vunpack.c.l.b16 %v2217
    %v2315 = vunpack.c.h.b16 %v2217
    %v2316 = vunpack.c.l.b16 %v2218
    %v2317 = vunpack.c.h.b16 %v2218
    %v2318 = vunpack.c.l.b16 %v2219
    %v2319 = vunpack.c.h.b16 %v2219
    %v2320 = vunpack.c.l.b16 %v2220
    %v2321 = vunpack.c.h.b16 %v2220
    %v2322 = vunpack.c.l.b16 %v2221
    %v2323 = vunpack.c.h.b16 %v2221
    %v2324 = vunpack.c.l.b16 %v2222
    %v2325 = vunpack.c.h.b16 %v2222
    %v2326 = vunpack.c.l.b16 %v2223
    %v2327 = vunpack.c.h.b16 %v2223
    %v2328 = vunpack.c.l.b16 %v2224
    %v2329 = vunpack.c.h.b16 %v2224
    %v2330 = vunpack.c.l.b16 %v2225
    %v2331 = vunpack.c.h.b16 %v2225
    %v2332 = vunpack.c.l.b16 %v2226
    %v2333 = vunpack.c.h.b16 %v2226
    %v2334 = vunpack.c.l.b16 %v2227
    %v2335 = vunpack.c.h.b16 %v2227
    %v2336 = vunpack.c.l.b16 %v2228
    %v2337 = vunpack.c.h.b16 %v2228
    %v2338 = vunpack.c.l.b16 %v2229
    %v2339 = vunpack.c.h.b16 %v2229
    %v2340 = vunpack.c.l.b16 %v2230
    %v2341 = vunpack.c.h.b16 %v2230
    %v2342 = vunpack.c.l.b16 %v2231
    %v2343 = vunpack.c.h.b16 %v2231
    %v2344 = vunpack.c.l.b16 %v2232
    %v2345 = vunpack.c.h.b16 %v2232
    %v2346 = vunpack.c.l.b16 %v2233
    %v2347 = vunpack.c.h.b16 %v2233
    %v2348 = vunpack.c.l.b16 %v2234
    %v2349 = vunpack.c.h.b16 %v2234
    %v2350 = vunpack.c.l.b16 %v2235
    %v2351 = vunpack.c.h.b16 %v2235
    %v2352 = vunpack.c.l.b16 %v2236
    %v2353 = vunpack.c.h.b16 %v2236
    %v2354 = vunpack.c.l.b16 %v2237
    %v2355 = vunpack.c.h.b16 %v2237
    %v2356 = vunpack.c.l.b16 %v2238
    %v2357 = vunpack.c.h.b16 %v2238
    %v2358 = vunpack.c.l.b16 %v2239
    %v2359 = vunpack.c.h.b16 %v2239
    %v2360 = vunpack.c.l.b16 %v2240
    %v2361 = vunpack.c.h.b16 %v2240
    %v2362 = vunpack.c.l.b16 %v2241
    %v2363 = vunpack.c.h.b16 %v2241
    %v2364 = vunpack.c.l.b16 %v2242
    %v2365 = vunpack.c.h.b16 %v2242
    %v2366 = vunpack.c.l.b16 %v2243
    %v2367 = vunpack.c.h.b16 %v2243
    %v2368 = vunpack.c.l.b16 %v2244
    %v2369 = vunpack.c.h.b16 %v2244
    %v2370 = vpack.c.b16 %v2310, %v2306
    %v2371 = vpack.c.b16 %v2311, %v2307
    %v2372 = vpack.c.b16 %v2312, %v2308
    %v2373 = vpack.c.b16 %v2313, %v2309
    %v2374 = vpack.c.b16 %v2318, %v2314
    %v2375 = vpack.c.b16 %v2319, %v2315
    %v2376 = vpack.c.b16 %v2320, %v2316
    %v2377 = vpack.c.b16 %v2321, %v2317
    %v2378 = vpack.c.b16 %v2326, %v2322
    %v2379 = vpack.c.b16 %v2327, %v2323
    %v2380 = vpack.c.b16 %v2328, %v2324
    %v2381 = vpack.c.b16 %v2329, %v2325
    %v2382 = vpack.c.b16 %v2334, %v2330
    %v2383 = vpack.c.b16 %v2335, %v2331
    %v2384 = vpack.c.b16 %v2336, %v2332
    %v2385 = vpack.c.b16 %v2337, %v2333
    %v2386 = vpack.c.b16 %v2342, %v2338
    %v2387 = vpack.c.b16 %v2343, %v2339
    %v2388 = vpack.c.b16 %v2344, %v2340
    %v2389 = vpack.c.b16 %v2345, %v2341
    %v2390 = vpack.c.b16 %v2350, %v2346
    %v2391 = vpack.c.b16 %v2351, %v2347
    %v2392 = vpack.c.b16 %v2352, %v2348
    %v2393 = vpack.c.b16 %v2353, %v2349
    %v2394 = vpack.c.b16 %v2358, %v2354
    %v2395 = vpack.c.b16 %v2359, %v2355
    %v2396 = vpack.c.b16 %v2360, %v2356
    %v2397 = vpack.c.b16 %v2361, %v2357
    %v2398 = vpack.c.b16 %v2366, %v2362
    %v2399 = vpack.c.b16 %v2367, %v2363
    %v2400 = vpack.c.b16 %v2368, %v2364
    %v2401 = vpack.c.b16 %v2369, %v2365
    %2434 = vmatprep.subr.bf16.mxu0 %v2371
    %2435 = vmatpush1.bf16.msra.mxu0 %v2370
    %2436 = vmatprep.subr.bf16.mxu0 %v2375
    %2437 = vmatpush1.bf16.msra.mxu0 %v2374
    %2438 = vmatprep.subr.bf16.mxu0 %v2379
    %2439 = vmatpush1.bf16.msra.mxu0 %v2378
    %2440 = vmatprep.subr.bf16.mxu0 %v2383
    %2441 = vmatpush1.bf16.msra.mxu0 %v2382
    %2442 = vmatprep.subr.bf16.mxu0 %v2387
    %2443 = vmatpush1.bf16.msra.mxu0 %v2386
    %2444 = vmatprep.subr.bf16.mxu0 %v2391
    %2445 = vmatpush1.bf16.msra.mxu0 %v2390
    %2446 = vmatprep.subr.bf16.mxu0 %v2395
    %2447 = vmatpush1.bf16.msra.mxu0 %v2394
    %2448 = vmatprep.subr.bf16.mxu0 %v2399
    %2449 = vmatpush1.bf16.msra.mxu0 %v2398
    %2450 = vmatprep.subr.bf16.mxu0 0
    %2451 = vmatpush1.bf16.msra.mxu0 0
    %2452 = vmatprep.subr.bf16.mxu0 0
    %2453 = vmatpush1.bf16.msra.mxu0 0
    %2454 = vmatprep.subr.bf16.mxu0 0
    %2455 = vmatpush1.bf16.msra.mxu0 0
    %2456 = vmatprep.subr.bf16.mxu0 0
    %2457 = vmatpush1.bf16.msra.mxu0 0
    %2458 = vmatprep.subr.bf16.mxu0 0
    %2459 = vmatpush1.bf16.msra.mxu0 0
    %2460 = vmatprep.subr.bf16.mxu0 0
    %2461 = vmatpush1.bf16.msra.mxu0 0
    %2462 = vmatprep.subr.bf16.mxu0 0
    %2463 = vmatpush1.bf16.msra.mxu0 0
    %2464 = vmatprep.subr.bf16.mxu0 0
    %2465 = vmatpush1.bf16.msra.mxu0 0
    %2466 = vmatprep.mubr.bf16.mxu0 0
    %2467 = vmatmul.mubr.bf16.gmra.mrb[0].mxu0 0
    %v2468 = vpop.f32.mrb[0].mxu0
    %v2469 = vadd.f32 0.0, %v2468
    %v2470 = vpop.f32.mrb[0].mxu0
    %v2471 = vadd.f32 0.0, %v2470
    %v2472 = vpop.f32.mrb[0].mxu0
    %v2473 = vpop.f32.mrb[0].mxu0
    %2474 = vdwg.mxu0
    %2475 = vmatprep.subr.bf16.mxu0 %v2373
    %2476 = vmatpush1.bf16.msra.mxu0 %v2372
    %2477 = vmatprep.subr.bf16.mxu0 %v2377
    %2478 = vmatpush1.bf16.msra.mxu0 %v2376
    %2479 = vmatprep.subr.bf16.mxu0 %v2381
    %2480 = vmatpush1.bf16.msra.mxu0 %v2380
    %2481 = vmatprep.subr.bf16.mxu0 %v2385
    %2482 = vmatpush1.bf16.msra.mxu0 %v2384
    %2483 = vmatprep.subr.bf16.mxu0 %v2389
    %2484 = vmatpush1.bf16.msra.mxu0 %v2388
    %2485 = vmatprep.subr.bf16.mxu0 %v2393
    %2486 = vmatpush1.bf16.msra.mxu0 %v2392
    %2487 = vmatprep.subr.bf16.mxu0 %v2397
    %2488 = vmatpush1.bf16.msra.mxu0 %v2396
    %2489 = vmatprep.subr.bf16.mxu0 %v2401
    %2490 = vmatpush1.bf16.msra.mxu0 %v2400
    %2491 = vmatprep.subr.bf16.mxu0 0
    %2492 = vmatpush1.bf16.msra.mxu0 0
    %2493 = vmatprep.subr.bf16.mxu0 0
    %2494 = vmatpush1.bf16.msra.mxu0 0
    %2495 = vmatprep.subr.bf16.mxu0 0
    %2496 = vmatpush1.bf16.msra.mxu0 0
    %2497 = vmatprep.subr.bf16.mxu0 0
    %2498 = vmatpush1.bf16.msra.mxu0 0
    %2499 = vmatprep.subr.bf16.mxu0 0
    %2500 = vmatpush1.bf16.msra.mxu0 0
    %2501 = vmatprep.subr.bf16.mxu0 0
    %2502 = vmatpush1.bf16.msra.mxu0 0
    %2503 = vmatprep.subr.bf16.mxu0 0
    %2504 = vmatpush1.bf16.msra.mxu0 0
    %2505 = vmatprep.subr.bf16.mxu0 0
    %2506 = vmatpush1.bf16.msra.mxu0 0
    %2507 = vmatprep.mubr.bf16.mxu0 0
    %2508 = vmatmul.mubr.bf16.gmra.mrb[0].mxu0 0
    %v2509 = vpop.f32.mrb[0].mxu0
    %v2510 = vadd.f32 0.0, %v2509
    %v2511 = vpop.f32.mrb[0].mxu0
    %v2512 = vadd.f32 0.0, %v2511
    %v2513 = vpop.f32.mrb[0].mxu0
    %v2514 = vpop.f32.mrb[0].mxu0
    %2515 = vdwg.mxu0
    %v2516 = vadd.f32 %v2270, %v2469
    %v2517 = vadd.f32 %v2271, %v2471
    %v2518 = vadd.f32 %v2272, %v2510
    %v2519 = vadd.f32 %v2273, %v2512
    %v2520 = vmul.f32 %v2516, %v2262
    %v2521 = vmul.f32 %v2517, %v2263
    %v2522 = vmul.f32 %v2518, %v2264
    %v2523 = vmul.f32 %v2519, %v2265
    %v2524 = vtanh.pop %v2520
    %v2525 = vtanh.pop %v2521
    %v2526 = vtanh.pop %v2522
    %v2527 = vtanh.pop %v2523
    %v2528 = vmul.f32 %v2262, %v2524
    %v2529 = vmul.f32 %v2263, %v2525
    %v2530 = vmul.f32 %v2264, %v2526
    %v2531 = vmul.f32 %v2265, %v2527
    %v2532 = vadd.f32 %v2528, %v2266
    %v2533 = vadd.f32 %v2529, %v2267
    %v2534 = vadd.f32 %v2530, %v2268
    %v2535 = vadd.f32 %v2531, %v2269
    %v2536 = vmul.f32 %v2533, 0.0
    %v2537 = vmul.f32 %v2532, %v2534
    %v2538 = vadd.f32 %v2536, %v2537
    %v2539 = vtanh.pop %v2538
    %v2540 = vmul.f32 %v2535, %v2539
    %s2541 = scalar_lea.vmem [#allocation2], 32
    %v2542 = vld [vmem:[%s2541] sm:$0xff]
    %v2543 = vld [vmem:[%s2541 + $0x8] sm:$0xff]
    %v2544 = vld [vmem:[%s2541 + $0x10] sm:$0xff]
    %v2545 = vld [vmem:[%s2541 + $0x18] sm:$0xff]
    %v2546 = vpack.c.bf16 %v2540, %v2540
    %2547 = vmatprep.subr.bf16.mxu0 %v2371
    %2548 = vmatpush1.bf16.msra.mxu0 %v2370
    %2549 = vmatprep.subr.bf16.mxu0 %v2375
    %2550 = vmatpush1.bf16.msra.mxu0 %v2374
    %2551 = vmatprep.subr.bf16.mxu0 %v2379
    %2552 = vmatpush1.bf16.msra.mxu0 %v2378
    %2553 = vmatprep.subr.bf16.mxu0 %v2383
    %2554 = vmatpush1.bf16.msra.mxu0 %v2382
    %2555 = vmatprep.subr.bf16.mxu0 %v2387
    %2556 = vmatpush1.bf16.msra.mxu0 %v2386
    %2557 = vmatprep.subr.bf16.mxu0 %v2391
    %2558 = vmatpush1.bf16.msra.mxu0 %v2390
    %2559 = vmatprep.subr.bf16.mxu0 %v2395
    %2560 = vmatpush1.bf16.msra.mxu0 %v2394
    %2561 = vmatprep.subr.bf16.mxu0 %v2399
    %2562 = vmatpush1.bf16.msra.mxu0 %v2398
    %2563 = vmatprep.subr.bf16.mxu0 0
    %2564 = vmatpush1.bf16.msra.mxu0 0
    %2565 = vmatprep.subr.bf16.mxu0 0
    %2566 = vmatpush1.bf16.msra.mxu0 0
    %2567 = vmatprep.subr.bf16.mxu0 0
    %2568 = vmatpush1.bf16.msra.mxu0 0
    %2569 = vmatprep.subr.bf16.mxu0 0
    %2570 = vmatpush1.bf16.msra.mxu0 0
    %2571 = vmatprep.subr.bf16.mxu0 0
    %2572 = vmatpush1.bf16.msra.mxu0 0
    %2573 = vmatprep.subr.bf16.mxu0 0
    %2574 = vmatpush1.bf16.msra.mxu0 0
    %2575 = vmatprep.subr.bf16.mxu0 0
    %2576 = vmatpush1.bf16.msra.mxu0 0
    %2577 = vmatprep.subr.bf16.mxu0 0
    %2578 = vmatpush1.bf16.msra.mxu0 0
    %2579 = vmatprep.mubr.bf16.mxu0 0
    %2580 = vmatmul.mubr.bf16.gmra.mrb[0].mxu0 %v2546
    %v2581 = vpop.f32.mrb[0].mxu0
    %v2582 = vadd.f32 0.0, %v2581
    %v2583 = vpop.f32.mrb[0].mxu0
    %v2584 = vadd.f32 0.0, %v2583
    %v2585 = vpop.f32.mrb[0].mxu0
    %v2586 = vpop.f32.mrb[0].mxu0
    %2587 = vdwg.mxu0
    %2588 = vmatprep.subr.bf16.mxu0 %v2373
    %2589 = vmatpush1.bf16.msra.mxu0 %v2372
    %2590 = vmatprep.subr.bf16.mxu0 %v2377
    %2591 = vmatpush1.bf16.msra.mxu0 %v2376
    %2592 = vmatprep.subr.bf16.mxu0 %v2381
    %2593 = vmatpush1.bf16.msra.mxu0 %v2380
    %2594 = vmatprep.subr.bf16.mxu0 %v2385
    %2595 = vmatpush1.bf16.msra.mxu0 %v2384
    %2596 = vmatprep.subr.bf16.mxu0 %v2389
    %2597 = vmatpush1.bf16.msra.mxu0 %v2388
    %2598 = vmatprep.subr.bf16.mxu0 %v2393
    %2599 = vmatpush1.bf16.msra.mxu0 %v2392
    %2600 = vmatprep.subr.bf16.mxu0 %v2397
    %2601 = vmatpush1.bf16.msra.mxu0 %v2396
    %2602 = vmatprep.subr.bf16.mxu0 %v2401
    %2603 = vmatpush1.bf16.msra.mxu0 %v2400
    %2604 = vmatprep.subr.bf16.mxu0 0
    %2605 = vmatpush1.bf16.msra.mxu0 0
    %2606 = vmatprep.subr.bf16.mxu0 0
    %2607 = vmatpush1.bf16.msra.mxu0 0
    %2608 = vmatprep.subr.bf16.mxu0 0
    %2609 = vmatpush1.bf16.msra.mxu0 0
    %2610 = vmatprep.subr.bf16.mxu0 0
    %2611 = vmatpush1.bf16.msra.mxu0 0
    %2612 = vmatprep.subr.bf16.mxu0 0
    %2613 = vmatpush1.bf16.msra.mxu0 0
    %2614 = vmatprep.subr.bf16.mxu0 0
    %2615 = vmatpush1.bf16.msra.mxu0 0
    %2616 = vmatprep.subr.bf16.mxu0 0
    %2617 = vmatpush1.bf16.msra.mxu0 0
    %2618 = vmatprep.subr.bf16.mxu0 0
    %2619 = vmatpush1.bf16.msra.mxu0 0
    %2620 = vmatprep.mubr.bf16.mxu0 0
    %2621 = vmatmul.mubr.bf16.gmra.mrb[0].mxu0 %v2546
    %v2622 = vpop.f32.mrb[0].mxu0
    %v2623 = vadd.f32 0.0, %v2622
    %v2624 = vpop.f32.mrb[0].mxu0
    %v2625 = vadd.f32 0.0, %v2624
    %v2626 = vpop.f32.mrb[0].mxu0
    %v2627 = vpop.f32.mrb[0].mxu0
    %2628 = vdwg.mxu0
    %v2629 = vadd.f32 %v2542, %v2582
    %v2630 = vadd.f32 %v2543, %v2584
    %v2631 = vadd.f32 %v2544, %v2623
    %v2632 = vadd.f32 %v2545, %v2625
    %v2633 = vmul.f32 %v2629, %v2262
    %v2634 = vmul.f32 %v2630, %v2263
    %v2635 = vmul.f32 %v2631, %v2264
    %v2636 = vmul.f32 %v2632, %v2265
    %v2637 = vtanh.pop %v2633
    %v2638 = vtanh.pop %v2634
    %v2639 = vtanh.pop %v2635
    %v2640 = vtanh.pop %v2636
    %v2641 = vmul.f32 %v2262, %v2637
    %v2642 = vmul.f32 %v2263, %v2638
    %v2643 = vmul.f32 %v2264, %v2639
    %v2644 = vmul.f32 %v2265, %v2640
    %v2645 = vadd.f32 %v2641, %v2266
    %v2646 = vadd.f32 %v2642, %v2267
    %v2647 = vadd.f32 %v2643, %v2268
    %v2648 = vadd.f32 %v2644, %v2269
    %v2649 = vmul.f32 %v2646, %v2538
    %v2650 = vmul.f32 %v2645, %v2647
    %v2651 = vadd.f32 %v2649, %v2650
    %v2652 = vtanh.pop %v2651
    %v2653 = vmul.f32 %v2648, %v2652
    %s2654 = scalar_lea.vmem [#allocation2], 64
    %v2655 = vld [vmem:[%s2654] sm:$0xff]
    %v2656 = vld [vmem:[%s2654 + $0x8] sm:$0xff]
    %v2657 = vld [vmem:[%s2654 + $0x10] sm:$0xff]
    %v2658 = vld [vmem:[%s2654 + $0x18] sm:$0xff]
    %v2659 = vpack.c.bf16 %v2653, %v2653
    %2660 = vmatprep.subr.bf16.mxu0 %v2371
    %2661 = vmatpush1.bf16.msra.mxu0 %v2370
    %2662 = vmatprep.subr.bf16.mxu0 %v2375
    %2663 = vmatpush1.bf16.msra.mxu0 %v2374
    %2664 = vmatprep.subr.bf16.mxu0 %v2379
    %2665 = vmatpush1.bf16.msra.mxu0 %v2378
    %2666 = vmatprep.subr.bf16.mxu0 %v2383
    %2667 = vmatpush1.bf16.msra.mxu0 %v2382
    %2668 = vmatprep.subr.bf16.mxu0 %v2387
    %2669 = vmatpush1.bf16.msra.mxu0 %v2386
    %2670 = vmatprep.subr.bf16.mxu0 %v2391
    %2671 = vmatpush1.bf16.msra.mxu0 %v2390
    %2672 = vmatprep.subr.bf16.mxu0 %v2395
    %2673 = vmatpush1.bf16.msra.mxu0 %v2394
    %2674 = vmatprep.subr.bf16.mxu0 %v2399
    %2675 = vmatpush1.bf16.msra.mxu0 %v2398
    %2676 = vmatprep.subr.bf16.mxu0 0
    %2677 = vmatpush1.bf16.msra.mxu0 0
    %2678 = vmatprep.subr.bf16.mxu0 0
    %2679 = vmatpush1.bf16.msra.mxu0 0
    %2680 = vmatprep.subr.bf16.mxu0 0
    %2681 = vmatpush1.bf16.msra.mxu0 0
    %2682 = vmatprep.subr.bf16.mxu0 0
    %2683 = vmatpush1.bf16.msra.mxu0 0
    %2684 = vmatprep.subr.bf16.mxu0 0
    %2685 = vmatpush1.bf16.msra.mxu0 0
    %2686 = vmatprep.subr.bf16.mxu0 0
    %2687 = vmatpush1.bf16.msra.mxu0 0
    %2688 = vmatprep.subr.bf16.mxu0 0
    %2689 = vmatpush1.bf16.msra.mxu0 0
    %2690 = vmatprep.subr.bf16.mxu0 0
    %2691 = vmatpush1.bf16.msra.mxu0 0
    %2692 = vmatprep.mubr.bf16.mxu0 0
    %2693 = vmatmul.mubr.bf16.gmra.mrb[0].mxu0 %v2659
    %v2694 = vpop.f32.mrb[0].mxu0
    %v2695 = vadd.f32 0.0, %v2694
    %v2696 = vpop.f32.mrb[0].mxu0
    %v2697 = vadd.f32 0.0, %v2696
    %v2698 = vpop.f32.mrb[0].mxu0
    %v2699 = vpop.f32.mrb[0].mxu0
    %2700 = vdwg.mxu0
    %2701 = vmatprep.subr.bf16.mxu0 %v2373
    %2702 = vmatpush1.bf16.msra.mxu0 %v2372
    %2703 = vmatprep.subr.bf16.mxu0 %v2377
    %2704 = vmatpush1.bf16.msra.mxu0 %v2376
    %2705 = vmatprep.subr.bf16.mxu0 %v2381
    %2706 = vmatpush1.bf16.msra.mxu0 %v2380
    %2707 = vmatprep.subr.bf16.mxu0 %v2385
    %2708 = vmatpush1.bf16.msra.mxu0 %v2384
    %2709 = vmatprep.subr.bf16.mxu0 %v2389
    %2710 = vmatpush1.bf16.msra.mxu0 %v2388
    %2711 = vmatprep.subr.bf16.mxu0 %v2393
    %2712 = vmatpush1.bf16.msra.mxu0 %v2392
    %2713 = vmatprep.subr.bf16.mxu0 %v2397
    %2714 = vmatpush1.bf16.msra.mxu0 %v2396
    %2715 = vmatprep.subr.bf16.mxu0 %v2401
    %2716 = vmatpush1.bf16.msra.mxu0 %v2400
    %2717 = vmatprep.subr.bf16.mxu0 0
    %2718 = vmatpush1.bf16.msra.mxu0 0
    %2719 = vmatprep.subr.bf16.mxu0 0
    %2720 = vmatpush1.bf16.msra.mxu0 0
    %2721 = vmatprep.subr.bf16.mxu0 0
    %2722 = vmatpush1.bf16.msra.mxu0 0
    %2723 = vmatprep.subr.bf16.mxu0 0
    %2724 = vmatpush1.bf16.msra.mxu0 0
    %2725 = vmatprep.subr.bf16.mxu0 0
    %2726 = vmatpush1.bf16.msra.mxu0 0
    %2727 = vmatprep.subr.bf16.mxu0 0
    %2728 = vmatpush1.bf16.msra.mxu0 0
    %2729 = vmatprep.subr.bf16.mxu0 0
    %2730 = vmatpush1.bf16.msra.mxu0 0
    %2731 = vmatprep.subr.bf16.mxu0 0
    %2732 = vmatpush1.bf16.msra.mxu0 0
    %2733 = vmatprep.mubr.bf16.mxu0 0
    %2734 = vmatmul.mubr.bf16.gmra.mrb[0].mxu0 %v2659
    %v2735 = vpop.f32.mrb[0].mxu0
    %v2736 = vadd.f32 0.0, %v2735
    %v2737 = vpop.f32.mrb[0].mxu0
    %v2738 = vadd.f32 0.0, %v2737
    %v2739 = vpop.f32.mrb[0].mxu0
    %v2740 = vpop.f32.mrb[0].mxu0
    %2741 = vdwg.mxu0
    %v2742 = vadd.f32 %v2655, %v2695
    %v2743 = vadd.f32 %v2656, %v2697
    %v2744 = vadd.f32 %v2657, %v2736
    %v2745 = vadd.f32 %v2658, %v2738
    %v2746 = vmul.f32 %v2742, %v2262
    %v2747 = vmul.f32 %v2743, %v2263
    %v2748 = vmul.f32 %v2744, %v2264
    %v2749 = vmul.f32 %v2745, %v2265
    %v2750 = vtanh.pop %v2746
    %v2751 = vtanh.pop %v2747
    %v2752 = vtanh.pop %v2748
    %v2753 = vtanh.pop %v2749
    %v2754 = vmul.f32 %v2262, %v2750
    %v2755 = vmul.f32 %v2263, %v2751
    %v2756 = vmul.f32 %v2264, %v2752
    %v2757 = vmul.f32 %v2265, %v2753
    %v2758 = vadd.f32 %v2754, %v2266
    %v2759 = vadd.f32 %v2755, %v2267
    %v2760 = vadd.f32 %v2756, %v2268
    %v2761 = vadd.f32 %v2757, %v2269
    %v2762 = vmul.f32 %v2759, %v2651
    %v2763 = vmul.f32 %v2758, %v2760
    %v2764 = vadd.f32 %v2762, %v2763
    %v2765 = vtanh.pop %v2764
    %v2766 = vmul.f32 %v2761, %v2765
    %s2767 = scalar_lea.vmem [#allocation2], 96
    %v2768 = vld [vmem:[%s2767] sm:$0xff]
    %v2769 = vld [vmem:[%s2767 + $0x8] sm:$0xff]
    %v2770 = vld [vmem:[%s2767 + $0x10] sm:$0xff]
    %v2771 = vld [vmem:[%s2767 + $0x18] sm:$0xff]
    %v2772 = vpack.c.bf16 %v2766, %v2766
    %2773 = vmatprep.subr.bf16.mxu0 %v2371
    %2774 = vmatpush1.bf16.msra.mxu0 %v2370
    %2775 = vmatprep.subr.bf16.mxu0 %v2375
    %2776 = vmatpush1.bf16.msra.mxu0 %v2374
    %2777 = vmatprep.subr.bf16.mxu0 %v2379
    %2778 = vmatpush1.bf16.msra.mxu0 %v2378
    %2779 = vmatprep.subr.bf16.mxu0 %v2383
    %2780 = vmatpush1.bf16.msra.mxu0 %v2382
    %2781 = vmatprep.subr.bf16.mxu0 %v2387
    %2782 = vmatpush1.bf16.msra.mxu0 %v2386
    %2783 = vmatprep.subr.bf16.mxu0 %v2391
    %2784 = vmatpush1.bf16.msra.mxu0 %v2390
    %2785 = vmatprep.subr.bf16.mxu0 %v2395
    %2786 = vmatpush1.bf16.msra.mxu0 %v2394
    %2787 = vmatprep.subr.bf16.mxu0 %v2399
    %2788 = vmatpush1.bf16.msra.mxu0 %v2398
    %2789 = vmatprep.subr.bf16.mxu0 0
    %2790 = vmatpush1.bf16.msra.mxu0 0
    %2791 = vmatprep.subr.bf16.mxu0 0
    %2792 = vmatpush1.bf16.msra.mxu0 0
    %2793 = vmatprep.subr.bf16.mxu0 0
    %2794 = vmatpush1.bf16.msra.mxu0 0
    %2795 = vmatprep.subr.bf16.mxu0 0
    %2796 = vmatpush1.bf16.msra.mxu0 0
    %2797 = vmatprep.subr.bf16.mxu0 0
    %2798 = vmatpush1.bf16.msra.mxu0 0
    %2799 = vmatprep.subr.bf16.mxu0 0
    %2800 = vmatpush1.bf16.msra.mxu0 0
    %2801 = vmatprep.subr.bf16.mxu0 0
    %2802 = vmatpush1.bf16.msra.mxu0 0
    %2803 = vmatprep.subr.bf16.mxu0 0
    %2804 = vmatpush1.bf16.msra.mxu0 0
    %2805 = vmatprep.mubr.bf16.mxu0 0
    %2806 = vmatmul.mubr.bf16.gmra.mrb[0].mxu0 %v2772
    %v2807 = vpop.f32.mrb[0].mxu0
    %v2808 = vadd.f32 0.0, %v2807
    %v2809 = vpop.f32.mrb[0].mxu0
    %v2810 = vadd.f32 0.0, %v2809
    %v2811 = vpop.f32.mrb[0].mxu0
    %v2812 = vpop.f32.mrb[0].mxu0
    %2813 = vdwg.mxu0
    %2814 = vmatprep.subr.bf16.mxu0 %v2373
    %2815 = vmatpush1.bf16.msra.mxu0 %v2372
    %2816 = vmatprep.subr.bf16.mxu0 %v2377
    %2817 = vmatpush1.bf16.msra.mxu0 %v2376
    %2818 = vmatprep.subr.bf16.mxu0 %v2381
    %2819 = vmatpush1.bf16.msra.mxu0 %v2380
    %2820 = vmatprep.subr.bf16.mxu0 %v2385
    %2821 = vmatpush1.bf16.msra.mxu0 %v2384
    %2822 = vmatprep.subr.bf16.mxu0 %v2389
    %2823 = vmatpush1.bf16.msra.mxu0 %v2388
    %2824 = vmatprep.subr.bf16.mxu0 %v2393
    %2825 = vmatpush1.bf16.msra.mxu0 %v2392
    %2826 = vmatprep.subr.bf16.mxu0 %v2397
    %2827 = vmatpush1.bf16.msra.mxu0 %v2396
    %2828 = vmatprep.subr.bf16.mxu0 %v2401
    %2829 = vmatpush1.bf16.msra.mxu0 %v2400
    %2830 = vmatprep.subr.bf16.mxu0 0
    %2831 = vmatpush1.bf16.msra.mxu0 0
    %2832 = vmatprep.subr.bf16.mxu0 0
    %2833 = vmatpush1.bf16.msra.mxu0 0
    %2834 = vmatprep.subr.bf16.mxu0 0
    %2835 = vmatpush1.bf16.msra.mxu0 0
    %2836 = vmatprep.subr.bf16.mxu0 0
    %2837 = vmatpush1.bf16.msra.mxu0 0
    %2838 = vmatprep.subr.bf16.mxu0 0
    %2839 = vmatpush1.bf16.msra.mxu0 0
    %2840 = vmatprep.subr.bf16.mxu0 0
    %2841 = vmatpush1.bf16.msra.mxu0 0
    %2842 = vmatprep.subr.bf16.mxu0 0
    %2843 = vmatpush1.bf16.msra.mxu0 0
    %2844 = vmatprep.subr.bf16.mxu0 0
    %2845 = vmatpush1.bf16.msra.mxu0 0
    %2846 = vmatprep.mubr.bf16.mxu0 0
    %2847 = vmatmul.mubr.bf16.gmra.mrb[0].mxu0 %v2772
    %v2848 = vpop.f32.mrb[0].mxu0
    %v2849 = vadd.f32 0.0, %v2848
    %v2850 = vpop.f32.mrb[0].mxu0
    %v2851 = vadd.f32 0.0, %v2850
    %v2852 = vpop.f32.mrb[0].mxu0
    %v2853 = vpop.f32.mrb[0].mxu0
    %2854 = vdwg.mxu0
    %v2855 = vadd.f32 %v2768, %v2808
    %v2856 = vadd.f32 %v2769, %v2810
    %v2857 = vadd.f32 %v2770, %v2849
    %v2858 = vadd.f32 %v2771, %v2851
    %v2859 = vmul.f32 %v2855, %v2262
    %v2860 = vmul.f32 %v2856, %v2263
    %v2861 = vmul.f32 %v2857, %v2264
    %v2862 = vmul.f32 %v2858, %v2265
    %v2863 = vtanh.pop %v2859
    %v2864 = vtanh.pop %v2860
    %v2865 = vtanh.pop %v2861
    %v2866 = vtanh.pop %v2862
    %v2867 = vmul.f32 %v2262, %v2863
    %v2868 = vmul.f32 %v2263, %v2864
    %v2869 = vmul.f32 %v2264, %v2865
    %v2870 = vmul.f32 %v2265, %v2866
    %v2871 = vadd.f32 %v2867, %v2266
    %v2872 = vadd.f32 %v2868, %v2267
    %v2873 = vadd.f32 %v2869, %v2268
    %v2874 = vadd.f32 %v2870, %v2269
    %v2875 = vmul.f32 %v2872, %v2764
    %v2876 = vmul.f32 %v2871, %v2873
    %v2877 = vadd.f32 %v2875, %v2876
    %v2878 = vtanh.pop %v2877
    %v2879 = vmul.f32 %v2874, %v2878
    %s2880 = scalar_lea.vmem [#allocation2], 128
    %v2881 = vld [vmem:[%s2880] sm:$0xff]
    %v2882 = vld [vmem:[%s2880 + $0x8] sm:$0xff]
    %v2883 = vld [vmem:[%s2880 + $0x10] sm:$0xff]
    %v2884 = vld [vmem:[%s2880 + $0x18] sm:$0xff]
    %v2885 = vpack.c.bf16 %v2879, %v2879
    %2886 = vmatprep.subr.bf16.mxu0 %v2371
    %2887 = vmatpush1.bf16.msra.mxu0 %v2370
    %2888 = vmatprep.subr.bf16.mxu0 %v2375
    %2889 = vmatpush1.bf16.msra.mxu0 %v2374
    %2890 = vmatprep.subr.bf16.mxu0 %v2379
    %2891 = vmatpush1.bf16.msra.mxu0 %v2378
    %2892 = vmatprep.subr.bf16.mxu0 %v2383
    %2893 = vmatpush1.bf16.msra.mxu0 %v2382
    %2894 = vmatprep.subr.bf16.mxu0 %v2387
    %2895 = vmatpush1.bf16.msra.mxu0 %v2386
    %2896 = vmatprep.subr.bf16.mxu0 %v2391
    %2897 = vmatpush1.bf16.msra.mxu0 %v2390
    %2898 = vmatprep.subr.bf16.mxu0 %v2395
    %2899 = vmatpush1.bf16.msra.mxu0 %v2394
    %2900 = vmatprep.subr.bf16.mxu0 %v2399
    %2901 = vmatpush1.bf16.msra.mxu0 %v2398
    %2902 = vmatprep.subr.bf16.mxu0 0
    %2903 = vmatpush1.bf16.msra.mxu0 0
    %2904 = vmatprep.subr.bf16.mxu0 0
    %2905 = vmatpush1.bf16.msra.mxu0 0
    %2906 = vmatprep.subr.bf16.mxu0 0
    %2907 = vmatpush1.bf16.msra.mxu0 0
    %2908 = vmatprep.subr.bf16.mxu0 0
    %2909 = vmatpush1.bf16.msra.mxu0 0
    %2910 = vmatprep.subr.bf16.mxu0 0
    %2911 = vmatpush1.bf16.msra.mxu0 0
    %2912 = vmatprep.subr.bf16.mxu0 0
    %2913 = vmatpush1.bf16.msra.mxu0 0
    %2914 = vmatprep.subr.bf16.mxu0 0
    %2915 = vmatpush1.bf16.msra.mxu0 0
    %2916 = vmatprep.subr.bf16.mxu0 0
    %2917 = vmatpush1.bf16.msra.mxu0 0
    %2918 = vmatprep.mubr.bf16.mxu0 0
    %2919 = vmatmul.mubr.bf16.gmra.mrb[0].mxu0 %v2885
    %v2920 = vpop.f32.mrb[0].mxu0
    %v2921 = vadd.f32 0.0, %v2920
    %v2922 = vpop.f32.mrb[0].mxu0
    %v2923 = vadd.f32 0.0, %v2922
    %v2924 = vpop.f32.mrb[0].mxu0
    %v2925 = vpop.f32.mrb[0].mxu0
    %2926 = vdwg.mxu0
    %2927 = vmatprep.subr.bf16.mxu0 %v2373
    %2928 = vmatpush1.bf16.msra.mxu0 %v2372
    %2929 = vmatprep.subr.bf16.mxu0 %v2377
    %2930 = vmatpush1.bf16.msra.mxu0 %v2376
    %2931 = vmatprep.subr.bf16.mxu0 %v2381
    %2932 = vmatpush1.bf16.msra.mxu0 %v2380
    %2933 = vmatprep.subr.bf16.mxu0 %v2385
    %2934 = vmatpush1.bf16.msra.mxu0 %v2384
    %2935 = vmatprep.subr.bf16.mxu0 %v2389
    %2936 = vmatpush1.bf16.msra.mxu0 %v2388
    %2937 = vmatprep.subr.bf16.mxu0 %v2393
    %2938 = vmatpush1.bf16.msra.mxu0 %v2392
    %2939 = vmatprep.subr.bf16.mxu0 %v2397
    %2940 = vmatpush1.bf16.msra.mxu0 %v2396
    %2941 = vmatprep.subr.bf16.mxu0 %v2401
    %2942 = vmatpush1.bf16.msra.mxu0 %v2400
    %2943 = vmatprep.subr.bf16.mxu0 0
    %2944 = vmatpush1.bf16.msra.mxu0 0
    %2945 = vmatprep.subr.bf16.mxu0 0
    %2946 = vmatpush1.bf16.msra.mxu0 0
    %2947 = vmatprep.subr.bf16.mxu0 0
    %2948 = vmatpush1.bf16.msra.mxu0 0
    %2949 = vmatprep.subr.bf16.mxu0 0
    %2950 = vmatpush1.bf16.msra.mxu0 0
    %2951 = vmatprep.subr.bf16.mxu0 0
    %2952 = vmatpush1.bf16.msra.mxu0 0
    %2953 = vmatprep.subr.bf16.mxu0 0
    %2954 = vmatpush1.bf16.msra.mxu0 0
    %2955 = vmatprep.subr.bf16.mxu0 0
    %2956 = vmatpush1.bf16.msra.mxu0 0
    %2957 = vmatprep.subr.bf16.mxu0 0
    %2958 = vmatpush1.bf16.msra.mxu0 0
    %2959 = vmatprep.mubr.bf16.mxu0 0
    %2960 = vmatmul.mubr.bf16.gmra.mrb[0].mxu0 %v2885
    %v2961 = vpop.f32.mrb[0].mxu0
    %v2962 = vadd.f32 0.0, %v2961
    %v2963 = vpop.f32.mrb[0].mxu0
    %v2964 = vadd.f32 0.0, %v2963
    %v2965 = vpop.f32.mrb[0].mxu0
    %v2966 = vpop.f32.mrb[0].mxu0
    %2967 = vdwg.mxu0
    %v2968 = vadd.f32 %v2881, %v2921
    %v2969 = vadd.f32 %v2882, %v2923
    %v2970 = vadd.f32 %v2883, %v2962
    %v2971 = vadd.f32 %v2884, %v2964
    %v2972 = vmul.f32 %v2968, %v2262
    %v2973 = vmul.f32 %v2969, %v2263
    %v2974 = vmul.f32 %v2970, %v2264
    %v2975 = vmul.f32 %v2971, %v2265
    %v2976 = vtanh.pop %v2972
    %v2977 = vtanh.pop %v2973
    %v2978 = vtanh.pop %v2974
    %v2979 = vtanh.pop %v2975
    %v2980 = vmul.f32 %v2262, %v2976
    %v2981 = vmul.f32 %v2263, %v2977
    %v2982 = vmul.f32 %v2264, %v2978
    %v2983 = vmul.f32 %v2265, %v2979
    %v2984 = vadd.f32 %v2980, %v2266
    %v2985 = vadd.f32 %v2981, %v2267
    %v2986 = vadd.f32 %v2982, %v2268
    %v2987 = vadd.f32 %v2983, %v2269
    %v2988 = vmul.f32 %v2985, %v2877
    %v2989 = vmul.f32 %v2984, %v2986
    %v2990 = vadd.f32 %v2988, %v2989
    %v2991 = vtanh.pop %v2990
    %v2992 = vmul.f32 %v2987, %v2991
    %s2993 = scalar_lea.vmem [#allocation2], 160
    %v2994 = vld [vmem:[%s2993] sm:$0xff]
    %v2995 = vld [vmem:[%s2993 + $0x8] sm:$0xff]
    %v2996 = vld [vmem:[%s2993 + $0x10] sm:$0xff]
    %v2997 = vld [vmem:[%s2993 + $0x18] sm:$0xff]
    %v2998 = vpack.c.bf16 %v2992, %v2992
    %2999 = vmatprep.subr.bf16.mxu0 %v2371
    %3000 = vmatpush1.bf16.msra.mxu0 %v2370
    %3001 = vmatprep.subr.bf16.mxu0 %v2375
    %3002 = vmatpush1.bf16.msra.mxu0 %v2374
    %3003 = vmatprep.subr.bf16.mxu0 %v2379
    %3004 = vmatpush1.bf16.msra.mxu0 %v2378
    %3005 = vmatprep.subr.bf16.mxu0 %v2383
    %3006 = vmatpush1.bf16.msra.mxu0 %v2382
    %3007 = vmatprep.subr.bf16.mxu0 %v2387
    %3008 = vmatpush1.bf16.msra.mxu0 %v2386
    %3009 = vmatprep.subr.bf16.mxu0 %v2391
    %3010 = vmatpush1.bf16.msra.mxu0 %v2390
    %3011 = vmatprep.subr.bf16.mxu0 %v2395
    %3012 = vmatpush1.bf16.msra.mxu0 %v2394
    %3013 = vmatprep.subr.bf16.mxu0 %v2399
    %3014 = vmatpush1.bf16.msra.mxu0 %v2398
    %3015 = vmatprep.subr.bf16.mxu0 0
    %3016 = vmatpush1.bf16.msra.mxu0 0
    %3017 = vmatprep.subr.bf16.mxu0 0
    %3018 = vmatpush1.bf16.msra.mxu0 0
    %3019 = vmatprep.subr.bf16.mxu0 0
    %3020 = vmatpush1.bf16.msra.mxu0 0
    %3021 = vmatprep.subr.bf16.mxu0 0
    %3022 = vmatpush1.bf16.msra.mxu0 0
    %3023 = vmatprep.subr.bf16.mxu0 0
    %3024 = vmatpush1.bf16.msra.mxu0 0
    %3025 = vmatprep.subr.bf16.mxu0 0
    %3026 = vmatpush1.bf16.msra.mxu0 0
    %3027 = vmatprep.subr.bf16.mxu0 0
    %3028 = vmatpush1.bf16.msra.mxu0 0
    %3029 = vmatprep.subr.bf16.mxu0 0
    %3030 = vmatpush1.bf16.msra.mxu0 0
    %3031 = vmatprep.mubr.bf16.mxu0 0
    %3032 = vmatmul.mubr.bf16.gmra.mrb[0].mxu0 %v2998
    %v3033 = vpop.f32.mrb[0].mxu0
    %v3034 = vadd.f32 0.0, %v3033
    %v3035 = vpop.f32.mrb[0].mxu0
    %v3036 = vadd.f32 0.0, %v3035
    %v3037 = vpop.f32.mrb[0].mxu0
    %v3038 = vpop.f32.mrb[0].mxu0
    %3039 = vdwg.mxu0
    %3040 = vmatprep.subr.bf16.mxu0 %v2373
    %3041 = vmatpush1.bf16.msra.mxu0 %v2372
    %3042 = vmatprep.subr.bf16.mxu0 %v2377
    %3043 = vmatpush1.bf16.msra.mxu0 %v2376
    %3044 = vmatprep.subr.bf16.mxu0 %v2381
    %3045 = vmatpush1.bf16.msra.mxu0 %v2380
    %3046 = vmatprep.subr.bf16.mxu0 %v2385
    %3047 = vmatpush1.bf16.msra.mxu0 %v2384
    %3048 = vmatprep.subr.bf16.mxu0 %v2389
    %3049 = vmatpush1.bf16.msra.mxu0 %v2388
    %3050 = vmatprep.subr.bf16.mxu0 %v2393
    %3051 = vmatpush1.bf16.msra.mxu0 %v2392
    %3052 = vmatprep.subr.bf16.mxu0 %v2397
    %3053 = vmatpush1.bf16.msra.mxu0 %v2396
    %3054 = vmatprep.subr.bf16.mxu0 %v2401
    %3055 = vmatpush1.bf16.msra.mxu0 %v2400
    %3056 = vmatprep.subr.bf16.mxu0 0
    %3057 = vmatpush1.bf16.msra.mxu0 0
    %3058 = vmatprep.subr.bf16.mxu0 0
    %3059 = vmatpush1.bf16.msra.mxu0 0
    %3060 = vmatprep.subr.bf16.mxu0 0
    %3061 = vmatpush1.bf16.msra.mxu0 0
    %3062 = vmatprep.subr.bf16.mxu0 0
    %3063 = vmatpush1.bf16.msra.mxu0 0
    %3064 = vmatprep.subr.bf16.mxu0 0
    %3065 = vmatpush1.bf16.msra.mxu0 0
    %3066 = vmatprep.subr.bf16.mxu0 0
    %3067 = vmatpush1.bf16.msra.mxu0 0
    %3068 = vmatprep.subr.bf16.mxu0 0
    %3069 = vmatpush1.bf16.msra.mxu0 0
    %3070 = vmatprep.subr.bf16.mxu0 0
    %3071 = vmatpush1.bf16.msra.mxu0 0
    %3072 = vmatprep.mubr.bf16.mxu0 0
    %3073 = vmatmul.mubr.bf16.gmra.mrb[0].mxu0 %v2998
    %v3074 = vpop.f32.mrb[0].mxu0
    %v3075 = vadd.f32 0.0, %v3074
    %v3076 = vpop.f32.mrb[0].mxu0
    %v3077 = vadd.f32 0.0, %v3076
    %v3078 = vpop.f32.mrb[0].mxu0
    %v3079 = vpop.f32.mrb[0].mxu0
    %3080 = vdwg.mxu0
    %v3081 = vadd.f32 %v2994, %v3034
    %v3082 = vadd.f32 %v2995, %v3036
    %v3083 = vadd.f32 %v2996, %v3075
    %v3084 = vadd.f32 %v2997, %v3077
    %v3085 = vmul.f32 %v3081, %v2262
    %v3086 = vmul.f32 %v3082, %v2263
    %v3087 = vmul.f32 %v3083, %v2264
    %v3088 = vmul.f32 %v3084, %v2265
    %v3089 = vtanh.pop %v3085
    %v3090 = vtanh.pop %v3086
    %v3091 = vtanh.pop %v3087
    %v3092 = vtanh.pop %v3088
    %v3093 = vmul.f32 %v2262, %v3089
    %v3094 = vmul.f32 %v2263, %v3090
    %v3095 = vmul.f32 %v2264, %v3091
    %v3096 = vmul.f32 %v2265, %v3092
    %v3097 = vadd.f32 %v3093, %v2266
    %v3098 = vadd.f32 %v3094, %v2267
    %v3099 = vadd.f32 %v3095, %v2268
    %v3100 = vadd.f32 %v3096, %v2269
    %v3101 = vmul.f32 %v3098, %v2990
    %v3102 = vmul.f32 %v3097, %v3099
    %v3103 = vadd.f32 %v3101, %v3102
    %v3104 = vtanh.pop %v3103
    %v3105 = vmul.f32 %v3100, %v3104
    %s3106 = scalar_lea.vmem [#allocation2], 192
    %v3107 = vld [vmem:[%s3106] sm:$0xff]
    %v3108 = vld [vmem:[%s3106 + $0x8] sm:$0xff]
    %v3109 = vld [vmem:[%s3106 + $0x10] sm:$0xff]
    %v3110 = vld [vmem:[%s3106 + $0x18] sm:$0xff]
    %v3111 = vpack.c.bf16 %v3105, %v3105
    %3112 = vmatprep.subr.bf16.mxu0 %v2371
    %3113 = vmatpush1.bf16.msra.mxu0 %v2370
    %3114 = vmatprep.subr.bf16.mxu0 %v2375
    %3115 = vmatpush1.bf16.msra.mxu0 %v2374
    %3116 = vmatprep.subr.bf16.mxu0 %v2379
    %3117 = vmatpush1.bf16.msra.mxu0 %v2378
    %3118 = vmatprep.subr.bf16.mxu0 %v2383
    %3119 = vmatpush1.bf16.msra.mxu0 %v2382
    %3120 = vmatprep.subr.bf16.mxu0 %v2387
    %3121 = vmatpush1.bf16.msra.mxu0 %v2386
    %3122 = vmatprep.subr.bf16.mxu0 %v2391
    %3123 = vmatpush1.bf16.msra.mxu0 %v2390
    %3124 = vmatprep.subr.bf16.mxu0 %v2395
    %3125 = vmatpush1.bf16.msra.mxu0 %v2394
    %3126 = vmatprep.subr.bf16.mxu0 %v2399
    %3127 = vmatpush1.bf16.msra.mxu0 %v2398
    %3128 = vmatprep.subr.bf16.mxu0 0
    %3129 = vmatpush1.bf16.msra.mxu0 0
    %3130 = vmatprep.subr.bf16.mxu0 0
    %3131 = vmatpush1.bf16.msra.mxu0 0
    %3132 = vmatprep.subr.bf16.mxu0 0
    %3133 = vmatpush1.bf16.msra.mxu0 0
    %3134 = vmatprep.subr.bf16.mxu0 0
    %3135 = vmatpush1.bf16.msra.mxu0 0
    %3136 = vmatprep.subr.bf16.mxu0 0
    %3137 = vmatpush1.bf16.msra.mxu0 0
    %3138 = vmatprep.subr.bf16.mxu0 0
    %3139 = vmatpush1.bf16.msra.mxu0 0
    %3140 = vmatprep.subr.bf16.mxu0 0
    %3141 = vmatpush1.bf16.msra.mxu0 0
    %3142 = vmatprep.subr.bf16.mxu0 0
    %3143 = vmatpush1.bf16.msra.mxu0 0
    %3144 = vmatprep.mubr.bf16.mxu0 0
    %3145 = vmatmul.mubr.bf16.gmra.mrb[0].mxu0 %v3111
    %v3146 = vpop.f32.mrb[0].mxu0
    %v3147 = vadd.f32 0.0, %v3146
    %v3148 = vpop.f32.mrb[0].mxu0
    %v3149 = vadd.f32 0.0, %v3148
    %v3150 = vpop.f32.mrb[0].mxu0
    %v3151 = vpop.f32.mrb[0].mxu0
    %3152 = vdwg.mxu0
    %3153 = vmatprep.subr.bf16.mxu0 %v2373
    %3154 = vmatpush1.bf16.msra.mxu0 %v2372
    %3155 = vmatprep.subr.bf16.mxu0 %v2377
    %3156 = vmatpush1.bf16.msra.mxu0 %v2376
    %3157 = vmatprep.subr.bf16.mxu0 %v2381
    %3158 = vmatpush1.bf16.msra.mxu0 %v2380
    %3159 = vmatprep.subr.bf16.mxu0 %v2385
    %3160 = vmatpush1.bf16.msra.mxu0 %v2384
    %3161 = vmatprep.subr.bf16.mxu0 %v2389
    %3162 = vmatpush1.bf16.msra.mxu0 %v2388
    %3163 = vmatprep.subr.bf16.mxu0 %v2393
    %3164 = vmatpush1.bf16.msra.mxu0 %v2392
    %3165 = vmatprep.subr.bf16.mxu0 %v2397
    %3166 = vmatpush1.bf16.msra.mxu0 %v2396
    %3167 = vmatprep.subr.bf16.mxu0 %v2401
    %3168 = vmatpush1.bf16.msra.mxu0 %v2400
    %3169 = vmatprep.subr.bf16.mxu0 0
    %3170 = vmatpush1.bf16.msra.mxu0 0
    %3171 = vmatprep.subr.bf16.mxu0 0
    %3172 = vmatpush1.bf16.msra.mxu0 0
    %3173 = vmatprep.subr.bf16.mxu0 0
    %3174 = vmatpush1.bf16.msra.mxu0 0
    %3175 = vmatprep.subr.bf16.mxu0 0
    %3176 = vmatpush1.bf16.msra.mxu0 0
    %3177 = vmatprep.subr.bf16.mxu0 0
    %3178 = vmatpush1.bf16.msra.mxu0 0
    %3179 = vmatprep.subr.bf16.mxu0 0
    %3180 = vmatpush1.bf16.msra.mxu0 0
    %3181 = vmatprep.subr.bf16.mxu0 0
    %3182 = vmatpush1.bf16.msra.mxu0 0
    %3183 = vmatprep.subr.bf16.mxu0 0
    %3184 = vmatpush1.bf16.msra.mxu0 0
    %3185 = vmatprep.mubr.bf16.mxu0 0
    %3186 = vmatmul.mubr.bf16.gmra.mrb[0].mxu0 %v3111
    %v3187 = vpop.f32.mrb[0].mxu0
    %v3188 = vadd.f32 0.0, %v3187
    %v3189 = vpop.f32.mrb[0].mxu0
    %v3190 = vadd.f32 0.0, %v3189
    %v3191 = vpop.f32.mrb[0].mxu0
    %v3192 = vpop.f32.mrb[0].mxu0
    %3193 = vdwg.mxu0
    %v3194 = vadd.f32 %v3107, %v3147
    %v3195 = vadd.f32 %v3108, %v3149
    %v3196 = vadd.f32 %v3109, %v3188
    %v3197 = vadd.f32 %v3110, %v3190
    %v3198 = vmul.f32 %v3194, %v2262
    %v3199 = vmul.f32 %v3195, %v2263
    %v3200 = vmul.f32 %v3196, %v2264
    %v3201 = vmul.f32 %v3197, %v2265
    %v3202 = vtanh.pop %v3198
    %v3203 = vtanh.pop %v3199
    %v3204 = vtanh.pop %v3200
    %v3205 = vtanh.pop %v3201
    %v3206 = vmul.f32 %v2262, %v3202
    %v3207 = vmul.f32 %v2263, %v3203
    %v3208 = vmul.f32 %v2264, %v3204
    %v3209 = vmul.f32 %v2265, %v3205
    %v3210 = vadd.f32 %v3206, %v2266
    %v3211 = vadd.f32 %v3207, %v2267
    %v3212 = vadd.f32 %v3208, %v2268
    %v3213 = vadd.f32 %v3209, %v2269
    %v3214 = vmul.f32 %v3211, %v3103
    %v3215 = vmul.f32 %v3210, %v3212
    %v3216 = vadd.f32 %v3214, %v3215
    %v3217 = vtanh.pop %v3216
    %v3218 = vmul.f32 %v3213, %v3217
    %s3219 = scalar_lea.vmem [#allocation2], 224
    %v3220 = vld [vmem:[%s3219] sm:$0xff]
    %v3221 = vld [vmem:[%s3219 + $0x8] sm:$0xff]
    %v3222 = vld [vmem:[%s3219 + $0x10] sm:$0xff]
    %v3223 = vld [vmem:[%s3219 + $0x18] sm:$0xff]
    %v3224 = vpack.c.bf16 %v3218, %v3218
    %3225 = vmatprep.subr.bf16.mxu0 %v2371
    %3226 = vmatpush1.bf16.msra.mxu0 %v2370
    %3227 = vmatprep.subr.bf16.mxu0 %v2375
    %3228 = vmatpush1.bf16.msra.mxu0 %v2374
    %3229 = vmatprep.subr.bf16.mxu0 %v2379
    %3230 = vmatpush1.bf16.msra.mxu0 %v2378
    %3231 = vmatprep.subr.bf16.mxu0 %v2383
    %3232 = vmatpush1.bf16.msra.mxu0 %v2382
    %3233 = vmatprep.subr.bf16.mxu0 %v2387
    %3234 = vmatpush1.bf16.msra.mxu0 %v2386
    %3235 = vmatprep.subr.bf16.mxu0 %v2391
    %3236 = vmatpush1.bf16.msra.mxu0 %v2390
    %3237 = vmatprep.subr.bf16.mxu0 %v2395
    %3238 = vmatpush1.bf16.msra.mxu0 %v2394
    %3239 = vmatprep.subr.bf16.mxu0 %v2399
    %3240 = vmatpush1.bf16.msra.mxu0 %v2398
    %3241 = vmatprep.subr.bf16.mxu0 0
    %3242 = vmatpush1.bf16.msra.mxu0 0
    %3243 = vmatprep.subr.bf16.mxu0 0
    %3244 = vmatpush1.bf16.msra.mxu0 0
    %3245 = vmatprep.subr.bf16.mxu0 0
    %3246 = vmatpush1.bf16.msra.mxu0 0
    %3247 = vmatprep.subr.bf16.mxu0 0
    %3248 = vmatpush1.bf16.msra.mxu0 0
    %3249 = vmatprep.subr.bf16.mxu0 0
    %3250 = vmatpush1.bf16.msra.mxu0 0
    %3251 = vmatprep.subr.bf16.mxu0 0
    %3252 = vmatpush1.bf16.msra.mxu0 0
    %3253 = vmatprep.subr.bf16.mxu0 0
    %3254 = vmatpush1.bf16.msra.mxu0 0
    %3255 = vmatprep.subr.bf16.mxu0 0
    %3256 = vmatpush1.bf16.msra.mxu0 0
    %3257 = vmatprep.mubr.bf16.mxu0 0
    %3258 = vmatmul.mubr.bf16.gmra.mrb[0].mxu0 %v3224
    %v3259 = vpop.f32.mrb[0].mxu0
    %v3260 = vadd.f32 0.0, %v3259
    %v3261 = vpop.f32.mrb[0].mxu0
    %v3262 = vadd.f32 0.0, %v3261
    %v3263 = vpop.f32.mrb[0].mxu0
    %v3264 = vpop.f32.mrb[0].mxu0
    %3265 = vdwg.mxu0
    %3266 = vmatprep.subr.bf16.mxu0 %v2373
    %3267 = vmatpush1.bf16.msra.mxu0 %v2372
    %3268 = vmatprep.subr.bf16.mxu0 %v2377
    %3269 = vmatpush1.bf16.msra.mxu0 %v2376
    %3270 = vmatprep.subr.bf16.mxu0 %v2381
    %3271 = vmatpush1.bf16.msra.mxu0 %v2380
    %3272 = vmatprep.subr.bf16.mxu0 %v2385
    %3273 = vmatpush1.bf16.msra.mxu0 %v2384
    %3274 = vmatprep.subr.bf16.mxu0 %v2389
    %3275 = vmatpush1.bf16.msra.mxu0 %v2388
    %3276 = vmatprep.subr.bf16.mxu0 %v2393
    %3277 = vmatpush1.bf16.msra.mxu0 %v2392
    %3278 = vmatprep.subr.bf16.mxu0 %v2397
    %3279 = vmatpush1.bf16.msra.mxu0 %v2396
    %3280 = vmatprep.subr.bf16.mxu0 %v2401
    %3281 = vmatpush1.bf16.msra.mxu0 %v2400
    %3282 = vmatprep.subr.bf16.mxu0 0
    %3283 = vmatpush1.bf16.msra.mxu0 0
    %3284 = vmatprep.subr.bf16.mxu0 0
    %3285 = vmatpush1.bf16.msra.mxu0 0
    %3286 = vmatprep.subr.bf16.mxu0 0
    %3287 = vmatpush1.bf16.msra.mxu0 0
    %3288 = vmatprep.subr.bf16.mxu0 0
    %3289 = vmatpush1.bf16.msra.mxu0 0
    %3290 = vmatprep.subr.bf16.mxu0 0
    %3291 = vmatpush1.bf16.msra.mxu0 0
    %3292 = vmatprep.subr.bf16.mxu0 0
    %3293 = vmatpush1.bf16.msra.mxu0 0
    %3294 = vmatprep.subr.bf16.mxu0 0
    %3295 = vmatpush1.bf16.msra.mxu0 0
    %3296 = vmatprep.subr.bf16.mxu0 0
    %3297 = vmatpush1.bf16.msra.mxu0 0
    %3298 = vmatprep.mubr.bf16.mxu0 0
    %3299 = vmatmul.mubr.bf16.gmra.mrb[0].mxu0 %v3224
    %v3300 = vpop.f32.mrb[0].mxu0
    %v3301 = vadd.f32 0.0, %v3300
    %v3302 = vpop.f32.mrb[0].mxu0
    %v3303 = vadd.f32 0.0, %v3302
    %v3304 = vpop.f32.mrb[0].mxu0
    %v3305 = vpop.f32.mrb[0].mxu0
    %3306 = vdwg.mxu0
    %v3307 = vadd.f32 %v3220, %v3260
    %v3308 = vadd.f32 %v3221, %v3262
    %v3309 = vadd.f32 %v3222, %v3301
    %v3310 = vadd.f32 %v3223, %v3303
    %v3311 = vmul.f32 %v3307, %v2262
    %v3312 = vmul.f32 %v3308, %v2263
    %v3313 = vmul.f32 %v3309, %v2264
    %v3314 = vmul.f32 %v3310, %v2265
    %v3315 = vtanh.pop %v3311
    %v3316 = vtanh.pop %v3312
    %v3317 = vtanh.pop %v3313
    %v3318 = vtanh.pop %v3314
    %v3319 = vmul.f32 %v2262, %v3315
    %v3320 = vmul.f32 %v2263, %v3316
    %v3321 = vmul.f32 %v2264, %v3317
    %v3322 = vmul.f32 %v2265, %v3318
    %v3323 = vadd.f32 %v3319, %v2266
    %v3324 = vadd.f32 %v3320, %v2267
    %v3325 = vadd.f32 %v3321, %v2268
    %v3326 = vadd.f32 %v3322, %v2269
    %v3327 = vmul.f32 %v3324, %v3216
    %v3328 = vmul.f32 %v3323, %v3325
    %v3329 = vadd.f32 %v3327, %v3328
    %v3330 = vtanh.pop %v3329
    %v3331 = vmul.f32 %v3326, %v3330
    %v3332 = vld [vmem:[#allocation11] sm:$0xff]
    %v3333 = vld [vmem:[#allocation11 + $0x8] sm:$0xff]
    %v3334 = vld [vmem:[#allocation11 + $0x10] sm:$0xff]
    %v3335 = vld [vmem:[#allocation11 + $0x18] sm:$0xff]
    %v3336 = vld [vmem:[#allocation11 + $0x20] sm:$0xff]
    %v3337 = vld [vmem:[#allocation11 + $0x28] sm:$0xff]
    %v3338 = vld [vmem:[#allocation11 + $0x30] sm:$0xff]
    %v3339 = vld [vmem:[#allocation11 + $0x38] sm:$0xff]
    %v3340 = vld [vmem:[#allocation11 + $0x40] sm:$0xff]
    %v3341 = vld [vmem:[#allocation11 + $0x48] sm:$0xff]
    %v3342 = vld [vmem:[#allocation11 + $0x50] sm:$0xff]
    %v3343 = vld [vmem:[#allocation11 + $0x58] sm:$0xff]
    %v3344 = vld [vmem:[#allocation11 + $0x60] sm:$0xff]
    %v3345 = vld [vmem:[#allocation11 + $0x68] sm:$0xff]
    %v3346 = vld [vmem:[#allocation11 + $0x70] sm:$0xff]
    %v3347 = vld [vmem:[#allocation11 + $0x78] sm:$0xff]
    %v3348 = vld [vmem:[#allocation11 + $0x80] sm:$0xff]
    %v3349 = vld [vmem:[#allocation11 + $0x88] sm:$0xff]
    %v3350 = vld [vmem:[#allocation11 + $0x90] sm:$0xff]
    %v3351 = vld [vmem:[#allocation11 + $0x98] sm:$0xff]
    %v3352 = vld [vmem:[#allocation11 + $0xa0] sm:$0xff]
    %v3353 = vld [vmem:[#allocation11 + $0xa8] sm:$0xff]
    %v3354 = vld [vmem:[#allocation11 + $0xb0] sm:$0xff]
    %v3355 = vld [vmem:[#allocation11 + $0xb8] sm:$0xff]
    %v3356 = vld [vmem:[#allocation11 + $0xc0] sm:$0xff]
    %v3357 = vld [vmem:[#allocation11 + $0xc8] sm:$0xff]
    %v3358 = vld [vmem:[#allocation11 + $0xd0] sm:$0xff]
    %v3359 = vld [vmem:[#allocation11 + $0xd8] sm:$0xff]
    %v3360 = vld [vmem:[#allocation11 + $0xe0] sm:$0xff]
    %v3361 = vld [vmem:[#allocation11 + $0xe8] sm:$0xff]
    %v3362 = vld [vmem:[#allocation11 + $0xf0] sm:$0xff]
    %v3363 = vld [vmem:[#allocation11 + $0xf8] sm:$0xff]
    %v3364 = vld [vmem:[%s6] sm:$0x3]
    %v3366 = vlaneseq
    %v3367 = vshrl.u32 %v3366, 7
    %v3368 = vsub.s32 0, %v3367
    %v3369 = vrot.slane %v3364, %v3368
    %v3370 = vlaneseq
    %v3371 = vshrl.u32 %v3370, 7
    %v3372 = vsub.s32 1, %v3371
    %v3373 = vrot.slane %v3364, %v3372
    %3376 = vmatprep.subr.mxu0 %v3333
    %3377 = vmatpush1.msra.mxu0 %v3332
    %3378 = vmatprep.subr.mxu0 %v3335
    %3379 = vmatpush1.msra.mxu0 %v3334
    %3380 = vmatprep.subr.mxu0 %v3337
    %3381 = vmatpush1.msra.mxu0 %v3336
    %3382 = vmatprep.subr.mxu0 %v3339
    %3383 = vmatpush1.msra.mxu0 %v3338
    %3384 = vmatprep.subr.mxu0 %v3341
    %3385 = vmatpush1.msra.mxu0 %v3340
    %3386 = vmatprep.subr.mxu0 %v3343
    %3387 = vmatpush1.msra.mxu0 %v3342
    %3388 = vmatprep.subr.mxu0 %v3345
    %3389 = vmatpush1.msra.mxu0 %v3344
    %3390 = vmatprep.subr.mxu0 %v3347
    %3391 = vmatpush1.msra.mxu0 %v3346
    %3392 = vmatprep.subr.mxu0 %v3349
    %3393 = vmatpush1.msra.mxu0 %v3348
    %3394 = vmatprep.subr.mxu0 %v3351
    %3395 = vmatpush1.msra.mxu0 %v3350
    %3396 = vmatprep.subr.mxu0 %v3353
    %3397 = vmatpush1.msra.mxu0 %v3352
    %3398 = vmatprep.subr.mxu0 %v3355
    %3399 = vmatpush1.msra.mxu0 %v3354
    %3400 = vmatprep.subr.mxu0 %v3357
    %3401 = vmatpush1.msra.mxu0 %v3356
    %3402 = vmatprep.subr.mxu0 %v3359
    %3403 = vmatpush1.msra.mxu0 %v3358
    %3404 = vmatprep.subr.mxu0 %v3361
    %3405 = vmatpush1.msra.mxu0 %v3360
    %3406 = vmatprep.subr.mxu0 %v3363
    %3407 = vmatpush1.msra.mxu0 %v3362
    %3408 = vmatprep.subr.mxu0 0.0
    %3409 = vmatpush1.msra.mxu0 0.0
    %3410 = vmatprep.subr.mxu0 0.0
    %3411 = vmatpush1.msra.mxu0 0.0
    %3412 = vmatprep.subr.mxu0 0.0
    %3413 = vmatpush1.msra.mxu0 0.0
    %3414 = vmatprep.subr.mxu0 0.0
    %3415 = vmatpush1.msra.mxu0 0.0
    %3416 = vmatprep.subr.mxu0 0.0
    %3417 = vmatpush1.msra.mxu0 0.0
    %3418 = vmatprep.subr.mxu0 0.0
    %3419 = vmatpush1.msra.mxu0 0.0
    %3420 = vmatprep.subr.mxu0 0.0
    %3421 = vmatpush1.msra.mxu0 0.0
    %3422 = vmatprep.subr.mxu0 0.0
    %3423 = vmatpush1.msra.mxu0 0.0
    %3424 = vmatprep.subr.mxu0 0.0
    %3425 = vmatpush1.msra.mxu0 0.0
    %3426 = vmatprep.subr.mxu0 0.0
    %3427 = vmatpush1.msra.mxu0 0.0
    %3428 = vmatprep.subr.mxu0 0.0
    %3429 = vmatpush1.msra.mxu0 0.0
    %3430 = vmatprep.subr.mxu0 0.0
    %3431 = vmatpush1.msra.mxu0 0.0
    %3432 = vmatprep.subr.mxu0 0.0
    %3433 = vmatpush1.msra.mxu0 0.0
    %3434 = vmatprep.subr.mxu0 0.0
    %3435 = vmatpush1.msra.mxu0 0.0
    %3436 = vmatprep.subr.mxu0 0.0
    %3437 = vmatpush1.msra.mxu0 0.0
    %3438 = vmatprep.subr.mxu0 0.0
    %3439 = vmatpush1.msra.mxu0 0.0
    %3440 = vmatprep.mubr.f32.mxu0 0.0
    %3441 = vmatmul.mubr.f32.gmra.mrb[0].mxu0 %v3331
    %v3442 = vpop.f32.mrb[0].mxu0
    %v3443 = vadd.f32 %v3369, %v3442
    %v3444 = vpop.f32.mrb[0].mxu0
    %v3445 = vadd.f32 %v3373, %v3444
    %3446 = vdwg.mxu0
    %v3447 = vmax.f32 %v3443, 0.0
    %v3448 = vmax.f32 %v3445, 0.0
    %v3449 = vld [vmem:[#allocation12] sm:$0xff]
    %v3450 = vld [vmem:[#allocation12 + $0x8] sm:$0xff]
    %v3451 = vld [vmem:[#allocation12 + $0x10] sm:$0xff]
    %v3452 = vld [vmem:[#allocation12 + $0x18] sm:$0xff]
    %v3453 = vld [vmem:[#allocation12 + $0x20] sm:$0xff]
    %v3454 = vld [vmem:[#allocation12 + $0x28] sm:$0xff]
    %v3455 = vld [vmem:[#allocation12 + $0x30] sm:$0xff]
    %v3456 = vld [vmem:[#allocation12 + $0x38] sm:$0xff]
    %v3457 = vld [vmem:[#allocation12 + $0x40] sm:$0xff]
    %v3458 = vld [vmem:[#allocation12 + $0x48] sm:$0xff]
    %v3459 = vld [vmem:[#allocation12 + $0x50] sm:$0xff]
    %v3460 = vld [vmem:[#allocation12 + $0x58] sm:$0xff]
    %v3461 = vld [vmem:[#allocation12 + $0x60] sm:$0xff]
    %v3462 = vld [vmem:[#allocation12 + $0x68] sm:$0xff]
    %v3463 = vld [vmem:[#allocation12 + $0x70] sm:$0xff]
    %v3464 = vld [vmem:[#allocation12 + $0x78] sm:$0xff]
    %v3465 = vld [vmem:[#allocation12 + $0x80] sm:$0xff]
    %v3466 = vld [vmem:[#allocation12 + $0x88] sm:$0xff]
    %v3467 = vld [vmem:[#allocation12 + $0x90] sm:$0xff]
    %v3468 = vld [vmem:[#allocation12 + $0x98] sm:$0xff]
    %v3469 = vld [vmem:[#allocation12 + $0xa0] sm:$0xff]
    %v3470 = vld [vmem:[#allocation12 + $0xa8] sm:$0xff]
    %v3471 = vld [vmem:[#allocation12 + $0xb0] sm:$0xff]
    %v3472 = vld [vmem:[#allocation12 + $0xb8] sm:$0xff]
    %v3473 = vld [vmem:[#allocation12 + $0xc0] sm:$0xff]
    %v3474 = vld [vmem:[#allocation12 + $0xc8] sm:$0xff]
    %v3475 = vld [vmem:[#allocation12 + $0xd0] sm:$0xff]
    %v3476 = vld [vmem:[#allocation12 + $0xd8] sm:$0xff]
    %v3477 = vld [vmem:[#allocation12 + $0xe0] sm:$0xff]
    %v3478 = vld [vmem:[#allocation12 + $0xe8] sm:$0xff]
    %v3479 = vld [vmem:[#allocation12 + $0xf0] sm:$0xff]
    %v3480 = vld [vmem:[#allocation12 + $0xf8] sm:$0xff]
    %v3481 = vld [vmem:[%s8] sm:$0x1]
    %v3483 = vlaneseq
    %v3484 = vshrl.u32 %v3483, 7
    %v3485 = vsub.s32 0, %v3484
    %v3486 = vrot.slane %v3481, %v3485
    %3488 = vmatprep.subr.mxu0 0.0
    %3489 = vmatpush1.msra.mxu0 %v3449
    %3490 = vmatprep.subr.mxu0 0.0
    %3491 = vmatpush1.msra.mxu0 %v3450
    %3492 = vmatprep.subr.mxu0 0.0
    %3493 = vmatpush1.msra.mxu0 %v3451
    %3494 = vmatprep.subr.mxu0 0.0
    %3495 = vmatpush1.msra.mxu0 %v3452
    %3496 = vmatprep.subr.mxu0 0.0
    %3497 = vmatpush1.msra.mxu0 %v3453
    %3498 = vmatprep.subr.mxu0 0.0
    %3499 = vmatpush1.msra.mxu0 %v3454
    %3500 = vmatprep.subr.mxu0 0.0
    %3501 = vmatpush1.msra.mxu0 %v3455
    %3502 = vmatprep.subr.mxu0 0.0
    %3503 = vmatpush1.msra.mxu0 %v3456
    %3504 = vmatprep.subr.mxu0 0.0
    %3505 = vmatpush1.msra.mxu0 %v3457
    %3506 = vmatprep.subr.mxu0 0.0
    %3507 = vmatpush1.msra.mxu0 %v3458
    %3508 = vmatprep.subr.mxu0 0.0
    %3509 = vmatpush1.msra.mxu0 %v3459
    %3510 = vmatprep.subr.mxu0 0.0
    %3511 = vmatpush1.msra.mxu0 %v3460
    %3512 = vmatprep.subr.mxu0 0.0
    %3513 = vmatpush1.msra.mxu0 %v3461
    %3514 = vmatprep.subr.mxu0 0.0
    %3515 = vmatpush1.msra.mxu0 %v3462
    %3516 = vmatprep.subr.mxu0 0.0
    %3517 = vmatpush1.msra.mxu0 %v3463
    %3518 = vmatprep.subr.mxu0 0.0
    %3519 = vmatpush1.msra.mxu0 %v3464
    %3520 = vmatprep.subr.mxu0 0.0
    %3521 = vmatpush1.msra.mxu0 %v3465
    %3522 = vmatprep.subr.mxu0 0.0
    %3523 = vmatpush1.msra.mxu0 %v3466
    %3524 = vmatprep.subr.mxu0 0.0
    %3525 = vmatpush1.msra.mxu0 %v3467
    %3526 = vmatprep.subr.mxu0 0.0
    %3527 = vmatpush1.msra.mxu0 %v3468
    %3528 = vmatprep.subr.mxu0 0.0
    %3529 = vmatpush1.msra.mxu0 %v3469
    %3530 = vmatprep.subr.mxu0 0.0
    %3531 = vmatpush1.msra.mxu0 %v3470
    %3532 = vmatprep.subr.mxu0 0.0
    %3533 = vmatpush1.msra.mxu0 %v3471
    %3534 = vmatprep.subr.mxu0 0.0
    %3535 = vmatpush1.msra.mxu0 %v3472
    %3536 = vmatprep.subr.mxu0 0.0
    %3537 = vmatpush1.msra.mxu0 %v3473
    %3538 = vmatprep.subr.mxu0 0.0
    %3539 = vmatpush1.msra.mxu0 %v3474
    %3540 = vmatprep.subr.mxu0 0.0
    %3541 = vmatpush1.msra.mxu0 %v3475
    %3542 = vmatprep.subr.mxu0 0.0
    %3543 = vmatpush1.msra.mxu0 %v3476
    %3544 = vmatprep.subr.mxu0 0.0
    %3545 = vmatpush1.msra.mxu0 %v3477
    %3546 = vmatprep.subr.mxu0 0.0
    %3547 = vmatpush1.msra.mxu0 %v3478
    %3548 = vmatprep.subr.mxu0 0.0
    %3549 = vmatpush1.msra.mxu0 %v3479
    %3550 = vmatprep.subr.mxu0 0.0
    %3551 = vmatpush1.msra.mxu0 %v3480
    %3552 = vmatprep.mubr.f32.mxu0 %v3448
    %3553 = vmatmul.mubr.f32.gmra.mrb[0].mxu0 %v3447
    %v3554 = vpop.f32.mrb[0].mxu0
    %v3555 = vadd.f32 %v3486, %v3554
    %v3556 = vpop.f32.mrb[0].mxu0
    %3557 = vdwg.mxu0
    %3558 = vst [vmem:[#allocation15] sm:$0xff] %v3447
    %3559 = vst [vmem:[#allocation15 + $0x8] sm:$0xff] %v3448
    %3560 = vst [vmem:[#allocation14] sm:$0xff] %v3555
    // Predicated region
    $region62: #{tpu_custom_call.1} parent=1 // pred_check
      _
    $region63: #{tpu_custom_call.1} parent=1 // pred_check_branch
      %3562 = sbr.rel (0) target = $region65
    $region64: #{tpu_custom_call.1} parent=1 // pred_region
      %s3564 = ssub.s32 128, 128
      %3565 = vsyncadd [#allocation5], %s3564
      %s3567 = sshll.u32 [#allocation14], 4
      %s3568 = int_to_ptr.vmem [resolvable:$true] %s3567
      %3570 = dma.vmem_to_hbm [thread:$0]  %s3568, 128, %s9, [#allocation5]
    $region65: #{tpu_custom_call.1} parent=1 // pred_fallthru
      _
    // Predicated region
    $region66: #{tpu_custom_call.1} parent=1 // pred_check
      _
    $region67: #{tpu_custom_call.1} parent=1 // pred_check_branch
      %3572 = sbr.rel (0) target = $region69
    $region68: #{tpu_custom_call.1} parent=1 // pred_region
      %s3574 = ssub.s32 256, 256
      %3575 = vsyncadd [#allocation16], %s3574
      %s3577 = sshll.u32 [#allocation15], 4
      %s3578 = int_to_ptr.vmem [resolvable:$true] %s3577
      %3580 = dma.vmem_to_hbm [thread:$0]  %s3578, 256, %s10, [#allocation16]
    $region69: #{tpu_custom_call.1} parent=1 // pred_fallthru
      _
    // Predicated region
    $region70: #{tpu_custom_call.1} parent=1 // pred_check
      _
    $region71: #{tpu_custom_call.1} parent=1 // pred_check_branch
      %3582 = sbr.rel (0) target = $region73
    $region72: #{tpu_custom_call.1} parent=1 // pred_region
      %3583 = dma.done [#allocation5], 128
    $region73: #{tpu_custom_call.1} parent=1 // pred_fallthru
      _
    // Predicated region
    $region74: #{tpu_custom_call.1} parent=1 // pred_check
      _
    $region75: #{tpu_custom_call.1} parent=1 // pred_check_branch
      %3585 = sbr.rel (0) target = $region77
    $region76: #{tpu_custom_call.1} parent=1 // pred_region
      %3586 = dma.done [#allocation16], 256
    $region77: #{tpu_custom_call.1} parent=1 // pred_fallthru
      _
    %3587 = vsyncpa [#allocation4], 1
    %3588 = vsyncpa [#allocation7], 1
    %3589 = vsyncpa [#allocation10], 1
    %3590 = vsyncpa [#allocation13], 1
    %3591 = vsyncpa [#allocation5], 1
    %3592 = vsyncpa [#allocation16], 1

</llo_original>
